<compile_context>
chip_gen: v6e
topology: v6e:2x2x1
jax: 0.10.0
libtpu: 0.0.40
codegen_flags: <defaults>
</compile_context>

<pallas_src>
import math

import jax
import jax.numpy as jnp
from jax import lax
from jax.experimental import pallas as pl
from jax.experimental.pallas import tpu as pltpu

# ----- small synthetic configuration (consistent with the module's forward) --
B = 2           # batch
S = 8           # sequence length == max_len
H = 32          # hidden / feature_dim
NHEAD = 4       # attention heads
HD = H // NHEAD
FF = 64         # feed-forward dim
NLAYERS = 2     # encoder layers
VOCAB = 20      # SMILES vocab size
OUT = 20        # output head dim
OUT_PAD = 128   # lane-dense padded output width (sliced back to OUT outside)
LN_EPS = 1e-5   # PyTorch LayerNorm default
BS = B * S
SCALE = 1.0 / math.sqrt(HD)

ATTN_W = 4 * H       # packed attention width [Wq|Wk|Wv|Wo] == 128 lanes
FFN_W = 2 * FF       # packed FFN width       [W1 | W2^T]   == 128 lanes


def _vmem_specs(n):
    return [pl.BlockSpec(memory_space=pltpu.MemorySpace.VMEM) for _ in range(n)]


def _layernorm(x, g, b):
    # single-pass: var = E[x^2] - mean^2 (biased, matches PyTorch LayerNorm)
    mu = jnp.mean(x, axis=-1, keepdims=True)
    msq = jnp.mean(x * x, axis=-1, keepdims=True)
    var = jnp.maximum(msq - mu * mu, 0.0)
    return (x - mu) * lax.rsqrt(var + LN_EPS) * g + b


def _gelu_exact(x):
    # PyTorch activation='gelu' -> exact erf formulation.
    return 0.5 * x * (1.0 + lax.erf(x * 0.7071067811865476))


# ---------------------------------------------------------------------------
# One fused kernel: embed combine -> NLAYERS encoder layers -> output head
# ---------------------------------------------------------------------------
def fused_bert_kernel(x_emb_ref, adj_ref, mask_ref,
                      w_adj_ref, w_attn_ref, w_ffn_ref, vecs_ref, w_out_ref,
                      o_ref):
    # ---- embedding combine: (tok + pos + b_adj) + adj @ W_adj -> (BS, H) ----
    adj_emb = jnp.dot(adj_ref[...], w_adj_ref[...],
                      preferred_element_type=jnp.float32)
    x = x_emb_ref[...] + adj_emb                                    # (BS, H)

    # additive key-padding mask, broadcast hoisted once: (B, 1, S)
    maskb = mask_ref[...][:, None, :]

    # ---- encoder layers: static unrolled loop over packed stacked weights ----
    for l in range(NLAYERS):
        wa = w_attn_ref[l]                       # (H, 4H)  = [Wq|Wk|Wv|Wo]
        vec = vecs_ref[l]                        # (8, H)
        bq, bk, bv, bo = vec[0], vec[1], vec[2], vec[3]
        g1, be1, g2, be2 = vec[4], vec[5], vec[6], vec[7]

        # Fused projection: one (BS,H)@(H,128) matmul; q/k/v are lane slices.
        proj = jnp.dot(x, wa, preferred_element_type=jnp.float32)   # (BS, 4H)
        q = (proj[:, 0 * H:1 * H] + bq) * SCALE
        k = proj[:, 1 * H:2 * H] + bk
        v = proj[:, 2 * H:3 * H] + bv

        q3 = q.reshape(B, S, H)
        k3 = k.reshape(B, S, H)
        v3 = v.reshape(B, S, H)

        # Per-head attention (3-D single-batch einsums), then one Wo matmul on
        # the lane-concatenated contexts.
        ctx_heads = []
        for h in range(NHEAD):
            sl = slice(h * HD, (h + 1) * HD)
            s = jnp.einsum('bqd,bkd->bqk', q3[:, :, sl], k3[:, :, sl],
                           preferred_element_type=jnp.float32)
            s = s + maskb
            s_max = jnp.max(s, axis=-1, keepdims=True)
            e = jnp.exp(s - s_max)
            p = e * pl.reciprocal(jnp.sum(e, axis=-1, keepdims=True),
                                  approx=True)
            ctx_heads.append(jnp.einsum('bqk,bkd->bqd', p, v3[:, :, sl],
                                        preferred_element_type=jnp.float32))
        ctx = jnp.concatenate(ctx_heads, axis=-1).reshape(BS, H)     # (BS, H)
        attn = jnp.dot(ctx, wa[:, 3 * H:],
                       preferred_element_type=jnp.float32) + bo

        x = _layernorm(x + attn, g1, be1)                            # post-LN 1

        wf = w_ffn_ref[l]                        # (H+1, 2FF) = [W1|W2^T ; b1|b2]
        w1 = wf[:H, :FF]
        w2t = wf[:H, FF:]
        b1 = wf[H, :FF]
        b2 = wf[H, FF:FF + H]

        hdn = _gelu_exact(
            jnp.dot(x, w1, preferred_element_type=jnp.float32) + b1)  # (BS, FF)
        ff = lax.dot_general(hdn, w2t, (((1,), (1,)), ((), ())),
                             preferred_element_type=jnp.float32) + b2
        x = _layernorm(x + ff, g2, be2)                              # post-LN 2

    # ---- lane-dense output head: (BS, H) @ (H, OUT_PAD) + b ----
    wo_pack = w_out_ref[...]                     # (H+1, OUT_PAD)
    o_ref[...] = jnp.dot(x, wo_pack[:H],
                         preferred_element_type=jnp.float32) + wo_pack[H]


# ---------------------------------------------------------------------------
# Parameters (deterministic synthetic init; shapes follow the PyTorch module,
# per-layer weights packed and stacked along a leading NLAYERS axis)
# ---------------------------------------------------------------------------
def init_params(key):
    def normal(k, shape, scale=0.05):
        return scale * jax.random.normal(k, shape, dtype=jnp.float32)

    keys = iter(jax.random.split(key, 8 + NLAYERS * 6))
    p = {}
    tok = normal(next(keys), (VOCAB, H))
    p['tok_table'] = tok.at[0].set(0.0)                 # padding_idx = 0
    p['pos_table'] = normal(next(keys), (S, H))         # nn.Embedding(max_len, H)
    p['w_adj'] = normal(next(keys), (S, H))             # nn.Linear(max_len, H), pre-T
    p['b_adj'] = jnp.zeros((H,), jnp.float32)

    w_attn, w_ffn, vecs = [], [], []
    for _ in range(NLAYERS):
        wq = normal(next(keys), (H, H))
        wk = normal(next(keys), (H, H))
        wv = normal(next(keys), (H, H))
        wo = normal(next(keys), (H, H))
        w1 = normal(next(keys), (H, FF))
        w2 = normal(next(keys), (FF, H))
        bq = bk = bv = bo = b2 = jnp.zeros((H,), jnp.float32)
        b1 = jnp.zeros((FF,), jnp.float32)
        g1 = g2 = jnp.ones((H,), jnp.float32)
        be1 = be2 = jnp.zeros((H,), jnp.float32)

        # packed attention weights: (H, 4H) = [Wq|Wk|Wv|Wo]  (128 lanes)
        w_attn.append(jnp.concatenate([wq, wk, wv, wo], axis=1))
        # packed FFN weights + biases: (H+1, 2FF) = [W1|W2^T ; b1|b2|0]
        bias_row = jnp.concatenate(
            [b1, b2, jnp.zeros((FF - H,), jnp.float32)])[None, :]
        w_ffn.append(jnp.concatenate(
            [jnp.concatenate([w1, w2.T], axis=1), bias_row], axis=0))
        # packed per-layer H-vectors: (8, H)
        vecs.append(jnp.stack([bq, bk, bv, bo, g1, be1, g2, be2], axis=0))

    p['w_attn'] = jnp.stack(w_attn, axis=0)              # (L, H, 4H)
    p['w_ffn'] = jnp.stack(w_ffn, axis=0)                # (L, H+1, 2FF)
    p['vecs'] = jnp.stack(vecs, axis=0)                  # (L, 8, H)

    # output head Linear(H, OUT), padded lane-dense to OUT_PAD, bias as last row
    w_out = normal(next(keys), (H, OUT))
    b_out = jnp.zeros((OUT,), jnp.float32)
    w_out_pack = jnp.zeros((H + 1, OUT_PAD), jnp.float32)
    w_out_pack = w_out_pack.at[:H, :OUT].set(w_out)
    w_out_pack = w_out_pack.at[H, :OUT].set(b_out)
    p['w_out_pack'] = w_out_pack
    return p


# ---------------------------------------------------------------------------
# BERT_base.forward(x, pos_num, adj_mask, adj_mat)
# ---------------------------------------------------------------------------
def bert_base_forward(params, tok_ids, pos_num, adj_mask, adj_mat):
    # Embedding gathers (glue, plain JAX); tok + pos + b_adj pre-summed into
    # one (BS, H) operand to cut input DMA count.
    tok2 = jnp.take(params['tok_table'], tok_ids, axis=0).reshape(BS, H)
    pos2 = jnp.take(params['pos_table'], pos_num, axis=0).reshape(BS, H)
    x_emb = tok2 + pos2 + params['b_adj'][None, :]
    adj2 = adj_mat.astype(jnp.float32).reshape(BS, S)

    # key_padding_mask semantics: True = masked key. Use -1e9 instead of -inf.
    mask_add = jnp.where(adj_mask, -1e9, 0.0).astype(jnp.float32)    # (B, S)

    args = (x_emb, adj2, mask_add,
            params['w_adj'], params['w_attn'], params['w_ffn'],
            params['vecs'], params['w_out_pack'])

    # Advisory cost estimate so XLA can schedule around this latency-bound call.
    flops = 2 * BS * S * H                                     # adj embedding
    flops += NLAYERS * (2 * BS * H * ATTN_W                    # fused qkv(+o) proj
                        + NHEAD * 2 * (2 * B * S * S * HD)     # scores + ctx
                        + 2 * BS * H * H                       # Wo
                        + 2 * BS * H * FF * 2)                 # FFN 1 & 2
    flops += 2 * BS * H * OUT_PAD                              # output head
    transcendentals = NLAYERS * (NHEAD * B * S * S + BS * FF + 2 * BS)
    bytes_accessed = 4 * (x_emb.size + adj2.size + mask_add.size
                          + params['w_adj'].size + params['w_attn'].size
                          + params['w_ffn'].size + params['vecs'].size
                          + params['w_out_pack'].size + BS * OUT_PAD)

    y_pad = pl.pallas_call(
        fused_bert_kernel,
        out_shape=jax.ShapeDtypeStruct((BS, OUT_PAD), jnp.float32),
        in_specs=_vmem_specs(len(args)),
        out_specs=pl.BlockSpec(memory_space=pltpu.MemorySpace.VMEM),
        cost_estimate=pl.CostEstimate(flops=int(flops),
                                      transcendentals=int(transcendentals),
                                      bytes_accessed=int(bytes_accessed)),
    )(*args)

    # Slice padded lanes back to the real head width, restore (B, S, OUT).
    # TODO(synk): dropout omitted (inference / dropout_rate=0 in CHEMBERT config).
    return y_pad[:, :OUT].reshape(B, S, OUT)


if __name__ == "__main__":
    key = jax.random.PRNGKey(0)
    k0, k1, k2 = jax.random.split(key, 3)

    tok_ids = jax.random.randint(k0, (B, S), 1, VOCAB).astype(jnp.int32)   # x
    pos_num = jnp.broadcast_to(jnp.arange(S, dtype=jnp.int32), (B, S))     # pos_num
    adj_mask = jnp.zeros((B, S), dtype=bool).at[1, S - 2:].set(True)       # pad mask
    adj_mat = (jax.random.uniform(k1, (B, S, S)) < 0.3).astype(jnp.float32)

    params = init_params(k2)

    out = bert_base_forward(params, tok_ids, pos_num, adj_mask, adj_mat)
    out = jax.block_until_ready(out)

    assert out.shape == (B, S, OUT), out.shape
    assert out.dtype == jnp.float32
    assert bool(jnp.isfinite(out).all())
    print("KERNEL_OK")
</pallas_src>

<mosaic_0001>
module attributes {stable_mosaic.version = 11 : i64} {
  func.func @fused_bert_kernel(%arg0: memref<16x32xf32, #tpu.memory_space<vmem>>, %arg1: memref<16x8xf32, #tpu.memory_space<vmem>>, %arg2: memref<2x8xf32, #tpu.memory_space<vmem>>, %arg3: memref<8x32xf32, #tpu.memory_space<vmem>>, %arg4: memref<2x32x128xf32, #tpu.memory_space<vmem>>, %arg5: memref<2x33x128xf32, #tpu.memory_space<vmem>>, %arg6: memref<2x8x32xf32, #tpu.memory_space<vmem>>, %arg7: memref<33x128xf32, #tpu.memory_space<vmem>>, %arg8: memref<16x128xf32, #tpu.memory_space<vmem>>) attributes {dimension_semantics = [], scalar_prefetch = 0 : i64, scratch_operands = 0 : i64, tpu.core_type = #tpu.core_type<tc>} {
    %c0 = arith.constant 0 : index
    %c0_0 = arith.constant 0 : index
    %0 = vector.load %arg1[%c0, %c0_0] : memref<16x8xf32, #tpu.memory_space<vmem>>, vector<16x8xf32>
    %c0_1 = arith.constant 0 : index
    %c0_2 = arith.constant 0 : index
    %1 = vector.load %arg3[%c0_1, %c0_2] : memref<8x32xf32, #tpu.memory_space<vmem>>, vector<8x32xf32>
    %cst = arith.constant dense<0.000000e+00> : vector<16x32xf32>
    %2 = tpu.matmul %0, %1, %cst {dimension_numbers = #tpu.dot_dimension_numbers<[1], [0], [0], [1], [0, 0, 1, 1], [], []>} : vector<16x8xf32>, vector<8x32xf32>, vector<16x32xf32> -> vector<16x32xf32>
    %c0_3 = arith.constant 0 : index
    %c0_4 = arith.constant 0 : index
    %3 = vector.load %arg0[%c0_3, %c0_4] : memref<16x32xf32, #tpu.memory_space<vmem>>, vector<16x32xf32>
    %4 = arith.addf %3, %2 : vector<16x32xf32>
    %c0_5 = arith.constant 0 : index
    %c0_6 = arith.constant 0 : index
    %5 = vector.load %arg2[%c0_5, %c0_6] : memref<2x8xf32, #tpu.memory_space<vmem>>, vector<2x8xf32>
    %6 = vector.shape_cast %5 : vector<2x8xf32> to vector<2x1x8xf32>
    %c0_7 = arith.constant 0 : index
    %c0_8 = arith.constant 0 : index
    %c0_9 = arith.constant 0 : index
    %7 = vector.load %arg4[%c0_7, %c0_8, %c0_9] : memref<2x32x128xf32, #tpu.memory_space<vmem>>, vector<1x32x128xf32>
    %8 = vector.shape_cast %7 : vector<1x32x128xf32> to vector<32x128xf32>
    %c0_10 = arith.constant 0 : index
    %c0_11 = arith.constant 0 : index
    %c0_12 = arith.constant 0 : index
    %9 = vector.load %arg6[%c0_10, %c0_11, %c0_12] : memref<2x8x32xf32, #tpu.memory_space<vmem>>, vector<1x8x32xf32>
    %10 = vector.shape_cast %9 : vector<1x8x32xf32> to vector<8x32xf32>
    %11 = vector.extract_strided_slice %10 {offsets = [0, 0], sizes = [1, 32], strides = [1, 1]} : vector<8x32xf32> to vector<1x32xf32>
    %12 = vector.shape_cast %11 : vector<1x32xf32> to vector<32xf32>
    %13 = vector.extract_strided_slice %10 {offsets = [1, 0], sizes = [1, 32], strides = [1, 1]} : vector<8x32xf32> to vector<1x32xf32>
    %14 = vector.shape_cast %13 : vector<1x32xf32> to vector<32xf32>
    %15 = vector.extract_strided_slice %10 {offsets = [2, 0], sizes = [1, 32], strides = [1, 1]} : vector<8x32xf32> to vector<1x32xf32>
    %16 = vector.shape_cast %15 : vector<1x32xf32> to vector<32xf32>
    %17 = vector.extract_strided_slice %10 {offsets = [3, 0], sizes = [1, 32], strides = [1, 1]} : vector<8x32xf32> to vector<1x32xf32>
    %18 = vector.shape_cast %17 : vector<1x32xf32> to vector<32xf32>
    %19 = vector.extract_strided_slice %10 {offsets = [4, 0], sizes = [1, 32], strides = [1, 1]} : vector<8x32xf32> to vector<1x32xf32>
    %20 = vector.shape_cast %19 : vector<1x32xf32> to vector<32xf32>
    %21 = vector.extract_strided_slice %10 {offsets = [5, 0], sizes = [1, 32], strides = [1, 1]} : vector<8x32xf32> to vector<1x32xf32>
    %22 = vector.shape_cast %21 : vector<1x32xf32> to vector<32xf32>
    %23 = vector.extract_strided_slice %10 {offsets = [6, 0], sizes = [1, 32], strides = [1, 1]} : vector<8x32xf32> to vector<1x32xf32>
    %24 = vector.shape_cast %23 : vector<1x32xf32> to vector<32xf32>
    %25 = vector.extract_strided_slice %10 {offsets = [7, 0], sizes = [1, 32], strides = [1, 1]} : vector<8x32xf32> to vector<1x32xf32>
    %26 = vector.shape_cast %25 : vector<1x32xf32> to vector<32xf32>
    %cst_13 = arith.constant dense<0.000000e+00> : vector<16x128xf32>
    %27 = tpu.matmul %4, %8, %cst_13 {dimension_numbers = #tpu.dot_dimension_numbers<[1], [0], [0], [1], [0, 0, 1, 1], [], []>} : vector<16x32xf32>, vector<32x128xf32>, vector<16x128xf32> -> vector<16x128xf32>
    %28 = vector.extract_strided_slice %27 {offsets = [0, 0], sizes = [16, 32], strides = [1, 1]} : vector<16x128xf32> to vector<16x32xf32>
    %29 = vector.shape_cast %12 : vector<32xf32> to vector<1x32xf32>
    %30 = vector.broadcast %29 : vector<1x32xf32> to vector<16x32xf32>
    %31 = arith.addf %28, %30 : vector<16x32xf32>
    %cst_14 = arith.constant 0.353553385 : f32
    %32 = vector.broadcast %cst_14 : f32 to vector<16x32xf32>
    %33 = arith.mulf %31, %32 : vector<16x32xf32>
    %34 = vector.extract_strided_slice %27 {offsets = [0, 32], sizes = [16, 32], strides = [1, 1]} : vector<16x128xf32> to vector<16x32xf32>
    %35 = vector.shape_cast %14 : vector<32xf32> to vector<1x32xf32>
    %36 = vector.broadcast %35 : vector<1x32xf32> to vector<16x32xf32>
    %37 = arith.addf %34, %36 : vector<16x32xf32>
    %38 = vector.extract_strided_slice %27 {offsets = [0, 64], sizes = [16, 32], strides = [1, 1]} : vector<16x128xf32> to vector<16x32xf32>
    %39 = vector.shape_cast %16 : vector<32xf32> to vector<1x32xf32>
    %40 = vector.broadcast %39 : vector<1x32xf32> to vector<16x32xf32>
    %41 = arith.addf %38, %40 : vector<16x32xf32>
    %42 = vector.shape_cast %33 : vector<16x32xf32> to vector<2x8x32xf32>
    %43 = vector.shape_cast %37 : vector<16x32xf32> to vector<2x8x32xf32>
    %44 = vector.shape_cast %41 : vector<16x32xf32> to vector<2x8x32xf32>
    %45 = vector.extract_strided_slice %42 {offsets = [0, 0, 0], sizes = [2, 8, 8], strides = [1, 1, 1]} : vector<2x8x32xf32> to vector<2x8x8xf32>
    %46 = vector.extract_strided_slice %43 {offsets = [0, 0, 0], sizes = [2, 8, 8], strides = [1, 1, 1]} : vector<2x8x32xf32> to vector<2x8x8xf32>
    "tpu.trace_start"() <{level = 10 : i32, message = "bqd,bkd->bqk"}> : () -> ()
    %cst_15 = arith.constant dense<0.000000e+00> : vector<2x8x8xf32>
    %47 = tpu.matmul %45, %46, %cst_15 {dimension_numbers = #tpu.dot_dimension_numbers<[2], [2], [1], [1], [0, 0, 0, 1, 1, 1], [0], [0]>} : vector<2x8x8xf32>, vector<2x8x8xf32>, vector<2x8x8xf32> -> vector<2x8x8xf32>
    "tpu.trace_stop"() : () -> ()
    %48 = vector.broadcast %6 : vector<2x1x8xf32> to vector<2x8x8xf32>
    %49 = arith.addf %47, %48 : vector<2x8x8xf32>
    %cst_16 = arith.constant dense<0xFF800000> : vector<2x8xf32>
    %50 = vector.multi_reduction <maximumf>, %49, %cst_16 [2] : vector<2x8x8xf32> to vector<2x8xf32>
    %51 = vector.shape_cast %50 : vector<2x8xf32> to vector<2x8x1xf32>
    %52 = vector.broadcast %51 : vector<2x8x1xf32> to vector<2x8x8xf32>
    %53 = arith.subf %49, %52 : vector<2x8x8xf32>
    %54 = math.exp %53 : vector<2x8x8xf32>
    %cst_17 = arith.constant dense<0.000000e+00> : vector<2x8xf32>
    %55 = vector.multi_reduction <add>, %54, %cst_17 [2] : vector<2x8x8xf32> to vector<2x8xf32>
    %56 = vector.shape_cast %55 : vector<2x8xf32> to vector<2x8x1xf32>
    %57 = tpu.reciprocal %56 {approx = true} : vector<2x8x1xf32> -> vector<2x8x1xf32>
    %58 = vector.broadcast %57 : vector<2x8x1xf32> to vector<2x8x8xf32>
    %59 = arith.mulf %54, %58 : vector<2x8x8xf32>
    %60 = vector.extract_strided_slice %44 {offsets = [0, 0, 0], sizes = [2, 8, 8], strides = [1, 1, 1]} : vector<2x8x32xf32> to vector<2x8x8xf32>
    "tpu.trace_start"() <{level = 10 : i32, message = "bqk,bkd->bqd"}> : () -> ()
    %cst_18 = arith.constant dense<0.000000e+00> : vector<2x8x8xf32>
    %61 = tpu.matmul %59, %60, %cst_18 {dimension_numbers = #tpu.dot_dimension_numbers<[2], [1], [1], [2], [0, 0, 0, 1, 1, 2], [0], [0]>} : vector<2x8x8xf32>, vector<2x8x8xf32>, vector<2x8x8xf32> -> vector<2x8x8xf32>
    "tpu.trace_stop"() : () -> ()
    %62 = vector.extract_strided_slice %42 {offsets = [0, 0, 8], sizes = [2, 8, 8], strides = [1, 1, 1]} : vector<2x8x32xf32> to vector<2x8x8xf32>
    %63 = vector.extract_strided_slice %43 {offsets = [0, 0, 8], sizes = [2, 8, 8], strides = [1, 1, 1]} : vector<2x8x32xf32> to vector<2x8x8xf32>
    "tpu.trace_start"() <{level = 10 : i32, message = "bqd,bkd->bqk"}> : () -> ()
    %cst_19 = arith.constant dense<0.000000e+00> : vector<2x8x8xf32>
    %64 = tpu.matmul %62, %63, %cst_19 {dimension_numbers = #tpu.dot_dimension_numbers<[2], [2], [1], [1], [0, 0, 0, 1, 1, 1], [0], [0]>} : vector<2x8x8xf32>, vector<2x8x8xf32>, vector<2x8x8xf32> -> vector<2x8x8xf32>
    "tpu.trace_stop"() : () -> ()
    %65 = vector.broadcast %6 : vector<2x1x8xf32> to vector<2x8x8xf32>
    %66 = arith.addf %64, %65 : vector<2x8x8xf32>
    %cst_20 = arith.constant dense<0xFF800000> : vector<2x8xf32>
    %67 = vector.multi_reduction <maximumf>, %66, %cst_20 [2] : vector<2x8x8xf32> to vector<2x8xf32>
    %68 = vector.shape_cast %67 : vector<2x8xf32> to vector<2x8x1xf32>
    %69 = vector.broadcast %68 : vector<2x8x1xf32> to vector<2x8x8xf32>
    %70 = arith.subf %66, %69 : vector<2x8x8xf32>
    %71 = math.exp %70 : vector<2x8x8xf32>
    %cst_21 = arith.constant dense<0.000000e+00> : vector<2x8xf32>
    %72 = vector.multi_reduction <add>, %71, %cst_21 [2] : vector<2x8x8xf32> to vector<2x8xf32>
    %73 = vector.shape_cast %72 : vector<2x8xf32> to vector<2x8x1xf32>
    %74 = tpu.reciprocal %73 {approx = true} : vector<2x8x1xf32> -> vector<2x8x1xf32>
    %75 = vector.broadcast %74 : vector<2x8x1xf32> to vector<2x8x8xf32>
    %76 = arith.mulf %71, %75 : vector<2x8x8xf32>
    %77 = vector.extract_strided_slice %44 {offsets = [0, 0, 8], sizes = [2, 8, 8], strides = [1, 1, 1]} : vector<2x8x32xf32> to vector<2x8x8xf32>
    "tpu.trace_start"() <{level = 10 : i32, message = "bqk,bkd->bqd"}> : () -> ()
    %cst_22 = arith.constant dense<0.000000e+00> : vector<2x8x8xf32>
    %78 = tpu.matmul %76, %77, %cst_22 {dimension_numbers = #tpu.dot_dimension_numbers<[2], [1], [1], [2], [0, 0, 0, 1, 1, 2], [0], [0]>} : vector<2x8x8xf32>, vector<2x8x8xf32>, vector<2x8x8xf32> -> vector<2x8x8xf32>
    "tpu.trace_stop"() : () -> ()
    %79 = vector.extract_strided_slice %42 {offsets = [0, 0, 16], sizes = [2, 8, 8], strides = [1, 1, 1]} : vector<2x8x32xf32> to vector<2x8x8xf32>
    %80 = vector.extract_strided_slice %43 {offsets = [0, 0, 16], sizes = [2, 8, 8], strides = [1, 1, 1]} : vector<2x8x32xf32> to vector<2x8x8xf32>
    "tpu.trace_start"() <{level = 10 : i32, message = "bqd,bkd->bqk"}> : () -> ()
    %cst_23 = arith.constant dense<0.000000e+00> : vector<2x8x8xf32>
    %81 = tpu.matmul %79, %80, %cst_23 {dimension_numbers = #tpu.dot_dimension_numbers<[2], [2], [1], [1], [0, 0, 0, 1, 1, 1], [0], [0]>} : vector<2x8x8xf32>, vector<2x8x8xf32>, vector<2x8x8xf32> -> vector<2x8x8xf32>
    "tpu.trace_stop"() : () -> ()
    %82 = vector.broadcast %6 : vector<2x1x8xf32> to vector<2x8x8xf32>
    %83 = arith.addf %81, %82 : vector<2x8x8xf32>
    %cst_24 = arith.constant dense<0xFF800000> : vector<2x8xf32>
    %84 = vector.multi_reduction <maximumf>, %83, %cst_24 [2] : vector<2x8x8xf32> to vector<2x8xf32>
    %85 = vector.shape_cast %84 : vector<2x8xf32> to vector<2x8x1xf32>
    %86 = vector.broadcast %85 : vector<2x8x1xf32> to vector<2x8x8xf32>
    %87 = arith.subf %83, %86 : vector<2x8x8xf32>
    %88 = math.exp %87 : vector<2x8x8xf32>
    %cst_25 = arith.constant dense<0.000000e+00> : vector<2x8xf32>
    %89 = vector.multi_reduction <add>, %88, %cst_25 [2] : vector<2x8x8xf32> to vector<2x8xf32>
    %90 = vector.shape_cast %89 : vector<2x8xf32> to vector<2x8x1xf32>
    %91 = tpu.reciprocal %90 {approx = true} : vector<2x8x1xf32> -> vector<2x8x1xf32>
    %92 = vector.broadcast %91 : vector<2x8x1xf32> to vector<2x8x8xf32>
    %93 = arith.mulf %88, %92 : vector<2x8x8xf32>
    %94 = vector.extract_strided_slice %44 {offsets = [0, 0, 16], sizes = [2, 8, 8], strides = [1, 1, 1]} : vector<2x8x32xf32> to vector<2x8x8xf32>
    "tpu.trace_start"() <{level = 10 : i32, message = "bqk,bkd->bqd"}> : () -> ()
    %cst_26 = arith.constant dense<0.000000e+00> : vector<2x8x8xf32>
    %95 = tpu.matmul %93, %94, %cst_26 {dimension_numbers = #tpu.dot_dimension_numbers<[2], [1], [1], [2], [0, 0, 0, 1, 1, 2], [0], [0]>} : vector<2x8x8xf32>, vector<2x8x8xf32>, vector<2x8x8xf32> -> vector<2x8x8xf32>
    "tpu.trace_stop"() : () -> ()
    %96 = vector.extract_strided_slice %42 {offsets = [0, 0, 24], sizes = [2, 8, 8], strides = [1, 1, 1]} : vector<2x8x32xf32> to vector<2x8x8xf32>
    %97 = vector.extract_strided_slice %43 {offsets = [0, 0, 24], sizes = [2, 8, 8], strides = [1, 1, 1]} : vector<2x8x32xf32> to vector<2x8x8xf32>
    "tpu.trace_start"() <{level = 10 : i32, message = "bqd,bkd->bqk"}> : () -> ()
    %cst_27 = arith.constant dense<0.000000e+00> : vector<2x8x8xf32>
    %98 = tpu.matmul %96, %97, %cst_27 {dimension_numbers = #tpu.dot_dimension_numbers<[2], [2], [1], [1], [0, 0, 0, 1, 1, 1], [0], [0]>} : vector<2x8x8xf32>, vector<2x8x8xf32>, vector<2x8x8xf32> -> vector<2x8x8xf32>
    "tpu.trace_stop"() : () -> ()
    %99 = vector.broadcast %6 : vector<2x1x8xf32> to vector<2x8x8xf32>
    %100 = arith.addf %98, %99 : vector<2x8x8xf32>
    %cst_28 = arith.constant dense<0xFF800000> : vector<2x8xf32>
    %101 = vector.multi_reduction <maximumf>, %100, %cst_28 [2] : vector<2x8x8xf32> to vector<2x8xf32>
    %102 = vector.shape_cast %101 : vector<2x8xf32> to vector<2x8x1xf32>
    %103 = vector.broadcast %102 : vector<2x8x1xf32> to vector<2x8x8xf32>
    %104 = arith.subf %100, %103 : vector<2x8x8xf32>
    %105 = math.exp %104 : vector<2x8x8xf32>
    %cst_29 = arith.constant dense<0.000000e+00> : vector<2x8xf32>
    %106 = vector.multi_reduction <add>, %105, %cst_29 [2] : vector<2x8x8xf32> to vector<2x8xf32>
    %107 = vector.shape_cast %106 : vector<2x8xf32> to vector<2x8x1xf32>
    %108 = tpu.reciprocal %107 {approx = true} : vector<2x8x1xf32> -> vector<2x8x1xf32>
    %109 = vector.broadcast %108 : vector<2x8x1xf32> to vector<2x8x8xf32>
    %110 = arith.mulf %105, %109 : vector<2x8x8xf32>
    %111 = vector.extract_strided_slice %44 {offsets = [0, 0, 24], sizes = [2, 8, 8], strides = [1, 1, 1]} : vector<2x8x32xf32> to vector<2x8x8xf32>
    "tpu.trace_start"() <{level = 10 : i32, message = "bqk,bkd->bqd"}> : () -> ()
    %cst_30 = arith.constant dense<0.000000e+00> : vector<2x8x8xf32>
    %112 = tpu.matmul %110, %111, %cst_30 {dimension_numbers = #tpu.dot_dimension_numbers<[2], [1], [1], [2], [0, 0, 0, 1, 1, 2], [0], [0]>} : vector<2x8x8xf32>, vector<2x8x8xf32>, vector<2x8x8xf32> -> vector<2x8x8xf32>
    "tpu.trace_stop"() : () -> ()
    %113 = tpu.concatenate %61, %78, %95, %112 in 2 : vector<2x8x8xf32>, vector<2x8x8xf32>, vector<2x8x8xf32>, vector<2x8x8xf32> -> vector<2x8x32xf32>
    %114 = vector.shape_cast %113 : vector<2x8x32xf32> to vector<16x32xf32>
    %115 = vector.extract_strided_slice %8 {offsets = [0, 96], sizes = [32, 32], strides = [1, 1]} : vector<32x128xf32> to vector<32x32xf32>
    %cst_31 = arith.constant dense<0.000000e+00> : vector<16x32xf32>
    %116 = tpu.matmul %114, %115, %cst_31 {dimension_numbers = #tpu.dot_dimension_numbers<[1], [0], [0], [1], [0, 0, 1, 1], [], []>} : vector<16x32xf32>, vector<32x32xf32>, vector<16x32xf32> -> vector<16x32xf32>
    %117 = vector.shape_cast %18 : vector<32xf32> to vector<1x32xf32>
    %118 = vector.broadcast %117 : vector<1x32xf32> to vector<16x32xf32>
    %119 = arith.addf %116, %118 : vector<16x32xf32>
    %120 = arith.addf %4, %119 : vector<16x32xf32>
    %cst_32 = arith.constant dense<0.000000e+00> : vector<16xf32>
    %121 = vector.multi_reduction <add>, %120, %cst_32 [1] : vector<16x32xf32> to vector<16xf32>
    %122 = vector.shape_cast %121 : vector<16xf32> to vector<16x1xf32>
    %cst_33 = arith.constant 3.200000e+01 : f32
    %123 = vector.broadcast %cst_33 : f32 to vector<16x1xf32>
    %124 = arith.divf %122, %123 : vector<16x1xf32>
    %125 = arith.mulf %120, %120 : vector<16x32xf32>
    %cst_34 = arith.constant dense<0.000000e+00> : vector<16xf32>
    %126 = vector.multi_reduction <add>, %125, %cst_34 [1] : vector<16x32xf32> to vector<16xf32>
    %127 = vector.shape_cast %126 : vector<16xf32> to vector<16x1xf32>
    %cst_35 = arith.constant 3.200000e+01 : f32
    %128 = vector.broadcast %cst_35 : f32 to vector<16x1xf32>
    %129 = arith.divf %127, %128 : vector<16x1xf32>
    %130 = arith.mulf %124, %124 : vector<16x1xf32>
    %131 = arith.subf %129, %130 : vector<16x1xf32>
    %cst_36 = arith.constant 0.000000e+00 : f32
    %132 = vector.broadcast %cst_36 : f32 to vector<16x1xf32>
    %133 = arith.maximumf %131, %132 : vector<16x1xf32>
    %134 = vector.broadcast %124 : vector<16x1xf32> to vector<16x32xf32>
    %135 = arith.subf %120, %134 : vector<16x32xf32>
    %cst_37 = arith.constant 9.99999974E-6 : f32
    %136 = vector.broadcast %cst_37 : f32 to vector<16x1xf32>
    %137 = arith.addf %133, %136 : vector<16x1xf32>
    %138 = math.rsqrt %137 : vector<16x1xf32>
    %139 = vector.broadcast %138 : vector<16x1xf32> to vector<16x32xf32>
    %140 = arith.mulf %135, %139 : vector<16x32xf32>
    %141 = vector.shape_cast %20 : vector<32xf32> to vector<1x32xf32>
    %142 = vector.broadcast %141 : vector<1x32xf32> to vector<16x32xf32>
    %143 = arith.mulf %140, %142 : vector<16x32xf32>
    %144 = vector.shape_cast %22 : vector<32xf32> to vector<1x32xf32>
    %145 = vector.broadcast %144 : vector<1x32xf32> to vector<16x32xf32>
    %146 = arith.addf %143, %145 : vector<16x32xf32>
    %c0_38 = arith.constant 0 : index
    %c0_39 = arith.constant 0 : index
    %c0_40 = arith.constant 0 : index
    %147 = vector.load %arg5[%c0_38, %c0_39, %c0_40] : memref<2x33x128xf32, #tpu.memory_space<vmem>>, vector<1x33x128xf32>
    %148 = vector.shape_cast %147 : vector<1x33x128xf32> to vector<33x128xf32>
    %149 = vector.extract_strided_slice %148 {offsets = [0, 0], sizes = [32, 64], strides = [1, 1]} : vector<33x128xf32> to vector<32x64xf32>
    %150 = vector.extract_strided_slice %148 {offsets = [0, 64], sizes = [32, 64], strides = [1, 1]} : vector<33x128xf32> to vector<32x64xf32>
    %151 = vector.extract_strided_slice %148 {offsets = [32, 0], sizes = [1, 64], strides = [1, 1]} : vector<33x128xf32> to vector<1x64xf32>
    %152 = vector.shape_cast %151 : vector<1x64xf32> to vector<64xf32>
    %153 = vector.extract_strided_slice %148 {offsets = [32, 64], sizes = [1, 32], strides = [1, 1]} : vector<33x128xf32> to vector<1x32xf32>
    %154 = vector.shape_cast %153 : vector<1x32xf32> to vector<32xf32>
    %cst_41 = arith.constant dense<0.000000e+00> : vector<16x64xf32>
    %155 = tpu.matmul %146, %149, %cst_41 {dimension_numbers = #tpu.dot_dimension_numbers<[1], [0], [0], [1], [0, 0, 1, 1], [], []>} : vector<16x32xf32>, vector<32x64xf32>, vector<16x64xf32> -> vector<16x64xf32>
    %156 = vector.shape_cast %152 : vector<64xf32> to vector<1x64xf32>
    %157 = vector.broadcast %156 : vector<1x64xf32> to vector<16x64xf32>
    %158 = arith.addf %155, %157 : vector<16x64xf32>
    %cst_42 = arith.constant 5.000000e-01 : f32
    %159 = vector.broadcast %cst_42 : f32 to vector<16x64xf32>
    %160 = arith.mulf %159, %158 : vector<16x64xf32>
    %cst_43 = arith.constant 0.707106769 : f32
    %161 = vector.broadcast %cst_43 : f32 to vector<16x64xf32>
    %162 = arith.mulf %158, %161 : vector<16x64xf32>
    %163 = math.erf %162 : vector<16x64xf32>
    %cst_44 = arith.constant 1.000000e+00 : f32
    %164 = vector.broadcast %cst_44 : f32 to vector<16x64xf32>
    %165 = arith.addf %164, %163 : vector<16x64xf32>
    %166 = arith.mulf %160, %165 : vector<16x64xf32>
    %cst_45 = arith.constant dense<0.000000e+00> : vector<16x32xf32>
    %167 = tpu.matmul %166, %150, %cst_45 {dimension_numbers = #tpu.dot_dimension_numbers<[1], [1], [0], [0], [0, 0, 1, 0], [], []>} : vector<16x64xf32>, vector<32x64xf32>, vector<16x32xf32> -> vector<16x32xf32>
    %168 = vector.shape_cast %154 : vector<32xf32> to vector<1x32xf32>
    %169 = vector.broadcast %168 : vector<1x32xf32> to vector<16x32xf32>
    %170 = arith.addf %167, %169 : vector<16x32xf32>
    %171 = arith.addf %146, %170 : vector<16x32xf32>
    %cst_46 = arith.constant dense<0.000000e+00> : vector<16xf32>
    %172 = vector.multi_reduction <add>, %171, %cst_46 [1] : vector<16x32xf32> to vector<16xf32>
    %173 = vector.shape_cast %172 : vector<16xf32> to vector<16x1xf32>
    %cst_47 = arith.constant 3.200000e+01 : f32
    %174 = vector.broadcast %cst_47 : f32 to vector<16x1xf32>
    %175 = arith.divf %173, %174 : vector<16x1xf32>
    %176 = arith.mulf %171, %171 : vector<16x32xf32>
    %cst_48 = arith.constant dense<0.000000e+00> : vector<16xf32>
    %177 = vector.multi_reduction <add>, %176, %cst_48 [1] : vector<16x32xf32> to vector<16xf32>
    %178 = vector.shape_cast %177 : vector<16xf32> to vector<16x1xf32>
    %cst_49 = arith.constant 3.200000e+01 : f32
    %179 = vector.broadcast %cst_49 : f32 to vector<16x1xf32>
    %180 = arith.divf %178, %179 : vector<16x1xf32>
    %181 = arith.mulf %175, %175 : vector<16x1xf32>
    %182 = arith.subf %180, %181 : vector<16x1xf32>
    %cst_50 = arith.constant 0.000000e+00 : f32
    %183 = vector.broadcast %cst_50 : f32 to vector<16x1xf32>
    %184 = arith.maximumf %182, %183 : vector<16x1xf32>
    %185 = vector.broadcast %175 : vector<16x1xf32> to vector<16x32xf32>
    %186 = arith.subf %171, %185 : vector<16x32xf32>
    %cst_51 = arith.constant 9.99999974E-6 : f32
    %187 = vector.broadcast %cst_51 : f32 to vector<16x1xf32>
    %188 = arith.addf %184, %187 : vector<16x1xf32>
    %189 = math.rsqrt %188 : vector<16x1xf32>
    %190 = vector.broadcast %189 : vector<16x1xf32> to vector<16x32xf32>
    %191 = arith.mulf %186, %190 : vector<16x32xf32>
    %192 = vector.shape_cast %24 : vector<32xf32> to vector<1x32xf32>
    %193 = vector.broadcast %192 : vector<1x32xf32> to vector<16x32xf32>
    %194 = arith.mulf %191, %193 : vector<16x32xf32>
    %195 = vector.shape_cast %26 : vector<32xf32> to vector<1x32xf32>
    %196 = vector.broadcast %195 : vector<1x32xf32> to vector<16x32xf32>
    %197 = arith.addf %194, %196 : vector<16x32xf32>
    %c1 = arith.constant 1 : index
    %c0_52 = arith.constant 0 : index
    %c0_53 = arith.constant 0 : index
    %198 = vector.load %arg4[%c1, %c0_52, %c0_53] : memref<2x32x128xf32, #tpu.memory_space<vmem>>, vector<1x32x128xf32>
    %199 = vector.shape_cast %198 : vector<1x32x128xf32> to vector<32x128xf32>
    %c1_54 = arith.constant 1 : index
    %c0_55 = arith.constant 0 : index
    %c0_56 = arith.constant 0 : index
    %200 = vector.load %arg6[%c1_54, %c0_55, %c0_56] : memref<2x8x32xf32, #tpu.memory_space<vmem>>, vector<1x8x32xf32>
    %201 = vector.shape_cast %200 : vector<1x8x32xf32> to vector<8x32xf32>
    %202 = vector.extract_strided_slice %201 {offsets = [0, 0], sizes = [1, 32], strides = [1, 1]} : vector<8x32xf32> to vector<1x32xf32>
    %203 = vector.shape_cast %202 : vector<1x32xf32> to vector<32xf32>
    %204 = vector.extract_strided_slice %201 {offsets = [1, 0], sizes = [1, 32], strides = [1, 1]} : vector<8x32xf32> to vector<1x32xf32>
    %205 = vector.shape_cast %204 : vector<1x32xf32> to vector<32xf32>
    %206 = vector.extract_strided_slice %201 {offsets = [2, 0], sizes = [1, 32], strides = [1, 1]} : vector<8x32xf32> to vector<1x32xf32>
    %207 = vector.shape_cast %206 : vector<1x32xf32> to vector<32xf32>
    %208 = vector.extract_strided_slice %201 {offsets = [3, 0], sizes = [1, 32], strides = [1, 1]} : vector<8x32xf32> to vector<1x32xf32>
    %209 = vector.shape_cast %208 : vector<1x32xf32> to vector<32xf32>
    %210 = vector.extract_strided_slice %201 {offsets = [4, 0], sizes = [1, 32], strides = [1, 1]} : vector<8x32xf32> to vector<1x32xf32>
    %211 = vector.shape_cast %210 : vector<1x32xf32> to vector<32xf32>
    %212 = vector.extract_strided_slice %201 {offsets = [5, 0], sizes = [1, 32], strides = [1, 1]} : vector<8x32xf32> to vector<1x32xf32>
    %213 = vector.shape_cast %212 : vector<1x32xf32> to vector<32xf32>
    %214 = vector.extract_strided_slice %201 {offsets = [6, 0], sizes = [1, 32], strides = [1, 1]} : vector<8x32xf32> to vector<1x32xf32>
    %215 = vector.shape_cast %214 : vector<1x32xf32> to vector<32xf32>
    %216 = vector.extract_strided_slice %201 {offsets = [7, 0], sizes = [1, 32], strides = [1, 1]} : vector<8x32xf32> to vector<1x32xf32>
    %217 = vector.shape_cast %216 : vector<1x32xf32> to vector<32xf32>
    %cst_57 = arith.constant dense<0.000000e+00> : vector<16x128xf32>
    %218 = tpu.matmul %197, %199, %cst_57 {dimension_numbers = #tpu.dot_dimension_numbers<[1], [0], [0], [1], [0, 0, 1, 1], [], []>} : vector<16x32xf32>, vector<32x128xf32>, vector<16x128xf32> -> vector<16x128xf32>
    %219 = vector.extract_strided_slice %218 {offsets = [0, 0], sizes = [16, 32], strides = [1, 1]} : vector<16x128xf32> to vector<16x32xf32>
    %220 = vector.shape_cast %203 : vector<32xf32> to vector<1x32xf32>
    %221 = vector.broadcast %220 : vector<1x32xf32> to vector<16x32xf32>
    %222 = arith.addf %219, %221 : vector<16x32xf32>
    %cst_58 = arith.constant 0.353553385 : f32
    %223 = vector.broadcast %cst_58 : f32 to vector<16x32xf32>
    %224 = arith.mulf %222, %223 : vector<16x32xf32>
    %225 = vector.extract_strided_slice %218 {offsets = [0, 32], sizes = [16, 32], strides = [1, 1]} : vector<16x128xf32> to vector<16x32xf32>
    %226 = vector.shape_cast %205 : vector<32xf32> to vector<1x32xf32>
    %227 = vector.broadcast %226 : vector<1x32xf32> to vector<16x32xf32>
    %228 = arith.addf %225, %227 : vector<16x32xf32>
    %229 = vector.extract_strided_slice %218 {offsets = [0, 64], sizes = [16, 32], strides = [1, 1]} : vector<16x128xf32> to vector<16x32xf32>
    %230 = vector.shape_cast %207 : vector<32xf32> to vector<1x32xf32>
    %231 = vector.broadcast %230 : vector<1x32xf32> to vector<16x32xf32>
    %232 = arith.addf %229, %231 : vector<16x32xf32>
    %233 = vector.shape_cast %224 : vector<16x32xf32> to vector<2x8x32xf32>
    %234 = vector.shape_cast %228 : vector<16x32xf32> to vector<2x8x32xf32>
    %235 = vector.shape_cast %232 : vector<16x32xf32> to vector<2x8x32xf32>
    %236 = vector.extract_strided_slice %233 {offsets = [0, 0, 0], sizes = [2, 8, 8], strides = [1, 1, 1]} : vector<2x8x32xf32> to vector<2x8x8xf32>
    %237 = vector.extract_strided_slice %234 {offsets = [0, 0, 0], sizes = [2, 8, 8], strides = [1, 1, 1]} : vector<2x8x32xf32> to vector<2x8x8xf32>
    "tpu.trace_start"() <{level = 10 : i32, message = "bqd,bkd->bqk"}> : () -> ()
    %cst_59 = arith.constant dense<0.000000e+00> : vector<2x8x8xf32>
    %238 = tpu.matmul %236, %237, %cst_59 {dimension_numbers = #tpu.dot_dimension_numbers<[2], [2], [1], [1], [0, 0, 0, 1, 1, 1], [0], [0]>} : vector<2x8x8xf32>, vector<2x8x8xf32>, vector<2x8x8xf32> -> vector<2x8x8xf32>
    "tpu.trace_stop"() : () -> ()
    %239 = vector.broadcast %6 : vector<2x1x8xf32> to vector<2x8x8xf32>
    %240 = arith.addf %238, %239 : vector<2x8x8xf32>
    %cst_60 = arith.constant dense<0xFF800000> : vector<2x8xf32>
    %241 = vector.multi_reduction <maximumf>, %240, %cst_60 [2] : vector<2x8x8xf32> to vector<2x8xf32>
    %242 = vector.shape_cast %241 : vector<2x8xf32> to vector<2x8x1xf32>
    %243 = vector.broadcast %242 : vector<2x8x1xf32> to vector<2x8x8xf32>
    %244 = arith.subf %240, %243 : vector<2x8x8xf32>
    %245 = math.exp %244 : vector<2x8x8xf32>
    %cst_61 = arith.constant dense<0.000000e+00> : vector<2x8xf32>
    %246 = vector.multi_reduction <add>, %245, %cst_61 [2] : vector<2x8x8xf32> to vector<2x8xf32>
    %247 = vector.shape_cast %246 : vector<2x8xf32> to vector<2x8x1xf32>
    %248 = tpu.reciprocal %247 {approx = true} : vector<2x8x1xf32> -> vector<2x8x1xf32>
    %249 = vector.broadcast %248 : vector<2x8x1xf32> to vector<2x8x8xf32>
    %250 = arith.mulf %245, %249 : vector<2x8x8xf32>
    %251 = vector.extract_strided_slice %235 {offsets = [0, 0, 0], sizes = [2, 8, 8], strides = [1, 1, 1]} : vector<2x8x32xf32> to vector<2x8x8xf32>
    "tpu.trace_start"() <{level = 10 : i32, message = "bqk,bkd->bqd"}> : () -> ()
    %cst_62 = arith.constant dense<0.000000e+00> : vector<2x8x8xf32>
    %252 = tpu.matmul %250, %251, %cst_62 {dimension_numbers = #tpu.dot_dimension_numbers<[2], [1], [1], [2], [0, 0, 0, 1, 1, 2], [0], [0]>} : vector<2x8x8xf32>, vector<2x8x8xf32>, vector<2x8x8xf32> -> vector<2x8x8xf32>
    "tpu.trace_stop"() : () -> ()
    %253 = vector.extract_strided_slice %233 {offsets = [0, 0, 8], sizes = [2, 8, 8], strides = [1, 1, 1]} : vector<2x8x32xf32> to vector<2x8x8xf32>
    %254 = vector.extract_strided_slice %234 {offsets = [0, 0, 8], sizes = [2, 8, 8], strides = [1, 1, 1]} : vector<2x8x32xf32> to vector<2x8x8xf32>
    "tpu.trace_start"() <{level = 10 : i32, message = "bqd,bkd->bqk"}> : () -> ()
    %cst_63 = arith.constant dense<0.000000e+00> : vector<2x8x8xf32>
    %255 = tpu.matmul %253, %254, %cst_63 {dimension_numbers = #tpu.dot_dimension_numbers<[2], [2], [1], [1], [0, 0, 0, 1, 1, 1], [0], [0]>} : vector<2x8x8xf32>, vector<2x8x8xf32>, vector<2x8x8xf32> -> vector<2x8x8xf32>
    "tpu.trace_stop"() : () -> ()
    %256 = vector.broadcast %6 : vector<2x1x8xf32> to vector<2x8x8xf32>
    %257 = arith.addf %255, %256 : vector<2x8x8xf32>
    %cst_64 = arith.constant dense<0xFF800000> : vector<2x8xf32>
    %258 = vector.multi_reduction <maximumf>, %257, %cst_64 [2] : vector<2x8x8xf32> to vector<2x8xf32>
    %259 = vector.shape_cast %258 : vector<2x8xf32> to vector<2x8x1xf32>
    %260 = vector.broadcast %259 : vector<2x8x1xf32> to vector<2x8x8xf32>
    %261 = arith.subf %257, %260 : vector<2x8x8xf32>
    %262 = math.exp %261 : vector<2x8x8xf32>
    %cst_65 = arith.constant dense<0.000000e+00> : vector<2x8xf32>
    %263 = vector.multi_reduction <add>, %262, %cst_65 [2] : vector<2x8x8xf32> to vector<2x8xf32>
    %264 = vector.shape_cast %263 : vector<2x8xf32> to vector<2x8x1xf32>
    %265 = tpu.reciprocal %264 {approx = true} : vector<2x8x1xf32> -> vector<2x8x1xf32>
    %266 = vector.broadcast %265 : vector<2x8x1xf32> to vector<2x8x8xf32>
    %267 = arith.mulf %262, %266 : vector<2x8x8xf32>
    %268 = vector.extract_strided_slice %235 {offsets = [0, 0, 8], sizes = [2, 8, 8], strides = [1, 1, 1]} : vector<2x8x32xf32> to vector<2x8x8xf32>
    "tpu.trace_start"() <{level = 10 : i32, message = "bqk,bkd->bqd"}> : () -> ()
    %cst_66 = arith.constant dense<0.000000e+00> : vector<2x8x8xf32>
    %269 = tpu.matmul %267, %268, %cst_66 {dimension_numbers = #tpu.dot_dimension_numbers<[2], [1], [1], [2], [0, 0, 0, 1, 1, 2], [0], [0]>} : vector<2x8x8xf32>, vector<2x8x8xf32>, vector<2x8x8xf32> -> vector<2x8x8xf32>
    "tpu.trace_stop"() : () -> ()
    %270 = vector.extract_strided_slice %233 {offsets = [0, 0, 16], sizes = [2, 8, 8], strides = [1, 1, 1]} : vector<2x8x32xf32> to vector<2x8x8xf32>
    %271 = vector.extract_strided_slice %234 {offsets = [0, 0, 16], sizes = [2, 8, 8], strides = [1, 1, 1]} : vector<2x8x32xf32> to vector<2x8x8xf32>
    "tpu.trace_start"() <{level = 10 : i32, message = "bqd,bkd->bqk"}> : () -> ()
    %cst_67 = arith.constant dense<0.000000e+00> : vector<2x8x8xf32>
    %272 = tpu.matmul %270, %271, %cst_67 {dimension_numbers = #tpu.dot_dimension_numbers<[2], [2], [1], [1], [0, 0, 0, 1, 1, 1], [0], [0]>} : vector<2x8x8xf32>, vector<2x8x8xf32>, vector<2x8x8xf32> -> vector<2x8x8xf32>
    "tpu.trace_stop"() : () -> ()
    %273 = vector.broadcast %6 : vector<2x1x8xf32> to vector<2x8x8xf32>
    %274 = arith.addf %272, %273 : vector<2x8x8xf32>
    %cst_68 = arith.constant dense<0xFF800000> : vector<2x8xf32>
    %275 = vector.multi_reduction <maximumf>, %274, %cst_68 [2] : vector<2x8x8xf32> to vector<2x8xf32>
    %276 = vector.shape_cast %275 : vector<2x8xf32> to vector<2x8x1xf32>
    %277 = vector.broadcast %276 : vector<2x8x1xf32> to vector<2x8x8xf32>
    %278 = arith.subf %274, %277 : vector<2x8x8xf32>
    %279 = math.exp %278 : vector<2x8x8xf32>
    %cst_69 = arith.constant dense<0.000000e+00> : vector<2x8xf32>
    %280 = vector.multi_reduction <add>, %279, %cst_69 [2] : vector<2x8x8xf32> to vector<2x8xf32>
    %281 = vector.shape_cast %280 : vector<2x8xf32> to vector<2x8x1xf32>
    %282 = tpu.reciprocal %281 {approx = true} : vector<2x8x1xf32> -> vector<2x8x1xf32>
    %283 = vector.broadcast %282 : vector<2x8x1xf32> to vector<2x8x8xf32>
    %284 = arith.mulf %279, %283 : vector<2x8x8xf32>
    %285 = vector.extract_strided_slice %235 {offsets = [0, 0, 16], sizes = [2, 8, 8], strides = [1, 1, 1]} : vector<2x8x32xf32> to vector<2x8x8xf32>
    "tpu.trace_start"() <{level = 10 : i32, message = "bqk,bkd->bqd"}> : () -> ()
    %cst_70 = arith.constant dense<0.000000e+00> : vector<2x8x8xf32>
    %286 = tpu.matmul %284, %285, %cst_70 {dimension_numbers = #tpu.dot_dimension_numbers<[2], [1], [1], [2], [0, 0, 0, 1, 1, 2], [0], [0]>} : vector<2x8x8xf32>, vector<2x8x8xf32>, vector<2x8x8xf32> -> vector<2x8x8xf32>
    "tpu.trace_stop"() : () -> ()
    %287 = vector.extract_strided_slice %233 {offsets = [0, 0, 24], sizes = [2, 8, 8], strides = [1, 1, 1]} : vector<2x8x32xf32> to vector<2x8x8xf32>
    %288 = vector.extract_strided_slice %234 {offsets = [0, 0, 24], sizes = [2, 8, 8], strides = [1, 1, 1]} : vector<2x8x32xf32> to vector<2x8x8xf32>
    "tpu.trace_start"() <{level = 10 : i32, message = "bqd,bkd->bqk"}> : () -> ()
    %cst_71 = arith.constant dense<0.000000e+00> : vector<2x8x8xf32>
    %289 = tpu.matmul %287, %288, %cst_71 {dimension_numbers = #tpu.dot_dimension_numbers<[2], [2], [1], [1], [0, 0, 0, 1, 1, 1], [0], [0]>} : vector<2x8x8xf32>, vector<2x8x8xf32>, vector<2x8x8xf32> -> vector<2x8x8xf32>
    "tpu.trace_stop"() : () -> ()
    %290 = vector.broadcast %6 : vector<2x1x8xf32> to vector<2x8x8xf32>
    %291 = arith.addf %289, %290 : vector<2x8x8xf32>
    %cst_72 = arith.constant dense<0xFF800000> : vector<2x8xf32>
    %292 = vector.multi_reduction <maximumf>, %291, %cst_72 [2] : vector<2x8x8xf32> to vector<2x8xf32>
    %293 = vector.shape_cast %292 : vector<2x8xf32> to vector<2x8x1xf32>
    %294 = vector.broadcast %293 : vector<2x8x1xf32> to vector<2x8x8xf32>
    %295 = arith.subf %291, %294 : vector<2x8x8xf32>
    %296 = math.exp %295 : vector<2x8x8xf32>
    %cst_73 = arith.constant dense<0.000000e+00> : vector<2x8xf32>
    %297 = vector.multi_reduction <add>, %296, %cst_73 [2] : vector<2x8x8xf32> to vector<2x8xf32>
    %298 = vector.shape_cast %297 : vector<2x8xf32> to vector<2x8x1xf32>
    %299 = tpu.reciprocal %298 {approx = true} : vector<2x8x1xf32> -> vector<2x8x1xf32>
    %300 = vector.broadcast %299 : vector<2x8x1xf32> to vector<2x8x8xf32>
    %301 = arith.mulf %296, %300 : vector<2x8x8xf32>
    %302 = vector.extract_strided_slice %235 {offsets = [0, 0, 24], sizes = [2, 8, 8], strides = [1, 1, 1]} : vector<2x8x32xf32> to vector<2x8x8xf32>
    "tpu.trace_start"() <{level = 10 : i32, message = "bqk,bkd->bqd"}> : () -> ()
    %cst_74 = arith.constant dense<0.000000e+00> : vector<2x8x8xf32>
    %303 = tpu.matmul %301, %302, %cst_74 {dimension_numbers = #tpu.dot_dimension_numbers<[2], [1], [1], [2], [0, 0, 0, 1, 1, 2], [0], [0]>} : vector<2x8x8xf32>, vector<2x8x8xf32>, vector<2x8x8xf32> -> vector<2x8x8xf32>
    "tpu.trace_stop"() : () -> ()
    %304 = tpu.concatenate %252, %269, %286, %303 in 2 : vector<2x8x8xf32>, vector<2x8x8xf32>, vector<2x8x8xf32>, vector<2x8x8xf32> -> vector<2x8x32xf32>
    %305 = vector.shape_cast %304 : vector<2x8x32xf32> to vector<16x32xf32>
    %306 = vector.extract_strided_slice %199 {offsets = [0, 96], sizes = [32, 32], strides = [1, 1]} : vector<32x128xf32> to vector<32x32xf32>
    %cst_75 = arith.constant dense<0.000000e+00> : vector<16x32xf32>
    %307 = tpu.matmul %305, %306, %cst_75 {dimension_numbers = #tpu.dot_dimension_numbers<[1], [0], [0], [1], [0, 0, 1, 1], [], []>} : vector<16x32xf32>, vector<32x32xf32>, vector<16x32xf32> -> vector<16x32xf32>
    %308 = vector.shape_cast %209 : vector<32xf32> to vector<1x32xf32>
    %309 = vector.broadcast %308 : vector<1x32xf32> to vector<16x32xf32>
    %310 = arith.addf %307, %309 : vector<16x32xf32>
    %311 = arith.addf %197, %310 : vector<16x32xf32>
    %cst_76 = arith.constant dense<0.000000e+00> : vector<16xf32>
    %312 = vector.multi_reduction <add>, %311, %cst_76 [1] : vector<16x32xf32> to vector<16xf32>
    %313 = vector.shape_cast %312 : vector<16xf32> to vector<16x1xf32>
    %cst_77 = arith.constant 3.200000e+01 : f32
    %314 = vector.broadcast %cst_77 : f32 to vector<16x1xf32>
    %315 = arith.divf %313, %314 : vector<16x1xf32>
    %316 = arith.mulf %311, %311 : vector<16x32xf32>
    %cst_78 = arith.constant dense<0.000000e+00> : vector<16xf32>
    %317 = vector.multi_reduction <add>, %316, %cst_78 [1] : vector<16x32xf32> to vector<16xf32>
    %318 = vector.shape_cast %317 : vector<16xf32> to vector<16x1xf32>
    %cst_79 = arith.constant 3.200000e+01 : f32
    %319 = vector.broadcast %cst_79 : f32 to vector<16x1xf32>
    %320 = arith.divf %318, %319 : vector<16x1xf32>
    %321 = arith.mulf %315, %315 : vector<16x1xf32>
    %322 = arith.subf %320, %321 : vector<16x1xf32>
    %cst_80 = arith.constant 0.000000e+00 : f32
    %323 = vector.broadcast %cst_80 : f32 to vector<16x1xf32>
    %324 = arith.maximumf %322, %323 : vector<16x1xf32>
    %325 = vector.broadcast %315 : vector<16x1xf32> to vector<16x32xf32>
    %326 = arith.subf %311, %325 : vector<16x32xf32>
    %cst_81 = arith.constant 9.99999974E-6 : f32
    %327 = vector.broadcast %cst_81 : f32 to vector<16x1xf32>
    %328 = arith.addf %324, %327 : vector<16x1xf32>
    %329 = math.rsqrt %328 : vector<16x1xf32>
    %330 = vector.broadcast %329 : vector<16x1xf32> to vector<16x32xf32>
    %331 = arith.mulf %326, %330 : vector<16x32xf32>
    %332 = vector.shape_cast %211 : vector<32xf32> to vector<1x32xf32>
    %333 = vector.broadcast %332 : vector<1x32xf32> to vector<16x32xf32>
    %334 = arith.mulf %331, %333 : vector<16x32xf32>
    %335 = vector.shape_cast %213 : vector<32xf32> to vector<1x32xf32>
    %336 = vector.broadcast %335 : vector<1x32xf32> to vector<16x32xf32>
    %337 = arith.addf %334, %336 : vector<16x32xf32>
    %c1_82 = arith.constant 1 : index
    %c0_83 = arith.constant 0 : index
    %c0_84 = arith.constant 0 : index
    %338 = vector.load %arg5[%c1_82, %c0_83, %c0_84] : memref<2x33x128xf32, #tpu.memory_space<vmem>>, vector<1x33x128xf32>
    %339 = vector.shape_cast %338 : vector<1x33x128xf32> to vector<33x128xf32>
    %340 = vector.extract_strided_slice %339 {offsets = [0, 0], sizes = [32, 64], strides = [1, 1]} : vector<33x128xf32> to vector<32x64xf32>
    %341 = vector.extract_strided_slice %339 {offsets = [0, 64], sizes = [32, 64], strides = [1, 1]} : vector<33x128xf32> to vector<32x64xf32>
    %342 = vector.extract_strided_slice %339 {offsets = [32, 0], sizes = [1, 64], strides = [1, 1]} : vector<33x128xf32> to vector<1x64xf32>
    %343 = vector.shape_cast %342 : vector<1x64xf32> to vector<64xf32>
    %344 = vector.extract_strided_slice %339 {offsets = [32, 64], sizes = [1, 32], strides = [1, 1]} : vector<33x128xf32> to vector<1x32xf32>
    %345 = vector.shape_cast %344 : vector<1x32xf32> to vector<32xf32>
    %cst_85 = arith.constant dense<0.000000e+00> : vector<16x64xf32>
    %346 = tpu.matmul %337, %340, %cst_85 {dimension_numbers = #tpu.dot_dimension_numbers<[1], [0], [0], [1], [0, 0, 1, 1], [], []>} : vector<16x32xf32>, vector<32x64xf32>, vector<16x64xf32> -> vector<16x64xf32>
    %347 = vector.shape_cast %343 : vector<64xf32> to vector<1x64xf32>
    %348 = vector.broadcast %347 : vector<1x64xf32> to vector<16x64xf32>
    %349 = arith.addf %346, %348 : vector<16x64xf32>
    %cst_86 = arith.constant 5.000000e-01 : f32
    %350 = vector.broadcast %cst_86 : f32 to vector<16x64xf32>
    %351 = arith.mulf %350, %349 : vector<16x64xf32>
    %cst_87 = arith.constant 0.707106769 : f32
    %352 = vector.broadcast %cst_87 : f32 to vector<16x64xf32>
    %353 = arith.mulf %349, %352 : vector<16x64xf32>
    %354 = math.erf %353 : vector<16x64xf32>
    %cst_88 = arith.constant 1.000000e+00 : f32
    %355 = vector.broadcast %cst_88 : f32 to vector<16x64xf32>
    %356 = arith.addf %355, %354 : vector<16x64xf32>
    %357 = arith.mulf %351, %356 : vector<16x64xf32>
    %cst_89 = arith.constant dense<0.000000e+00> : vector<16x32xf32>
    %358 = tpu.matmul %357, %341, %cst_89 {dimension_numbers = #tpu.dot_dimension_numbers<[1], [1], [0], [0], [0, 0, 1, 0], [], []>} : vector<16x64xf32>, vector<32x64xf32>, vector<16x32xf32> -> vector<16x32xf32>
    %359 = vector.shape_cast %345 : vector<32xf32> to vector<1x32xf32>
    %360 = vector.broadcast %359 : vector<1x32xf32> to vector<16x32xf32>
    %361 = arith.addf %358, %360 : vector<16x32xf32>
    %362 = arith.addf %337, %361 : vector<16x32xf32>
    %cst_90 = arith.constant dense<0.000000e+00> : vector<16xf32>
    %363 = vector.multi_reduction <add>, %362, %cst_90 [1] : vector<16x32xf32> to vector<16xf32>
    %364 = vector.shape_cast %363 : vector<16xf32> to vector<16x1xf32>
    %cst_91 = arith.constant 3.200000e+01 : f32
    %365 = vector.broadcast %cst_91 : f32 to vector<16x1xf32>
    %366 = arith.divf %364, %365 : vector<16x1xf32>
    %367 = arith.mulf %362, %362 : vector<16x32xf32>
    %cst_92 = arith.constant dense<0.000000e+00> : vector<16xf32>
    %368 = vector.multi_reduction <add>, %367, %cst_92 [1] : vector<16x32xf32> to vector<16xf32>
    %369 = vector.shape_cast %368 : vector<16xf32> to vector<16x1xf32>
    %cst_93 = arith.constant 3.200000e+01 : f32
    %370 = vector.broadcast %cst_93 : f32 to vector<16x1xf32>
    %371 = arith.divf %369, %370 : vector<16x1xf32>
    %372 = arith.mulf %366, %366 : vector<16x1xf32>
    %373 = arith.subf %371, %372 : vector<16x1xf32>
    %cst_94 = arith.constant 0.000000e+00 : f32
    %374 = vector.broadcast %cst_94 : f32 to vector<16x1xf32>
    %375 = arith.maximumf %373, %374 : vector<16x1xf32>
    %376 = vector.broadcast %366 : vector<16x1xf32> to vector<16x32xf32>
    %377 = arith.subf %362, %376 : vector<16x32xf32>
    %cst_95 = arith.constant 9.99999974E-6 : f32
    %378 = vector.broadcast %cst_95 : f32 to vector<16x1xf32>
    %379 = arith.addf %375, %378 : vector<16x1xf32>
    %380 = math.rsqrt %379 : vector<16x1xf32>
    %381 = vector.broadcast %380 : vector<16x1xf32> to vector<16x32xf32>
    %382 = arith.mulf %377, %381 : vector<16x32xf32>
    %383 = vector.shape_cast %215 : vector<32xf32> to vector<1x32xf32>
    %384 = vector.broadcast %383 : vector<1x32xf32> to vector<16x32xf32>
    %385 = arith.mulf %382, %384 : vector<16x32xf32>
    %386 = vector.shape_cast %217 : vector<32xf32> to vector<1x32xf32>
    %387 = vector.broadcast %386 : vector<1x32xf32> to vector<16x32xf32>
    %388 = arith.addf %385, %387 : vector<16x32xf32>
    %c0_96 = arith.constant 0 : index
    %c0_97 = arith.constant 0 : index
    %389 = vector.load %arg7[%c0_96, %c0_97] : memref<33x128xf32, #tpu.memory_space<vmem>>, vector<33x128xf32>
    %390 = vector.extract_strided_slice %389 {offsets = [0, 0], sizes = [32, 128], strides = [1, 1]} : vector<33x128xf32> to vector<32x128xf32>
    %cst_98 = arith.constant dense<0.000000e+00> : vector<16x128xf32>
    %391 = tpu.matmul %388, %390, %cst_98 {dimension_numbers = #tpu.dot_dimension_numbers<[1], [0], [0], [1], [0, 0, 1, 1], [], []>} : vector<16x32xf32>, vector<32x128xf32>, vector<16x128xf32> -> vector<16x128xf32>
    %392 = vector.extract_strided_slice %389 {offsets = [32, 0], sizes = [1, 128], strides = [1, 1]} : vector<33x128xf32> to vector<1x128xf32>
    %393 = vector.shape_cast %392 : vector<1x128xf32> to vector<128xf32>
    %394 = vector.shape_cast %393 : vector<128xf32> to vector<1x128xf32>
    %395 = vector.broadcast %394 : vector<1x128xf32> to vector<16x128xf32>
    %396 = arith.addf %391, %395 : vector<16x128xf32>
    %c0_99 = arith.constant 0 : index
    %c0_100 = arith.constant 0 : index
    %397 = vector.load %arg8[%c0_99, %c0_100] : memref<16x128xf32, #tpu.memory_space<vmem>>, vector<16x128xf32>
    tpu.vector_store %arg8[%c0_99, %c0_100], %396 {strides = array<i32>} : memref<16x128xf32, #tpu.memory_space<vmem>>, vector<16x128xf32>,
    return
  }
}

</mosaic_0001>

<llo_original>
// kernel: tpu_custom_call.1
$region0: #{tpu_custom_call.1}
  #allocation0 [shape = 'u32[]', space=smem, size = 0x4, offset = 0x4, fixed_abs, tag = 'smem constant byte address 0x4 - core index']
  #allocation1 [shape = 'u32[144,128]{1,0:T(1,128)}', space=vmem, size = 0x12000, scoped, tag = 'internal scratch']
  %s0 = inlined_call_operand.vmem [shape: f32[16,32], index: 0, kind: input, shape index: {}]
  %s1 = inlined_call_operand.vmem [shape: f32[16,8], index: 1, kind: input, shape index: {}]
  %s2 = inlined_call_operand.vmem [shape: f32[2,8], index: 2, kind: input, shape index: {}]
  %s3 = inlined_call_operand.vmem [shape: f32[8,32], index: 3, kind: input, shape index: {}]
  %s4 = inlined_call_operand.vmem [shape: f32[2,32,128], index: 4, kind: input, shape index: {}]
  %s5 = inlined_call_operand.vmem [shape: f32[2,33,128], index: 5, kind: input, shape index: {}]
  %s6 = inlined_call_operand.vmem [shape: f32[2,8,32], index: 6, kind: input, shape index: {}]
  %s7 = inlined_call_operand.vmem [shape: f32[33,128], index: 7, kind: input, shape index: {}]
  %s8 = inlined_call_operand.hbm [shape: f32[16,128], index: 8, kind: output, shape index: {}]
  %s9 = sld [smem:[#allocation0]]
  $region42: #{tpu_custom_call.1} parent=0
    _
  %s11 = ssub.s32 1, %s9
  %s12 = scalar_select 0, %s11, %s9
  $region1: #{tpu_custom_call.1} parent=0
    #allocation2 [shape = 'u8[8192]{0}', space=vmem, size = 0x2000, scoped, tag = 'output window, operand 0, single buffered']
    #allocation3 [shape = 's32[1]{0}', space=sflag, size = 0x4, scoped, tag = 'scoped memory for tpu_custom_call.1']
    %13 = vsyncpa [#allocation3], 0
    // Predicated region
    $region2: #{tpu_custom_call.1} parent=1 // pred_check
      _
    $region3: #{tpu_custom_call.1} parent=1 // pred_check_branch
      %15 = sbr.rel (0) target = $region5
    $region4: #{tpu_custom_call.1} parent=1 // pred_region
      _
    $region5: #{tpu_custom_call.1} parent=1 // pred_fallthru
      _
    // Predicated region
    $region6: #{tpu_custom_call.1} parent=1 // pred_check
      _
    $region7: #{tpu_custom_call.1} parent=1 // pred_check_branch
      %17 = sbr.rel (0) target = $region9
    $region8: #{tpu_custom_call.1} parent=1 // pred_region
      _
    $region9: #{tpu_custom_call.1} parent=1 // pred_fallthru
      _
    // Predicated region
    $region10: #{tpu_custom_call.1} parent=1 // pred_check
      _
    $region11: #{tpu_custom_call.1} parent=1 // pred_check_branch
      %19 = sbr.rel (0) target = $region13
    $region12: #{tpu_custom_call.1} parent=1 // pred_region
      _
    $region13: #{tpu_custom_call.1} parent=1 // pred_fallthru
      _
    // Predicated region
    $region14: #{tpu_custom_call.1} parent=1 // pred_check
      _
    $region15: #{tpu_custom_call.1} parent=1 // pred_check_branch
      %21 = sbr.rel (0) target = $region17
    $region16: #{tpu_custom_call.1} parent=1 // pred_region
      _
    $region17: #{tpu_custom_call.1} parent=1 // pred_fallthru
      _
    // Predicated region
    $region18: #{tpu_custom_call.1} parent=1 // pred_check
      _
    $region19: #{tpu_custom_call.1} parent=1 // pred_check_branch
      %23 = sbr.rel (0) target = $region21
    $region20: #{tpu_custom_call.1} parent=1 // pred_region
      _
    $region21: #{tpu_custom_call.1} parent=1 // pred_fallthru
      _
    // Predicated region
    $region22: #{tpu_custom_call.1} parent=1 // pred_check
      _
    $region23: #{tpu_custom_call.1} parent=1 // pred_check_branch
      %25 = sbr.rel (0) target = $region25
    $region24: #{tpu_custom_call.1} parent=1 // pred_region
      _
    $region25: #{tpu_custom_call.1} parent=1 // pred_fallthru
      _
    // Predicated region
    $region26: #{tpu_custom_call.1} parent=1 // pred_check
      _
    $region27: #{tpu_custom_call.1} parent=1 // pred_check_branch
      %27 = sbr.rel (0) target = $region29
    $region28: #{tpu_custom_call.1} parent=1 // pred_region
      _
    $region29: #{tpu_custom_call.1} parent=1 // pred_fallthru
      _
    // Predicated region
    $region30: #{tpu_custom_call.1} parent=1 // pred_check
      _
    $region31: #{tpu_custom_call.1} parent=1 // pred_check_branch
      %29 = sbr.rel (0) target = $region33
    $region32: #{tpu_custom_call.1} parent=1 // pred_region
      _
    $region33: #{tpu_custom_call.1} parent=1 // pred_fallthru
      _
    %v30 = vld [vmem:[%s1] sm:$0xff]
    %v31 = vld [vmem:[%s1 + $0x8] sm:$0xff]
    %v32 = vld [vmem:[%s3] sm:$0xff]
    %vm33 = vcmask 64512
    %v35 = vsel %vm33, %v30, 0
    %v38 = vsel %vm33, %v31, 0
    %40 = vmatprep.subr.mxu0 0.0
    %41 = vmatpush1.msra.mxu0 0.0
    %42 = vmatprep.subr.mxu0 0.0
    %43 = vmatpush1.msra.mxu0 0.0
    %44 = vmatprep.subr.mxu0 0.0
    %45 = vmatpush1.msra.mxu0 0.0
    %46 = vmatprep.subr.mxu0 0.0
    %47 = vmatpush1.msra.mxu0 0.0
    %48 = vmatprep.subr.mxu0 0.0
    %49 = vmatpush1.msra.mxu0 0.0
    %50 = vmatprep.subr.mxu0 0.0
    %51 = vmatpush1.msra.mxu0 0.0
    %52 = vmatprep.subr.mxu0 0.0
    %53 = vmatpush1.msra.mxu0 0.0
    %54 = vmatprep.subr.mxu0 0.0
    %55 = vmatpush1.msra.mxu0 0.0
    %56 = vmatprep.subr.mxu0 0.0
    %57 = vmatpush1.msra.mxu0 0.0
    %58 = vmatprep.subr.mxu0 0.0
    %59 = vmatpush1.msra.mxu0 0.0
    %60 = vmatprep.subr.mxu0 0.0
    %61 = vmatpush1.msra.mxu0 0.0
    %62 = vmatprep.subr.mxu0 0.0
    %63 = vmatpush1.msra.mxu0 0.0
    %64 = vmatprep.subr.mxu0 0.0
    %65 = vmatpush1.msra.mxu0 0.0
    %66 = vmatprep.subr.mxu0 0.0
    %67 = vmatpush1.msra.mxu0 0.0
    %68 = vmatprep.subr.mxu0 0.0
    %69 = vmatpush1.msra.mxu0 0.0
    %70 = vmatprep.subr.mxu0 0.0
    %71 = vmatpush1.msra.mxu0 %v32
    %72 = vmatprep.subr.mxu0 0.0
    %73 = vmatpush2.msra.mxu0 0.0
    %74 = vmatprep.subr.mxu0 0.0
    %75 = vmatpush2.msra.mxu0 0.0
    %76 = vmatprep.subr.mxu0 0.0
    %77 = vmatpush2.msra.mxu0 0.0
    %78 = vmatprep.subr.mxu0 0.0
    %79 = vmatpush2.msra.mxu0 0.0
    %80 = vmatprep.subr.mxu0 0.0
    %81 = vmatpush2.msra.mxu0 0.0
    %82 = vmatprep.subr.mxu0 0.0
    %83 = vmatpush2.msra.mxu0 0.0
    %84 = vmatprep.subr.mxu0 0.0
    %85 = vmatpush2.msra.mxu0 0.0
    %86 = vmatprep.subr.mxu0 0.0
    %87 = vmatpush2.msra.mxu0 0.0
    %88 = vmatprep.subr.mxu0 0.0
    %89 = vmatpush2.msra.mxu0 0.0
    %90 = vmatprep.subr.mxu0 0.0
    %91 = vmatpush2.msra.mxu0 0.0
    %92 = vmatprep.subr.mxu0 0.0
    %93 = vmatpush2.msra.mxu0 0.0
    %94 = vmatprep.subr.mxu0 0.0
    %95 = vmatpush2.msra.mxu0 0.0
    %96 = vmatprep.subr.mxu0 0.0
    %97 = vmatpush2.msra.mxu0 0.0
    %98 = vmatprep.subr.mxu0 0.0
    %99 = vmatpush2.msra.mxu0 0.0
    %100 = vmatprep.subr.mxu0 0.0
    %101 = vmatpush2.msra.mxu0 0.0
    %102 = vmatprep.subr.mxu0 0.0
    %103 = vmatpush2.msra.mxu0 0.0
    %104 = vmatprep.mubr.f32.mxu0 0.0
    %105 = vmatmul.mubr.f32.gmra.mxu0 %v35
    %v106 = vpop.f32.mrf.mxu0
    %v107 = vadd.f32 0.0, %v106
    %v108 = vpop.f32.mrf.mxu0
    %109 = vmatprep.mubr.f32.mxu0 0.0
    %110 = vmatmul.mubr.f32.gmra.mxu0 %v38
    %v111 = vpop.f32.mrf.mxu0
    %v112 = vadd.f32 0.0, %v111
    %v113 = vpop.f32.mrf.mxu0
    %114 = vdwg.mxu0
    %v115 = vld [vmem:[%s0] sm:$0xff]
    %v116 = vld [vmem:[%s0 + $0x8] sm:$0xff]
    %v117 = vadd.f32 %v115, %v107
    %v118 = vadd.f32 %v116, %v112
    %v119 = vld [vmem:[%s2] sm:$0x3]
    %v122 = vunpack.c.l.s4 1966171168
    %v123 = vunpack.c.0.s8 %v122
    %v124 = vlaneseq
    %v125 = vshrl.u32 %v124, 7
    %v126 = vsub.s32 %v123, %v125
    %v127 = vrot.slane %v119, %v126
    %v128 = vcombine.high %v127, %v127
    %v130 = vunpack.c.l.s4 1966171168
    %v131 = vunpack.c.0.s8 %v130
    %v132 = vlaneseq
    %v133 = vshrl.u32 %v132, 7
    %v134 = vsub.s32 %v131, %v133
    %v135 = vrot.slane %v127, %v134
    %v137 = vunpack.c.l.s4 1966171168
    %v138 = vunpack.c.0.s8 %v137
    %v139 = vlaneseq
    %v140 = vshrl.u32 %v139, 7
    %v141 = vsub.s32 %v138, %v140
    %v142 = vrot.slane %v128, %v141
    %v143 = vld [vmem:[%s4] sm:$0xff]
    %v144 = vld [vmem:[%s4 + $0x8] sm:$0xff]
    %v145 = vld [vmem:[%s4 + $0x10] sm:$0xff]
    %v146 = vld [vmem:[%s4 + $0x18] sm:$0xff]
    %v147 = vld [vmem:[%s6] sm:$0xff]
    %vm148 = vcmask 261120
    %v150 = vsel %vm148, %v117, 0
    %v153 = vsel %vm148, %v118, 0
    %155 = vmatprep.subr.mxu0 0.0
    %156 = vmatpush1.msra.mxu0 0.0
    %157 = vmatprep.subr.mxu0 0.0
    %158 = vmatpush1.msra.mxu0 0.0
    %159 = vmatprep.subr.mxu0 0.0
    %160 = vmatpush1.msra.mxu0 0.0
    %161 = vmatprep.subr.mxu0 0.0
    %162 = vmatpush1.msra.mxu0 0.0
    %163 = vmatprep.subr.mxu0 0.0
    %164 = vmatpush1.msra.mxu0 0.0
    %165 = vmatprep.subr.mxu0 0.0
    %166 = vmatpush1.msra.mxu0 0.0
    %167 = vmatprep.subr.mxu0 0.0
    %168 = vmatpush1.msra.mxu0 0.0
    %169 = vmatprep.subr.mxu0 0.0
    %170 = vmatpush1.msra.mxu0 0.0
    %171 = vmatprep.subr.mxu0 0.0
    %172 = vmatpush1.msra.mxu0 0.0
    %173 = vmatprep.subr.mxu0 0.0
    %174 = vmatpush1.msra.mxu0 0.0
    %175 = vmatprep.subr.mxu0 0.0
    %176 = vmatpush1.msra.mxu0 0.0
    %177 = vmatprep.subr.mxu0 0.0
    %178 = vmatpush1.msra.mxu0 0.0
    %179 = vmatprep.subr.mxu0 0.0
    %180 = vmatpush1.msra.mxu0 %v146
    %181 = vmatprep.subr.mxu0 0.0
    %182 = vmatpush1.msra.mxu0 %v145
    %183 = vmatprep.subr.mxu0 0.0
    %184 = vmatpush1.msra.mxu0 %v144
    %185 = vmatprep.subr.mxu0 0.0
    %186 = vmatpush1.msra.mxu0 %v143
    %187 = vmatprep.subr.mxu0 0.0
    %188 = vmatpush2.msra.mxu0 0.0
    %189 = vmatprep.subr.mxu0 0.0
    %190 = vmatpush2.msra.mxu0 0.0
    %191 = vmatprep.subr.mxu0 0.0
    %192 = vmatpush2.msra.mxu0 0.0
    %193 = vmatprep.subr.mxu0 0.0
    %194 = vmatpush2.msra.mxu0 0.0
    %195 = vmatprep.subr.mxu0 0.0
    %196 = vmatpush2.msra.mxu0 0.0
    %197 = vmatprep.subr.mxu0 0.0
    %198 = vmatpush2.msra.mxu0 0.0
    %199 = vmatprep.subr.mxu0 0.0
    %200 = vmatpush2.msra.mxu0 0.0
    %201 = vmatprep.subr.mxu0 0.0
    %202 = vmatpush2.msra.mxu0 0.0
    %203 = vmatprep.subr.mxu0 0.0
    %204 = vmatpush2.msra.mxu0 0.0
    %205 = vmatprep.subr.mxu0 0.0
    %206 = vmatpush2.msra.mxu0 0.0
    %207 = vmatprep.subr.mxu0 0.0
    %208 = vmatpush2.msra.mxu0 0.0
    %209 = vmatprep.subr.mxu0 0.0
    %210 = vmatpush2.msra.mxu0 0.0
    %211 = vmatprep.subr.mxu0 0.0
    %212 = vmatpush2.msra.mxu0 0.0
    %213 = vmatprep.subr.mxu0 0.0
    %214 = vmatpush2.msra.mxu0 0.0
    %215 = vmatprep.subr.mxu0 0.0
    %216 = vmatpush2.msra.mxu0 0.0
    %217 = vmatprep.subr.mxu0 0.0
    %218 = vmatpush2.msra.mxu0 0.0
    %219 = vmatprep.mubr.f32.mxu0 0.0
    %220 = vmatmul.mubr.f32.gmra.mxu0 %v150
    %v221 = vpop.f32.mrf.mxu0
    %v222 = vadd.f32 0.0, %v221
    %v223 = vpop.f32.mrf.mxu0
    %224 = vmatprep.mubr.f32.mxu0 0.0
    %225 = vmatmul.mubr.f32.gmra.mxu0 %v153
    %v226 = vpop.f32.mrf.mxu0
    %v227 = vadd.f32 0.0, %v226
    %v228 = vpop.f32.mrf.mxu0
    %229 = vdwg.mxu0
    %v230 = vlaneseq
    %v231 = vshrl.u32 %v230, 7
    %v232 = vsub.s32 0, %v231
    %v233 = vrot.slane %v147, %v232
    %v234 = vadd.f32 %v222, %v233
    %v235 = vadd.f32 %v227, %v233
    %v236 = vmul.f32 %v234, 0.35355338
    %v237 = vmul.f32 %v235, 0.35355338
    %v238 = vlaneseq
    %v239 = vshrl.u32 %v238, 7
    %v240 = vsub.s32 1, %v239
    %v241 = vrot.slane %v147, %v240
    %243 = vrot.lane.b32.xlu0 %v241, 32
    %v244 = vpop.permute.xlu0 %243
    %v246 = vadd.f32 %v222, %v244
    %v247 = vadd.f32 %v227, %v244
    %v248 = vlaneseq
    %v249 = vshrl.u32 %v248, 7
    %v250 = vsub.s32 2, %v249
    %v251 = vrot.slane %v147, %v250
    %253 = vrot.lane.b32.xlu0 %v251, 64
    %v254 = vpop.permute.xlu0 %253
    %v256 = vadd.f32 %v222, %v254
    %v257 = vadd.f32 %v227, %v254
    %v258 = vlaneseq
    %v259 = vshrl.u32 %v258, 7
    %v260 = vsub.s32 0, %v259
    %v261 = vrot.slane %v135, %v260
    %v262 = vlaneseq
    %v263 = vshrl.u32 %v262, 7
    %v264 = vsub.s32 0, %v263
    %v265 = vrot.slane %v142, %v264
    %269 = vrot.lane.b32.xlu0 %v246, 96
    %v270 = vpop.permute.xlu0 %269
    %v272 = vsel %vm33, %v236, 0
    %v274 = vsel %vm33, %v270, 0
    %276 = vmatprep.subr.mxu0 0.0
    %277 = vmatpush1.xpose.msra.mxu0 0.0
    %278 = vmatprep.subr.mxu0 0.0
    %279 = vmatpush1.xpose.msra.mxu0 0.0
    %280 = vmatprep.subr.mxu0 0.0
    %281 = vmatpush1.xpose.msra.mxu0 0.0
    %282 = vmatprep.subr.mxu0 0.0
    %283 = vmatpush1.xpose.msra.mxu0 0.0
    %284 = vmatprep.subr.mxu0 0.0
    %285 = vmatpush1.xpose.msra.mxu0 0.0
    %286 = vmatprep.subr.mxu0 0.0
    %287 = vmatpush1.xpose.msra.mxu0 0.0
    %288 = vmatprep.subr.mxu0 0.0
    %289 = vmatpush1.xpose.msra.mxu0 0.0
    %290 = vmatprep.subr.mxu0 0.0
    %291 = vmatpush1.xpose.msra.mxu0 0.0
    %292 = vmatprep.subr.mxu0 0.0
    %293 = vmatpush1.xpose.msra.mxu0 0.0
    %294 = vmatprep.subr.mxu0 0.0
    %295 = vmatpush1.xpose.msra.mxu0 0.0
    %296 = vmatprep.subr.mxu0 0.0
    %297 = vmatpush1.xpose.msra.mxu0 0.0
    %298 = vmatprep.subr.mxu0 0.0
    %299 = vmatpush1.xpose.msra.mxu0 0.0
    %300 = vmatprep.subr.mxu0 0.0
    %301 = vmatpush1.xpose.msra.mxu0 0.0
    %302 = vmatprep.subr.mxu0 0.0
    %303 = vmatpush1.xpose.msra.mxu0 0.0
    %304 = vmatprep.subr.mxu0 0.0
    %305 = vmatpush1.xpose.msra.mxu0 0.0
    %306 = vmatprep.subr.mxu0 0.0
    %307 = vmatpush1.xpose.msra.mxu0 %v274
    %308 = vmatprep.subr.mxu0 0.0
    %309 = vmatpush2.xpose.msra.mxu0 0.0
    %310 = vmatprep.subr.mxu0 0.0
    %311 = vmatpush2.xpose.msra.mxu0 0.0
    %312 = vmatprep.subr.mxu0 0.0
    %313 = vmatpush2.xpose.msra.mxu0 0.0
    %314 = vmatprep.subr.mxu0 0.0
    %315 = vmatpush2.xpose.msra.mxu0 0.0
    %316 = vmatprep.subr.mxu0 0.0
    %317 = vmatpush2.xpose.msra.mxu0 0.0
    %318 = vmatprep.subr.mxu0 0.0
    %319 = vmatpush2.xpose.msra.mxu0 0.0
    %320 = vmatprep.subr.mxu0 0.0
    %321 = vmatpush2.xpose.msra.mxu0 0.0
    %322 = vmatprep.subr.mxu0 0.0
    %323 = vmatpush2.xpose.msra.mxu0 0.0
    %324 = vmatprep.subr.mxu0 0.0
    %325 = vmatpush2.xpose.msra.mxu0 0.0
    %326 = vmatprep.subr.mxu0 0.0
    %327 = vmatpush2.xpose.msra.mxu0 0.0
    %328 = vmatprep.subr.mxu0 0.0
    %329 = vmatpush2.xpose.msra.mxu0 0.0
    %330 = vmatprep.subr.mxu0 0.0
    %331 = vmatpush2.xpose.msra.mxu0 0.0
    %332 = vmatprep.subr.mxu0 0.0
    %333 = vmatpush2.xpose.msra.mxu0 0.0
    %334 = vmatprep.subr.mxu0 0.0
    %335 = vmatpush2.xpose.msra.mxu0 0.0
    %336 = vmatprep.subr.mxu0 0.0
    %337 = vmatpush2.xpose.msra.mxu0 0.0
    %338 = vmatprep.subr.mxu0 0.0
    %339 = vmatpush2.xpose.msra.mxu0 0.0
    %340 = vmatprep.mubr.f32.mxu0 0.0
    %341 = vmatmul.mubr.f32.gmra.mxu0 %v272
    %v342 = vpop.f32.mrf.mxu0
    %v343 = vadd.f32 %v261, %v342
    %v344 = vpop.f32.mrf.mxu0
    %345 = vdwg.mxu0
    %347 = vrot.lane.b32.xlu0 %v247, 96
    %v348 = vpop.permute.xlu0 %347
    %v350 = vsel %vm33, %v237, 0
    %v352 = vsel %vm33, %v348, 0
    %354 = vmatprep.subr.mxu0 0.0
    %355 = vmatpush1.xpose.msra.mxu0 0.0
    %356 = vmatprep.subr.mxu0 0.0
    %357 = vmatpush1.xpose.msra.mxu0 0.0
    %358 = vmatprep.subr.mxu0 0.0
    %359 = vmatpush1.xpose.msra.mxu0 0.0
    %360 = vmatprep.subr.mxu0 0.0
    %361 = vmatpush1.xpose.msra.mxu0 0.0
    %362 = vmatprep.subr.mxu0 0.0
    %363 = vmatpush1.xpose.msra.mxu0 0.0
    %364 = vmatprep.subr.mxu0 0.0
    %365 = vmatpush1.xpose.msra.mxu0 0.0
    %366 = vmatprep.subr.mxu0 0.0
    %367 = vmatpush1.xpose.msra.mxu0 0.0
    %368 = vmatprep.subr.mxu0 0.0
    %369 = vmatpush1.xpose.msra.mxu0 0.0
    %370 = vmatprep.subr.mxu0 0.0
    %371 = vmatpush1.xpose.msra.mxu0 0.0
    %372 = vmatprep.subr.mxu0 0.0
    %373 = vmatpush1.xpose.msra.mxu0 0.0
    %374 = vmatprep.subr.mxu0 0.0
    %375 = vmatpush1.xpose.msra.mxu0 0.0
    %376 = vmatprep.subr.mxu0 0.0
    %377 = vmatpush1.xpose.msra.mxu0 0.0
    %378 = vmatprep.subr.mxu0 0.0
    %379 = vmatpush1.xpose.msra.mxu0 0.0
    %380 = vmatprep.subr.mxu0 0.0
    %381 = vmatpush1.xpose.msra.mxu0 0.0
    %382 = vmatprep.subr.mxu0 0.0
    %383 = vmatpush1.xpose.msra.mxu0 0.0
    %384 = vmatprep.subr.mxu0 0.0
    %385 = vmatpush1.xpose.msra.mxu0 %v352
    %386 = vmatprep.subr.mxu0 0.0
    %387 = vmatpush2.xpose.msra.mxu0 0.0
    %388 = vmatprep.subr.mxu0 0.0
    %389 = vmatpush2.xpose.msra.mxu0 0.0
    %390 = vmatprep.subr.mxu0 0.0
    %391 = vmatpush2.xpose.msra.mxu0 0.0
    %392 = vmatprep.subr.mxu0 0.0
    %393 = vmatpush2.xpose.msra.mxu0 0.0
    %394 = vmatprep.subr.mxu0 0.0
    %395 = vmatpush2.xpose.msra.mxu0 0.0
    %396 = vmatprep.subr.mxu0 0.0
    %397 = vmatpush2.xpose.msra.mxu0 0.0
    %398 = vmatprep.subr.mxu0 0.0
    %399 = vmatpush2.xpose.msra.mxu0 0.0
    %400 = vmatprep.subr.mxu0 0.0
    %401 = vmatpush2.xpose.msra.mxu0 0.0
    %402 = vmatprep.subr.mxu0 0.0
    %403 = vmatpush2.xpose.msra.mxu0 0.0
    %404 = vmatprep.subr.mxu0 0.0
    %405 = vmatpush2.xpose.msra.mxu0 0.0
    %406 = vmatprep.subr.mxu0 0.0
    %407 = vmatpush2.xpose.msra.mxu0 0.0
    %408 = vmatprep.subr.mxu0 0.0
    %409 = vmatpush2.xpose.msra.mxu0 0.0
    %410 = vmatprep.subr.mxu0 0.0
    %411 = vmatpush2.xpose.msra.mxu0 0.0
    %412 = vmatprep.subr.mxu0 0.0
    %413 = vmatpush2.xpose.msra.mxu0 0.0
    %414 = vmatprep.subr.mxu0 0.0
    %415 = vmatpush2.xpose.msra.mxu0 0.0
    %416 = vmatprep.subr.mxu0 0.0
    %417 = vmatpush2.xpose.msra.mxu0 0.0
    %418 = vmatprep.mubr.f32.mxu0 0.0
    %419 = vmatmul.mubr.f32.gmra.mxu0 %v350
    %v420 = vpop.f32.mrf.mxu0
    %v421 = vadd.f32 %v265, %v420
    %v422 = vpop.f32.mrf.mxu0
    %423 = vdwg.mxu0
    %v424 = vsel %vm33, %v343, -inf
    %425 = vmax.xlane.f32.xlu0 %v424
    %v426 = vpop.xlane.xlu0 %425
    %v427 = vsel %vm33, %v421, -inf
    %428 = vmax.xlane.f32.xlu0 %v427
    %v429 = vpop.xlane.xlu0 %428
    %v430 = vsub.f32 %v343, %v426
    %v431 = vsub.f32 %v421, %v429
    %v432 = vmul.f32 %v430, 1.442695
    %v433 = vpow.pop %v432
    %v434 = vmul.f32 %v431, 1.442695
    %v435 = vpow.pop %v434
    %v436 = vsel %vm33, %v433, 0.0
    %437 = vadd.xlane.f32.xlu0 %v436
    %v438 = vpop.xlane.xlu0 %437
    %v439 = vsel %vm33, %v435, 0.0
    %440 = vadd.xlane.f32.xlu0 %v439
    %v441 = vpop.xlane.xlu0 %440
    %v442 = vrcp.pop %v438
    %v443 = vrcp.pop %v441
    %v444 = vmul.f32 %v433, %v442
    %v445 = vmul.f32 %v435, %v443
    %447 = vrot.lane.b32.xlu0 %v256, 64
    %v448 = vpop.permute.xlu0 %447
    %v451 = vsel %vm33, %v444, 0
    %453 = vmatprep.subr.mxu0 0.0
    %454 = vmatpush1.msra.mxu0 0.0
    %455 = vmatprep.subr.mxu0 0.0
    %456 = vmatpush1.msra.mxu0 0.0
    %457 = vmatprep.subr.mxu0 0.0
    %458 = vmatpush1.msra.mxu0 0.0
    %459 = vmatprep.subr.mxu0 0.0
    %460 = vmatpush1.msra.mxu0 0.0
    %461 = vmatprep.subr.mxu0 0.0
    %462 = vmatpush1.msra.mxu0 0.0
    %463 = vmatprep.subr.mxu0 0.0
    %464 = vmatpush1.msra.mxu0 0.0
    %465 = vmatprep.subr.mxu0 0.0
    %466 = vmatpush1.msra.mxu0 0.0
    %467 = vmatprep.subr.mxu0 0.0
    %468 = vmatpush1.msra.mxu0 0.0
    %469 = vmatprep.subr.mxu0 0.0
    %470 = vmatpush1.msra.mxu0 0.0
    %471 = vmatprep.subr.mxu0 0.0
    %472 = vmatpush1.msra.mxu0 0.0
    %473 = vmatprep.subr.mxu0 0.0
    %474 = vmatpush1.msra.mxu0 0.0
    %475 = vmatprep.subr.mxu0 0.0
    %476 = vmatpush1.msra.mxu0 0.0
    %477 = vmatprep.subr.mxu0 0.0
    %478 = vmatpush1.msra.mxu0 0.0
    %479 = vmatprep.subr.mxu0 0.0
    %480 = vmatpush1.msra.mxu0 0.0
    %481 = vmatprep.subr.mxu0 0.0
    %482 = vmatpush1.msra.mxu0 0.0
    %483 = vmatprep.subr.mxu0 0.0
    %484 = vmatpush1.msra.mxu0 %v448
    %485 = vmatprep.subr.mxu0 0.0
    %486 = vmatpush2.msra.mxu0 0.0
    %487 = vmatprep.subr.mxu0 0.0
    %488 = vmatpush2.msra.mxu0 0.0
    %489 = vmatprep.subr.mxu0 0.0
    %490 = vmatpush2.msra.mxu0 0.0
    %491 = vmatprep.subr.mxu0 0.0
    %492 = vmatpush2.msra.mxu0 0.0
    %493 = vmatprep.subr.mxu0 0.0
    %494 = vmatpush2.msra.mxu0 0.0
    %495 = vmatprep.subr.mxu0 0.0
    %496 = vmatpush2.msra.mxu0 0.0
    %497 = vmatprep.subr.mxu0 0.0
    %498 = vmatpush2.msra.mxu0 0.0
    %499 = vmatprep.subr.mxu0 0.0
    %500 = vmatpush2.msra.mxu0 0.0
    %501 = vmatprep.subr.mxu0 0.0
    %502 = vmatpush2.msra.mxu0 0.0
    %503 = vmatprep.subr.mxu0 0.0
    %504 = vmatpush2.msra.mxu0 0.0
    %505 = vmatprep.subr.mxu0 0.0
    %506 = vmatpush2.msra.mxu0 0.0
    %507 = vmatprep.subr.mxu0 0.0
    %508 = vmatpush2.msra.mxu0 0.0
    %509 = vmatprep.subr.mxu0 0.0
    %510 = vmatpush2.msra.mxu0 0.0
    %511 = vmatprep.subr.mxu0 0.0
    %512 = vmatpush2.msra.mxu0 0.0
    %513 = vmatprep.subr.mxu0 0.0
    %514 = vmatpush2.msra.mxu0 0.0
    %515 = vmatprep.subr.mxu0 0.0
    %516 = vmatpush2.msra.mxu0 0.0
    %517 = vmatprep.mubr.f32.mxu0 0.0
    %518 = vmatmul.mubr.f32.gmra.mxu0 %v451
    %v519 = vpop.f32.mrf.mxu0
    %v520 = vadd.f32 0.0, %v519
    %v521 = vpop.f32.mrf.mxu0
    %522 = vdwg.mxu0
    %524 = vrot.lane.b32.xlu0 %v257, 64
    %v525 = vpop.permute.xlu0 %524
    %v528 = vsel %vm33, %v445, 0
    %530 = vmatprep.subr.mxu0 0.0
    %531 = vmatpush1.msra.mxu0 0.0
    %532 = vmatprep.subr.mxu0 0.0
    %533 = vmatpush1.msra.mxu0 0.0
    %534 = vmatprep.subr.mxu0 0.0
    %535 = vmatpush1.msra.mxu0 0.0
    %536 = vmatprep.subr.mxu0 0.0
    %537 = vmatpush1.msra.mxu0 0.0
    %538 = vmatprep.subr.mxu0 0.0
    %539 = vmatpush1.msra.mxu0 0.0
    %540 = vmatprep.subr.mxu0 0.0
    %541 = vmatpush1.msra.mxu0 0.0
    %542 = vmatprep.subr.mxu0 0.0
    %543 = vmatpush1.msra.mxu0 0.0
    %544 = vmatprep.subr.mxu0 0.0
    %545 = vmatpush1.msra.mxu0 0.0
    %546 = vmatprep.subr.mxu0 0.0
    %547 = vmatpush1.msra.mxu0 0.0
    %548 = vmatprep.subr.mxu0 0.0
    %549 = vmatpush1.msra.mxu0 0.0
    %550 = vmatprep.subr.mxu0 0.0
    %551 = vmatpush1.msra.mxu0 0.0
    %552 = vmatprep.subr.mxu0 0.0
    %553 = vmatpush1.msra.mxu0 0.0
    %554 = vmatprep.subr.mxu0 0.0
    %555 = vmatpush1.msra.mxu0 0.0
    %556 = vmatprep.subr.mxu0 0.0
    %557 = vmatpush1.msra.mxu0 0.0
    %558 = vmatprep.subr.mxu0 0.0
    %559 = vmatpush1.msra.mxu0 0.0
    %560 = vmatprep.subr.mxu0 0.0
    %561 = vmatpush1.msra.mxu0 %v525
    %562 = vmatprep.subr.mxu0 0.0
    %563 = vmatpush2.msra.mxu0 0.0
    %564 = vmatprep.subr.mxu0 0.0
    %565 = vmatpush2.msra.mxu0 0.0
    %566 = vmatprep.subr.mxu0 0.0
    %567 = vmatpush2.msra.mxu0 0.0
    %568 = vmatprep.subr.mxu0 0.0
    %569 = vmatpush2.msra.mxu0 0.0
    %570 = vmatprep.subr.mxu0 0.0
    %571 = vmatpush2.msra.mxu0 0.0
    %572 = vmatprep.subr.mxu0 0.0
    %573 = vmatpush2.msra.mxu0 0.0
    %574 = vmatprep.subr.mxu0 0.0
    %575 = vmatpush2.msra.mxu0 0.0
    %576 = vmatprep.subr.mxu0 0.0
    %577 = vmatpush2.msra.mxu0 0.0
    %578 = vmatprep.subr.mxu0 0.0
    %579 = vmatpush2.msra.mxu0 0.0
    %580 = vmatprep.subr.mxu0 0.0
    %581 = vmatpush2.msra.mxu0 0.0
    %582 = vmatprep.subr.mxu0 0.0
    %583 = vmatpush2.msra.mxu0 0.0
    %584 = vmatprep.subr.mxu0 0.0
    %585 = vmatpush2.msra.mxu0 0.0
    %586 = vmatprep.subr.mxu0 0.0
    %587 = vmatpush2.msra.mxu0 0.0
    %588 = vmatprep.subr.mxu0 0.0
    %589 = vmatpush2.msra.mxu0 0.0
    %590 = vmatprep.subr.mxu0 0.0
    %591 = vmatpush2.msra.mxu0 0.0
    %592 = vmatprep.subr.mxu0 0.0
    %593 = vmatpush2.msra.mxu0 0.0
    %594 = vmatprep.mubr.f32.mxu0 0.0
    %595 = vmatmul.mubr.f32.gmra.mxu0 %v528
    %v596 = vpop.f32.mrf.mxu0
    %v597 = vadd.f32 0.0, %v596
    %v598 = vpop.f32.mrf.mxu0
    %599 = vdwg.mxu0
    %600 = vrot.lane.b32.xlu0 %v236, 120
    %v601 = vpop.permute.xlu0 %600
    %602 = vrot.lane.b32.xlu0 %v246, 88
    %v603 = vpop.permute.xlu0 %602
    %v604 = vsel %vm33, %v601, 0
    %v606 = vsel %vm33, %v603, 0
    %608 = vmatprep.subr.mxu0 0.0
    %609 = vmatpush1.xpose.msra.mxu0 0.0
    %610 = vmatprep.subr.mxu0 0.0
    %611 = vmatpush1.xpose.msra.mxu0 0.0
    %612 = vmatprep.subr.mxu0 0.0
    %613 = vmatpush1.xpose.msra.mxu0 0.0
    %614 = vmatprep.subr.mxu0 0.0
    %615 = vmatpush1.xpose.msra.mxu0 0.0
    %616 = vmatprep.subr.mxu0 0.0
    %617 = vmatpush1.xpose.msra.mxu0 0.0
    %618 = vmatprep.subr.mxu0 0.0
    %619 = vmatpush1.xpose.msra.mxu0 0.0
    %620 = vmatprep.subr.mxu0 0.0
    %621 = vmatpush1.xpose.msra.mxu0 0.0
    %622 = vmatprep.subr.mxu0 0.0
    %623 = vmatpush1.xpose.msra.mxu0 0.0
    %624 = vmatprep.subr.mxu0 0.0
    %625 = vmatpush1.xpose.msra.mxu0 0.0
    %626 = vmatprep.subr.mxu0 0.0
    %627 = vmatpush1.xpose.msra.mxu0 0.0
    %628 = vmatprep.subr.mxu0 0.0
    %629 = vmatpush1.xpose.msra.mxu0 0.0
    %630 = vmatprep.subr.mxu0 0.0
    %631 = vmatpush1.xpose.msra.mxu0 0.0
    %632 = vmatprep.subr.mxu0 0.0
    %633 = vmatpush1.xpose.msra.mxu0 0.0
    %634 = vmatprep.subr.mxu0 0.0
    %635 = vmatpush1.xpose.msra.mxu0 0.0
    %636 = vmatprep.subr.mxu0 0.0
    %637 = vmatpush1.xpose.msra.mxu0 0.0
    %638 = vmatprep.subr.mxu0 0.0
    %639 = vmatpush1.xpose.msra.mxu0 %v606
    %640 = vmatprep.subr.mxu0 0.0
    %641 = vmatpush2.xpose.msra.mxu0 0.0
    %642 = vmatprep.subr.mxu0 0.0
    %643 = vmatpush2.xpose.msra.mxu0 0.0
    %644 = vmatprep.subr.mxu0 0.0
    %645 = vmatpush2.xpose.msra.mxu0 0.0
    %646 = vmatprep.subr.mxu0 0.0
    %647 = vmatpush2.xpose.msra.mxu0 0.0
    %648 = vmatprep.subr.mxu0 0.0
    %649 = vmatpush2.xpose.msra.mxu0 0.0
    %650 = vmatprep.subr.mxu0 0.0
    %651 = vmatpush2.xpose.msra.mxu0 0.0
    %652 = vmatprep.subr.mxu0 0.0
    %653 = vmatpush2.xpose.msra.mxu0 0.0
    %654 = vmatprep.subr.mxu0 0.0
    %655 = vmatpush2.xpose.msra.mxu0 0.0
    %656 = vmatprep.subr.mxu0 0.0
    %657 = vmatpush2.xpose.msra.mxu0 0.0
    %658 = vmatprep.subr.mxu0 0.0
    %659 = vmatpush2.xpose.msra.mxu0 0.0
    %660 = vmatprep.subr.mxu0 0.0
    %661 = vmatpush2.xpose.msra.mxu0 0.0
    %662 = vmatprep.subr.mxu0 0.0
    %663 = vmatpush2.xpose.msra.mxu0 0.0
    %664 = vmatprep.subr.mxu0 0.0
    %665 = vmatpush2.xpose.msra.mxu0 0.0
    %666 = vmatprep.subr.mxu0 0.0
    %667 = vmatpush2.xpose.msra.mxu0 0.0
    %668 = vmatprep.subr.mxu0 0.0
    %669 = vmatpush2.xpose.msra.mxu0 0.0
    %670 = vmatprep.subr.mxu0 0.0
    %671 = vmatpush2.xpose.msra.mxu0 0.0
    %672 = vmatprep.mubr.f32.mxu0 0.0
    %673 = vmatmul.mubr.f32.gmra.mxu0 %v604
    %v674 = vpop.f32.mrf.mxu0
    %v675 = vadd.f32 %v261, %v674
    %v676 = vpop.f32.mrf.mxu0
    %677 = vdwg.mxu0
    %678 = vrot.lane.b32.xlu0 %v237, 120
    %v679 = vpop.permute.xlu0 %678
    %680 = vrot.lane.b32.xlu0 %v247, 88
    %v681 = vpop.permute.xlu0 %680
    %v682 = vsel %vm33, %v679, 0
    %v684 = vsel %vm33, %v681, 0
    %686 = vmatprep.subr.mxu0 0.0
    %687 = vmatpush1.xpose.msra.mxu0 0.0
    %688 = vmatprep.subr.mxu0 0.0
    %689 = vmatpush1.xpose.msra.mxu0 0.0
    %690 = vmatprep.subr.mxu0 0.0
    %691 = vmatpush1.xpose.msra.mxu0 0.0
    %692 = vmatprep.subr.mxu0 0.0
    %693 = vmatpush1.xpose.msra.mxu0 0.0
    %694 = vmatprep.subr.mxu0 0.0
    %695 = vmatpush1.xpose.msra.mxu0 0.0
    %696 = vmatprep.subr.mxu0 0.0
    %697 = vmatpush1.xpose.msra.mxu0 0.0
    %698 = vmatprep.subr.mxu0 0.0
    %699 = vmatpush1.xpose.msra.mxu0 0.0
    %700 = vmatprep.subr.mxu0 0.0
    %701 = vmatpush1.xpose.msra.mxu0 0.0
    %702 = vmatprep.subr.mxu0 0.0
    %703 = vmatpush1.xpose.msra.mxu0 0.0
    %704 = vmatprep.subr.mxu0 0.0
    %705 = vmatpush1.xpose.msra.mxu0 0.0
    %706 = vmatprep.subr.mxu0 0.0
    %707 = vmatpush1.xpose.msra.mxu0 0.0
    %708 = vmatprep.subr.mxu0 0.0
    %709 = vmatpush1.xpose.msra.mxu0 0.0
    %710 = vmatprep.subr.mxu0 0.0
    %711 = vmatpush1.xpose.msra.mxu0 0.0
    %712 = vmatprep.subr.mxu0 0.0
    %713 = vmatpush1.xpose.msra.mxu0 0.0
    %714 = vmatprep.subr.mxu0 0.0
    %715 = vmatpush1.xpose.msra.mxu0 0.0
    %716 = vmatprep.subr.mxu0 0.0
    %717 = vmatpush1.xpose.msra.mxu0 %v684
    %718 = vmatprep.subr.mxu0 0.0
    %719 = vmatpush2.xpose.msra.mxu0 0.0
    %720 = vmatprep.subr.mxu0 0.0
    %721 = vmatpush2.xpose.msra.mxu0 0.0
    %722 = vmatprep.subr.mxu0 0.0
    %723 = vmatpush2.xpose.msra.mxu0 0.0
    %724 = vmatprep.subr.mxu0 0.0
    %725 = vmatpush2.xpose.msra.mxu0 0.0
    %726 = vmatprep.subr.mxu0 0.0
    %727 = vmatpush2.xpose.msra.mxu0 0.0
    %728 = vmatprep.subr.mxu0 0.0
    %729 = vmatpush2.xpose.msra.mxu0 0.0
    %730 = vmatprep.subr.mxu0 0.0
    %731 = vmatpush2.xpose.msra.mxu0 0.0
    %732 = vmatprep.subr.mxu0 0.0
    %733 = vmatpush2.xpose.msra.mxu0 0.0
    %734 = vmatprep.subr.mxu0 0.0
    %735 = vmatpush2.xpose.msra.mxu0 0.0
    %736 = vmatprep.subr.mxu0 0.0
    %737 = vmatpush2.xpose.msra.mxu0 0.0
    %738 = vmatprep.subr.mxu0 0.0
    %739 = vmatpush2.xpose.msra.mxu0 0.0
    %740 = vmatprep.subr.mxu0 0.0
    %741 = vmatpush2.xpose.msra.mxu0 0.0
    %742 = vmatprep.subr.mxu0 0.0
    %743 = vmatpush2.xpose.msra.mxu0 0.0
    %744 = vmatprep.subr.mxu0 0.0
    %745 = vmatpush2.xpose.msra.mxu0 0.0
    %746 = vmatprep.subr.mxu0 0.0
    %747 = vmatpush2.xpose.msra.mxu0 0.0
    %748 = vmatprep.subr.mxu0 0.0
    %749 = vmatpush2.xpose.msra.mxu0 0.0
    %750 = vmatprep.mubr.f32.mxu0 0.0
    %751 = vmatmul.mubr.f32.gmra.mxu0 %v682
    %v752 = vpop.f32.mrf.mxu0
    %v753 = vadd.f32 %v265, %v752
    %v754 = vpop.f32.mrf.mxu0
    %755 = vdwg.mxu0
    %v756 = vsel %vm33, %v675, -inf
    %757 = vmax.xlane.f32.xlu0 %v756
    %v758 = vpop.xlane.xlu0 %757
    %v759 = vsel %vm33, %v753, -inf
    %760 = vmax.xlane.f32.xlu0 %v759
    %v761 = vpop.xlane.xlu0 %760
    %v762 = vsub.f32 %v675, %v758
    %v763 = vsub.f32 %v753, %v761
    %v764 = vmul.f32 %v762, 1.442695
    %v765 = vpow.pop %v764
    %v766 = vmul.f32 %v763, 1.442695
    %v767 = vpow.pop %v766
    %v768 = vsel %vm33, %v765, 0.0
    %769 = vadd.xlane.f32.xlu0 %v768
    %v770 = vpop.xlane.xlu0 %769
    %v771 = vsel %vm33, %v767, 0.0
    %772 = vadd.xlane.f32.xlu0 %v771
    %v773 = vpop.xlane.xlu0 %772
    %v774 = vrcp.pop %v770
    %v775 = vrcp.pop %v773
    %v776 = vmul.f32 %v765, %v774
    %v777 = vmul.f32 %v767, %v775
    %778 = vrot.lane.b32.xlu0 %v256, 56
    %v779 = vpop.permute.xlu0 %778
    %v782 = vsel %vm33, %v776, 0
    %784 = vmatprep.subr.mxu0 0.0
    %785 = vmatpush1.msra.mxu0 0.0
    %786 = vmatprep.subr.mxu0 0.0
    %787 = vmatpush1.msra.mxu0 0.0
    %788 = vmatprep.subr.mxu0 0.0
    %789 = vmatpush1.msra.mxu0 0.0
    %790 = vmatprep.subr.mxu0 0.0
    %791 = vmatpush1.msra.mxu0 0.0
    %792 = vmatprep.subr.mxu0 0.0
    %793 = vmatpush1.msra.mxu0 0.0
    %794 = vmatprep.subr.mxu0 0.0
    %795 = vmatpush1.msra.mxu0 0.0
    %796 = vmatprep.subr.mxu0 0.0
    %797 = vmatpush1.msra.mxu0 0.0
    %798 = vmatprep.subr.mxu0 0.0
    %799 = vmatpush1.msra.mxu0 0.0
    %800 = vmatprep.subr.mxu0 0.0
    %801 = vmatpush1.msra.mxu0 0.0
    %802 = vmatprep.subr.mxu0 0.0
    %803 = vmatpush1.msra.mxu0 0.0
    %804 = vmatprep.subr.mxu0 0.0
    %805 = vmatpush1.msra.mxu0 0.0
    %806 = vmatprep.subr.mxu0 0.0
    %807 = vmatpush1.msra.mxu0 0.0
    %808 = vmatprep.subr.mxu0 0.0
    %809 = vmatpush1.msra.mxu0 0.0
    %810 = vmatprep.subr.mxu0 0.0
    %811 = vmatpush1.msra.mxu0 0.0
    %812 = vmatprep.subr.mxu0 0.0
    %813 = vmatpush1.msra.mxu0 0.0
    %814 = vmatprep.subr.mxu0 0.0
    %815 = vmatpush1.msra.mxu0 %v779
    %816 = vmatprep.subr.mxu0 0.0
    %817 = vmatpush2.msra.mxu0 0.0
    %818 = vmatprep.subr.mxu0 0.0
    %819 = vmatpush2.msra.mxu0 0.0
    %820 = vmatprep.subr.mxu0 0.0
    %821 = vmatpush2.msra.mxu0 0.0
    %822 = vmatprep.subr.mxu0 0.0
    %823 = vmatpush2.msra.mxu0 0.0
    %824 = vmatprep.subr.mxu0 0.0
    %825 = vmatpush2.msra.mxu0 0.0
    %826 = vmatprep.subr.mxu0 0.0
    %827 = vmatpush2.msra.mxu0 0.0
    %828 = vmatprep.subr.mxu0 0.0
    %829 = vmatpush2.msra.mxu0 0.0
    %830 = vmatprep.subr.mxu0 0.0
    %831 = vmatpush2.msra.mxu0 0.0
    %832 = vmatprep.subr.mxu0 0.0
    %833 = vmatpush2.msra.mxu0 0.0
    %834 = vmatprep.subr.mxu0 0.0
    %835 = vmatpush2.msra.mxu0 0.0
    %836 = vmatprep.subr.mxu0 0.0
    %837 = vmatpush2.msra.mxu0 0.0
    %838 = vmatprep.subr.mxu0 0.0
    %839 = vmatpush2.msra.mxu0 0.0
    %840 = vmatprep.subr.mxu0 0.0
    %841 = vmatpush2.msra.mxu0 0.0
    %842 = vmatprep.subr.mxu0 0.0
    %843 = vmatpush2.msra.mxu0 0.0
    %844 = vmatprep.subr.mxu0 0.0
    %845 = vmatpush2.msra.mxu0 0.0
    %846 = vmatprep.subr.mxu0 0.0
    %847 = vmatpush2.msra.mxu0 0.0
    %848 = vmatprep.mubr.f32.mxu0 0.0
    %849 = vmatmul.mubr.f32.gmra.mxu0 %v782
    %v850 = vpop.f32.mrf.mxu0
    %v851 = vadd.f32 0.0, %v850
    %v852 = vpop.f32.mrf.mxu0
    %853 = vdwg.mxu0
    %854 = vrot.lane.b32.xlu0 %v257, 56
    %v855 = vpop.permute.xlu0 %854
    %v858 = vsel %vm33, %v777, 0
    %860 = vmatprep.subr.mxu0 0.0
    %861 = vmatpush1.msra.mxu0 0.0
    %862 = vmatprep.subr.mxu0 0.0
    %863 = vmatpush1.msra.mxu0 0.0
    %864 = vmatprep.subr.mxu0 0.0
    %865 = vmatpush1.msra.mxu0 0.0
    %866 = vmatprep.subr.mxu0 0.0
    %867 = vmatpush1.msra.mxu0 0.0
    %868 = vmatprep.subr.mxu0 0.0
    %869 = vmatpush1.msra.mxu0 0.0
    %870 = vmatprep.subr.mxu0 0.0
    %871 = vmatpush1.msra.mxu0 0.0
    %872 = vmatprep.subr.mxu0 0.0
    %873 = vmatpush1.msra.mxu0 0.0
    %874 = vmatprep.subr.mxu0 0.0
    %875 = vmatpush1.msra.mxu0 0.0
    %876 = vmatprep.subr.mxu0 0.0
    %877 = vmatpush1.msra.mxu0 0.0
    %878 = vmatprep.subr.mxu0 0.0
    %879 = vmatpush1.msra.mxu0 0.0
    %880 = vmatprep.subr.mxu0 0.0
    %881 = vmatpush1.msra.mxu0 0.0
    %882 = vmatprep.subr.mxu0 0.0
    %883 = vmatpush1.msra.mxu0 0.0
    %884 = vmatprep.subr.mxu0 0.0
    %885 = vmatpush1.msra.mxu0 0.0
    %886 = vmatprep.subr.mxu0 0.0
    %887 = vmatpush1.msra.mxu0 0.0
    %888 = vmatprep.subr.mxu0 0.0
    %889 = vmatpush1.msra.mxu0 0.0
    %890 = vmatprep.subr.mxu0 0.0
    %891 = vmatpush1.msra.mxu0 %v855
    %892 = vmatprep.subr.mxu0 0.0
    %893 = vmatpush2.msra.mxu0 0.0
    %894 = vmatprep.subr.mxu0 0.0
    %895 = vmatpush2.msra.mxu0 0.0
    %896 = vmatprep.subr.mxu0 0.0
    %897 = vmatpush2.msra.mxu0 0.0
    %898 = vmatprep.subr.mxu0 0.0
    %899 = vmatpush2.msra.mxu0 0.0
    %900 = vmatprep.subr.mxu0 0.0
    %901 = vmatpush2.msra.mxu0 0.0
    %902 = vmatprep.subr.mxu0 0.0
    %903 = vmatpush2.msra.mxu0 0.0
    %904 = vmatprep.subr.mxu0 0.0
    %905 = vmatpush2.msra.mxu0 0.0
    %906 = vmatprep.subr.mxu0 0.0
    %907 = vmatpush2.msra.mxu0 0.0
    %908 = vmatprep.subr.mxu0 0.0
    %909 = vmatpush2.msra.mxu0 0.0
    %910 = vmatprep.subr.mxu0 0.0
    %911 = vmatpush2.msra.mxu0 0.0
    %912 = vmatprep.subr.mxu0 0.0
    %913 = vmatpush2.msra.mxu0 0.0
    %914 = vmatprep.subr.mxu0 0.0
    %915 = vmatpush2.msra.mxu0 0.0
    %916 = vmatprep.subr.mxu0 0.0
    %917 = vmatpush2.msra.mxu0 0.0
    %918 = vmatprep.subr.mxu0 0.0
    %919 = vmatpush2.msra.mxu0 0.0
    %920 = vmatprep.subr.mxu0 0.0
    %921 = vmatpush2.msra.mxu0 0.0
    %922 = vmatprep.subr.mxu0 0.0
    %923 = vmatpush2.msra.mxu0 0.0
    %924 = vmatprep.mubr.f32.mxu0 0.0
    %925 = vmatmul.mubr.f32.gmra.mxu0 %v858
    %v926 = vpop.f32.mrf.mxu0
    %v927 = vadd.f32 0.0, %v926
    %v928 = vpop.f32.mrf.mxu0
    %929 = vdwg.mxu0
    %930 = vrot.lane.b32.xlu0 %v236, 112
    %v931 = vpop.permute.xlu0 %930
    %932 = vrot.lane.b32.xlu0 %v246, 80
    %v933 = vpop.permute.xlu0 %932
    %v934 = vsel %vm33, %v931, 0
    %v936 = vsel %vm33, %v933, 0
    %938 = vmatprep.subr.mxu0 0.0
    %939 = vmatpush1.xpose.msra.mxu0 0.0
    %940 = vmatprep.subr.mxu0 0.0
    %941 = vmatpush1.xpose.msra.mxu0 0.0
    %942 = vmatprep.subr.mxu0 0.0
    %943 = vmatpush1.xpose.msra.mxu0 0.0
    %944 = vmatprep.subr.mxu0 0.0
    %945 = vmatpush1.xpose.msra.mxu0 0.0
    %946 = vmatprep.subr.mxu0 0.0
    %947 = vmatpush1.xpose.msra.mxu0 0.0
    %948 = vmatprep.subr.mxu0 0.0
    %949 = vmatpush1.xpose.msra.mxu0 0.0
    %950 = vmatprep.subr.mxu0 0.0
    %951 = vmatpush1.xpose.msra.mxu0 0.0
    %952 = vmatprep.subr.mxu0 0.0
    %953 = vmatpush1.xpose.msra.mxu0 0.0
    %954 = vmatprep.subr.mxu0 0.0
    %955 = vmatpush1.xpose.msra.mxu0 0.0
    %956 = vmatprep.subr.mxu0 0.0
    %957 = vmatpush1.xpose.msra.mxu0 0.0
    %958 = vmatprep.subr.mxu0 0.0
    %959 = vmatpush1.xpose.msra.mxu0 0.0
    %960 = vmatprep.subr.mxu0 0.0
    %961 = vmatpush1.xpose.msra.mxu0 0.0
    %962 = vmatprep.subr.mxu0 0.0
    %963 = vmatpush1.xpose.msra.mxu0 0.0
    %964 = vmatprep.subr.mxu0 0.0
    %965 = vmatpush1.xpose.msra.mxu0 0.0
    %966 = vmatprep.subr.mxu0 0.0
    %967 = vmatpush1.xpose.msra.mxu0 0.0
    %968 = vmatprep.subr.mxu0 0.0
    %969 = vmatpush1.xpose.msra.mxu0 %v936
    %970 = vmatprep.subr.mxu0 0.0
    %971 = vmatpush2.xpose.msra.mxu0 0.0
    %972 = vmatprep.subr.mxu0 0.0
    %973 = vmatpush2.xpose.msra.mxu0 0.0
    %974 = vmatprep.subr.mxu0 0.0
    %975 = vmatpush2.xpose.msra.mxu0 0.0
    %976 = vmatprep.subr.mxu0 0.0
    %977 = vmatpush2.xpose.msra.mxu0 0.0
    %978 = vmatprep.subr.mxu0 0.0
    %979 = vmatpush2.xpose.msra.mxu0 0.0
    %980 = vmatprep.subr.mxu0 0.0
    %981 = vmatpush2.xpose.msra.mxu0 0.0
    %982 = vmatprep.subr.mxu0 0.0
    %983 = vmatpush2.xpose.msra.mxu0 0.0
    %984 = vmatprep.subr.mxu0 0.0
    %985 = vmatpush2.xpose.msra.mxu0 0.0
    %986 = vmatprep.subr.mxu0 0.0
    %987 = vmatpush2.xpose.msra.mxu0 0.0
    %988 = vmatprep.subr.mxu0 0.0
    %989 = vmatpush2.xpose.msra.mxu0 0.0
    %990 = vmatprep.subr.mxu0 0.0
    %991 = vmatpush2.xpose.msra.mxu0 0.0
    %992 = vmatprep.subr.mxu0 0.0
    %993 = vmatpush2.xpose.msra.mxu0 0.0
    %994 = vmatprep.subr.mxu0 0.0
    %995 = vmatpush2.xpose.msra.mxu0 0.0
    %996 = vmatprep.subr.mxu0 0.0
    %997 = vmatpush2.xpose.msra.mxu0 0.0
    %998 = vmatprep.subr.mxu0 0.0
    %999 = vmatpush2.xpose.msra.mxu0 0.0
    %1000 = vmatprep.subr.mxu0 0.0
    %1001 = vmatpush2.xpose.msra.mxu0 0.0
    %1002 = vmatprep.mubr.f32.mxu0 0.0
    %1003 = vmatmul.mubr.f32.gmra.mxu0 %v934
    %v1004 = vpop.f32.mrf.mxu0
    %v1005 = vadd.f32 %v261, %v1004
    %v1006 = vpop.f32.mrf.mxu0
    %1007 = vdwg.mxu0
    %1008 = vrot.lane.b32.xlu0 %v237, 112
    %v1009 = vpop.permute.xlu0 %1008
    %1010 = vrot.lane.b32.xlu0 %v247, 80
    %v1011 = vpop.permute.xlu0 %1010
    %v1012 = vsel %vm33, %v1009, 0
    %v1014 = vsel %vm33, %v1011, 0
    %1016 = vmatprep.subr.mxu0 0.0
    %1017 = vmatpush1.xpose.msra.mxu0 0.0
    %1018 = vmatprep.subr.mxu0 0.0
    %1019 = vmatpush1.xpose.msra.mxu0 0.0
    %1020 = vmatprep.subr.mxu0 0.0
    %1021 = vmatpush1.xpose.msra.mxu0 0.0
    %1022 = vmatprep.subr.mxu0 0.0
    %1023 = vmatpush1.xpose.msra.mxu0 0.0
    %1024 = vmatprep.subr.mxu0 0.0
    %1025 = vmatpush1.xpose.msra.mxu0 0.0
    %1026 = vmatprep.subr.mxu0 0.0
    %1027 = vmatpush1.xpose.msra.mxu0 0.0
    %1028 = vmatprep.subr.mxu0 0.0
    %1029 = vmatpush1.xpose.msra.mxu0 0.0
    %1030 = vmatprep.subr.mxu0 0.0
    %1031 = vmatpush1.xpose.msra.mxu0 0.0
    %1032 = vmatprep.subr.mxu0 0.0
    %1033 = vmatpush1.xpose.msra.mxu0 0.0
    %1034 = vmatprep.subr.mxu0 0.0
    %1035 = vmatpush1.xpose.msra.mxu0 0.0
    %1036 = vmatprep.subr.mxu0 0.0
    %1037 = vmatpush1.xpose.msra.mxu0 0.0
    %1038 = vmatprep.subr.mxu0 0.0
    %1039 = vmatpush1.xpose.msra.mxu0 0.0
    %1040 = vmatprep.subr.mxu0 0.0
    %1041 = vmatpush1.xpose.msra.mxu0 0.0
    %1042 = vmatprep.subr.mxu0 0.0
    %1043 = vmatpush1.xpose.msra.mxu0 0.0
    %1044 = vmatprep.subr.mxu0 0.0
    %1045 = vmatpush1.xpose.msra.mxu0 0.0
    %1046 = vmatprep.subr.mxu0 0.0
    %1047 = vmatpush1.xpose.msra.mxu0 %v1014
    %1048 = vmatprep.subr.mxu0 0.0
    %1049 = vmatpush2.xpose.msra.mxu0 0.0
    %1050 = vmatprep.subr.mxu0 0.0
    %1051 = vmatpush2.xpose.msra.mxu0 0.0
    %1052 = vmatprep.subr.mxu0 0.0
    %1053 = vmatpush2.xpose.msra.mxu0 0.0
    %1054 = vmatprep.subr.mxu0 0.0
    %1055 = vmatpush2.xpose.msra.mxu0 0.0
    %1056 = vmatprep.subr.mxu0 0.0
    %1057 = vmatpush2.xpose.msra.mxu0 0.0
    %1058 = vmatprep.subr.mxu0 0.0
    %1059 = vmatpush2.xpose.msra.mxu0 0.0
    %1060 = vmatprep.subr.mxu0 0.0
    %1061 = vmatpush2.xpose.msra.mxu0 0.0
    %1062 = vmatprep.subr.mxu0 0.0
    %1063 = vmatpush2.xpose.msra.mxu0 0.0
    %1064 = vmatprep.subr.mxu0 0.0
    %1065 = vmatpush2.xpose.msra.mxu0 0.0
    %1066 = vmatprep.subr.mxu0 0.0
    %1067 = vmatpush2.xpose.msra.mxu0 0.0
    %1068 = vmatprep.subr.mxu0 0.0
    %1069 = vmatpush2.xpose.msra.mxu0 0.0
    %1070 = vmatprep.subr.mxu0 0.0
    %1071 = vmatpush2.xpose.msra.mxu0 0.0
    %1072 = vmatprep.subr.mxu0 0.0
    %1073 = vmatpush2.xpose.msra.mxu0 0.0
    %1074 = vmatprep.subr.mxu0 0.0
    %1075 = vmatpush2.xpose.msra.mxu0 0.0
    %1076 = vmatprep.subr.mxu0 0.0
    %1077 = vmatpush2.xpose.msra.mxu0 0.0
    %1078 = vmatprep.subr.mxu0 0.0
    %1079 = vmatpush2.xpose.msra.mxu0 0.0
    %1080 = vmatprep.mubr.f32.mxu0 0.0
    %1081 = vmatmul.mubr.f32.gmra.mxu0 %v1012
    %v1082 = vpop.f32.mrf.mxu0
    %v1083 = vadd.f32 %v265, %v1082
    %v1084 = vpop.f32.mrf.mxu0
    %1085 = vdwg.mxu0
    %v1086 = vsel %vm33, %v1005, -inf
    %1087 = vmax.xlane.f32.xlu0 %v1086
    %v1088 = vpop.xlane.xlu0 %1087
    %v1089 = vsel %vm33, %v1083, -inf
    %1090 = vmax.xlane.f32.xlu0 %v1089
    %v1091 = vpop.xlane.xlu0 %1090
    %v1092 = vsub.f32 %v1005, %v1088
    %v1093 = vsub.f32 %v1083, %v1091
    %v1094 = vmul.f32 %v1092, 1.442695
    %v1095 = vpow.pop %v1094
    %v1096 = vmul.f32 %v1093, 1.442695
    %v1097 = vpow.pop %v1096
    %v1098 = vsel %vm33, %v1095, 0.0
    %1099 = vadd.xlane.f32.xlu0 %v1098
    %v1100 = vpop.xlane.xlu0 %1099
    %v1101 = vsel %vm33, %v1097, 0.0
    %1102 = vadd.xlane.f32.xlu0 %v1101
    %v1103 = vpop.xlane.xlu0 %1102
    %v1104 = vrcp.pop %v1100
    %v1105 = vrcp.pop %v1103
    %v1106 = vmul.f32 %v1095, %v1104
    %v1107 = vmul.f32 %v1097, %v1105
    %1108 = vrot.lane.b32.xlu0 %v256, 48
    %v1109 = vpop.permute.xlu0 %1108
    %v1112 = vsel %vm33, %v1106, 0
    %1114 = vmatprep.subr.mxu0 0.0
    %1115 = vmatpush1.msra.mxu0 0.0
    %1116 = vmatprep.subr.mxu0 0.0
    %1117 = vmatpush1.msra.mxu0 0.0
    %1118 = vmatprep.subr.mxu0 0.0
    %1119 = vmatpush1.msra.mxu0 0.0
    %1120 = vmatprep.subr.mxu0 0.0
    %1121 = vmatpush1.msra.mxu0 0.0
    %1122 = vmatprep.subr.mxu0 0.0
    %1123 = vmatpush1.msra.mxu0 0.0
    %1124 = vmatprep.subr.mxu0 0.0
    %1125 = vmatpush1.msra.mxu0 0.0
    %1126 = vmatprep.subr.mxu0 0.0
    %1127 = vmatpush1.msra.mxu0 0.0
    %1128 = vmatprep.subr.mxu0 0.0
    %1129 = vmatpush1.msra.mxu0 0.0
    %1130 = vmatprep.subr.mxu0 0.0
    %1131 = vmatpush1.msra.mxu0 0.0
    %1132 = vmatprep.subr.mxu0 0.0
    %1133 = vmatpush1.msra.mxu0 0.0
    %1134 = vmatprep.subr.mxu0 0.0
    %1135 = vmatpush1.msra.mxu0 0.0
    %1136 = vmatprep.subr.mxu0 0.0
    %1137 = vmatpush1.msra.mxu0 0.0
    %1138 = vmatprep.subr.mxu0 0.0
    %1139 = vmatpush1.msra.mxu0 0.0
    %1140 = vmatprep.subr.mxu0 0.0
    %1141 = vmatpush1.msra.mxu0 0.0
    %1142 = vmatprep.subr.mxu0 0.0
    %1143 = vmatpush1.msra.mxu0 0.0
    %1144 = vmatprep.subr.mxu0 0.0
    %1145 = vmatpush1.msra.mxu0 %v1109
    %1146 = vmatprep.subr.mxu0 0.0
    %1147 = vmatpush2.msra.mxu0 0.0
    %1148 = vmatprep.subr.mxu0 0.0
    %1149 = vmatpush2.msra.mxu0 0.0
    %1150 = vmatprep.subr.mxu0 0.0
    %1151 = vmatpush2.msra.mxu0 0.0
    %1152 = vmatprep.subr.mxu0 0.0
    %1153 = vmatpush2.msra.mxu0 0.0
    %1154 = vmatprep.subr.mxu0 0.0
    %1155 = vmatpush2.msra.mxu0 0.0
    %1156 = vmatprep.subr.mxu0 0.0
    %1157 = vmatpush2.msra.mxu0 0.0
    %1158 = vmatprep.subr.mxu0 0.0
    %1159 = vmatpush2.msra.mxu0 0.0
    %1160 = vmatprep.subr.mxu0 0.0
    %1161 = vmatpush2.msra.mxu0 0.0
    %1162 = vmatprep.subr.mxu0 0.0
    %1163 = vmatpush2.msra.mxu0 0.0
    %1164 = vmatprep.subr.mxu0 0.0
    %1165 = vmatpush2.msra.mxu0 0.0
    %1166 = vmatprep.subr.mxu0 0.0
    %1167 = vmatpush2.msra.mxu0 0.0
    %1168 = vmatprep.subr.mxu0 0.0
    %1169 = vmatpush2.msra.mxu0 0.0
    %1170 = vmatprep.subr.mxu0 0.0
    %1171 = vmatpush2.msra.mxu0 0.0
    %1172 = vmatprep.subr.mxu0 0.0
    %1173 = vmatpush2.msra.mxu0 0.0
    %1174 = vmatprep.subr.mxu0 0.0
    %1175 = vmatpush2.msra.mxu0 0.0
    %1176 = vmatprep.subr.mxu0 0.0
    %1177 = vmatpush2.msra.mxu0 0.0
    %1178 = vmatprep.mubr.f32.mxu0 0.0
    %1179 = vmatmul.mubr.f32.gmra.mxu0 %v1112
    %v1180 = vpop.f32.mrf.mxu0
    %v1181 = vadd.f32 0.0, %v1180
    %v1182 = vpop.f32.mrf.mxu0
    %1183 = vdwg.mxu0
    %1184 = vrot.lane.b32.xlu0 %v257, 48
    %v1185 = vpop.permute.xlu0 %1184
    %v1188 = vsel %vm33, %v1107, 0
    %1190 = vmatprep.subr.mxu0 0.0
    %1191 = vmatpush1.msra.mxu0 0.0
    %1192 = vmatprep.subr.mxu0 0.0
    %1193 = vmatpush1.msra.mxu0 0.0
    %1194 = vmatprep.subr.mxu0 0.0
    %1195 = vmatpush1.msra.mxu0 0.0
    %1196 = vmatprep.subr.mxu0 0.0
    %1197 = vmatpush1.msra.mxu0 0.0
    %1198 = vmatprep.subr.mxu0 0.0
    %1199 = vmatpush1.msra.mxu0 0.0
    %1200 = vmatprep.subr.mxu0 0.0
    %1201 = vmatpush1.msra.mxu0 0.0
    %1202 = vmatprep.subr.mxu0 0.0
    %1203 = vmatpush1.msra.mxu0 0.0
    %1204 = vmatprep.subr.mxu0 0.0
    %1205 = vmatpush1.msra.mxu0 0.0
    %1206 = vmatprep.subr.mxu0 0.0
    %1207 = vmatpush1.msra.mxu0 0.0
    %1208 = vmatprep.subr.mxu0 0.0
    %1209 = vmatpush1.msra.mxu0 0.0
    %1210 = vmatprep.subr.mxu0 0.0
    %1211 = vmatpush1.msra.mxu0 0.0
    %1212 = vmatprep.subr.mxu0 0.0
    %1213 = vmatpush1.msra.mxu0 0.0
    %1214 = vmatprep.subr.mxu0 0.0
    %1215 = vmatpush1.msra.mxu0 0.0
    %1216 = vmatprep.subr.mxu0 0.0
    %1217 = vmatpush1.msra.mxu0 0.0
    %1218 = vmatprep.subr.mxu0 0.0
    %1219 = vmatpush1.msra.mxu0 0.0
    %1220 = vmatprep.subr.mxu0 0.0
    %1221 = vmatpush1.msra.mxu0 %v1185
    %1222 = vmatprep.subr.mxu0 0.0
    %1223 = vmatpush2.msra.mxu0 0.0
    %1224 = vmatprep.subr.mxu0 0.0
    %1225 = vmatpush2.msra.mxu0 0.0
    %1226 = vmatprep.subr.mxu0 0.0
    %1227 = vmatpush2.msra.mxu0 0.0
    %1228 = vmatprep.subr.mxu0 0.0
    %1229 = vmatpush2.msra.mxu0 0.0
    %1230 = vmatprep.subr.mxu0 0.0
    %1231 = vmatpush2.msra.mxu0 0.0
    %1232 = vmatprep.subr.mxu0 0.0
    %1233 = vmatpush2.msra.mxu0 0.0
    %1234 = vmatprep.subr.mxu0 0.0
    %1235 = vmatpush2.msra.mxu0 0.0
    %1236 = vmatprep.subr.mxu0 0.0
    %1237 = vmatpush2.msra.mxu0 0.0
    %1238 = vmatprep.subr.mxu0 0.0
    %1239 = vmatpush2.msra.mxu0 0.0
    %1240 = vmatprep.subr.mxu0 0.0
    %1241 = vmatpush2.msra.mxu0 0.0
    %1242 = vmatprep.subr.mxu0 0.0
    %1243 = vmatpush2.msra.mxu0 0.0
    %1244 = vmatprep.subr.mxu0 0.0
    %1245 = vmatpush2.msra.mxu0 0.0
    %1246 = vmatprep.subr.mxu0 0.0
    %1247 = vmatpush2.msra.mxu0 0.0
    %1248 = vmatprep.subr.mxu0 0.0
    %1249 = vmatpush2.msra.mxu0 0.0
    %1250 = vmatprep.subr.mxu0 0.0
    %1251 = vmatpush2.msra.mxu0 0.0
    %1252 = vmatprep.subr.mxu0 0.0
    %1253 = vmatpush2.msra.mxu0 0.0
    %1254 = vmatprep.mubr.f32.mxu0 0.0
    %1255 = vmatmul.mubr.f32.gmra.mxu0 %v1188
    %v1256 = vpop.f32.mrf.mxu0
    %v1257 = vadd.f32 0.0, %v1256
    %v1258 = vpop.f32.mrf.mxu0
    %1259 = vdwg.mxu0
    %1260 = vrot.lane.b32.xlu0 %v236, 104
    %v1261 = vpop.permute.xlu0 %1260
    %1262 = vrot.lane.b32.xlu0 %v246, 72
    %v1263 = vpop.permute.xlu0 %1262
    %v1264 = vsel %vm33, %v1261, 0
    %v1266 = vsel %vm33, %v1263, 0
    %1268 = vmatprep.subr.mxu0 0.0
    %1269 = vmatpush1.xpose.msra.mxu0 0.0
    %1270 = vmatprep.subr.mxu0 0.0
    %1271 = vmatpush1.xpose.msra.mxu0 0.0
    %1272 = vmatprep.subr.mxu0 0.0
    %1273 = vmatpush1.xpose.msra.mxu0 0.0
    %1274 = vmatprep.subr.mxu0 0.0
    %1275 = vmatpush1.xpose.msra.mxu0 0.0
    %1276 = vmatprep.subr.mxu0 0.0
    %1277 = vmatpush1.xpose.msra.mxu0 0.0
    %1278 = vmatprep.subr.mxu0 0.0
    %1279 = vmatpush1.xpose.msra.mxu0 0.0
    %1280 = vmatprep.subr.mxu0 0.0
    %1281 = vmatpush1.xpose.msra.mxu0 0.0
    %1282 = vmatprep.subr.mxu0 0.0
    %1283 = vmatpush1.xpose.msra.mxu0 0.0
    %1284 = vmatprep.subr.mxu0 0.0
    %1285 = vmatpush1.xpose.msra.mxu0 0.0
    %1286 = vmatprep.subr.mxu0 0.0
    %1287 = vmatpush1.xpose.msra.mxu0 0.0
    %1288 = vmatprep.subr.mxu0 0.0
    %1289 = vmatpush1.xpose.msra.mxu0 0.0
    %1290 = vmatprep.subr.mxu0 0.0
    %1291 = vmatpush1.xpose.msra.mxu0 0.0
    %1292 = vmatprep.subr.mxu0 0.0
    %1293 = vmatpush1.xpose.msra.mxu0 0.0
    %1294 = vmatprep.subr.mxu0 0.0
    %1295 = vmatpush1.xpose.msra.mxu0 0.0
    %1296 = vmatprep.subr.mxu0 0.0
    %1297 = vmatpush1.xpose.msra.mxu0 0.0
    %1298 = vmatprep.subr.mxu0 0.0
    %1299 = vmatpush1.xpose.msra.mxu0 %v1266
    %1300 = vmatprep.subr.mxu0 0.0
    %1301 = vmatpush2.xpose.msra.mxu0 0.0
    %1302 = vmatprep.subr.mxu0 0.0
    %1303 = vmatpush2.xpose.msra.mxu0 0.0
    %1304 = vmatprep.subr.mxu0 0.0
    %1305 = vmatpush2.xpose.msra.mxu0 0.0
    %1306 = vmatprep.subr.mxu0 0.0
    %1307 = vmatpush2.xpose.msra.mxu0 0.0
    %1308 = vmatprep.subr.mxu0 0.0
    %1309 = vmatpush2.xpose.msra.mxu0 0.0
    %1310 = vmatprep.subr.mxu0 0.0
    %1311 = vmatpush2.xpose.msra.mxu0 0.0
    %1312 = vmatprep.subr.mxu0 0.0
    %1313 = vmatpush2.xpose.msra.mxu0 0.0
    %1314 = vmatprep.subr.mxu0 0.0
    %1315 = vmatpush2.xpose.msra.mxu0 0.0
    %1316 = vmatprep.subr.mxu0 0.0
    %1317 = vmatpush2.xpose.msra.mxu0 0.0
    %1318 = vmatprep.subr.mxu0 0.0
    %1319 = vmatpush2.xpose.msra.mxu0 0.0
    %1320 = vmatprep.subr.mxu0 0.0
    %1321 = vmatpush2.xpose.msra.mxu0 0.0
    %1322 = vmatprep.subr.mxu0 0.0
    %1323 = vmatpush2.xpose.msra.mxu0 0.0
    %1324 = vmatprep.subr.mxu0 0.0
    %1325 = vmatpush2.xpose.msra.mxu0 0.0
    %1326 = vmatprep.subr.mxu0 0.0
    %1327 = vmatpush2.xpose.msra.mxu0 0.0
    %1328 = vmatprep.subr.mxu0 0.0
    %1329 = vmatpush2.xpose.msra.mxu0 0.0
    %1330 = vmatprep.subr.mxu0 0.0
    %1331 = vmatpush2.xpose.msra.mxu0 0.0
    %1332 = vmatprep.mubr.f32.mxu0 0.0
    %1333 = vmatmul.mubr.f32.gmra.mxu0 %v1264
    %v1334 = vpop.f32.mrf.mxu0
    %v1335 = vadd.f32 %v261, %v1334
    %v1336 = vpop.f32.mrf.mxu0
    %1337 = vdwg.mxu0
    %1338 = vrot.lane.b32.xlu0 %v237, 104
    %v1339 = vpop.permute.xlu0 %1338
    %1340 = vrot.lane.b32.xlu0 %v247, 72
    %v1341 = vpop.permute.xlu0 %1340
    %v1342 = vsel %vm33, %v1339, 0
    %v1344 = vsel %vm33, %v1341, 0
    %1346 = vmatprep.subr.mxu0 0.0
    %1347 = vmatpush1.xpose.msra.mxu0 0.0
    %1348 = vmatprep.subr.mxu0 0.0
    %1349 = vmatpush1.xpose.msra.mxu0 0.0
    %1350 = vmatprep.subr.mxu0 0.0
    %1351 = vmatpush1.xpose.msra.mxu0 0.0
    %1352 = vmatprep.subr.mxu0 0.0
    %1353 = vmatpush1.xpose.msra.mxu0 0.0
    %1354 = vmatprep.subr.mxu0 0.0
    %1355 = vmatpush1.xpose.msra.mxu0 0.0
    %1356 = vmatprep.subr.mxu0 0.0
    %1357 = vmatpush1.xpose.msra.mxu0 0.0
    %1358 = vmatprep.subr.mxu0 0.0
    %1359 = vmatpush1.xpose.msra.mxu0 0.0
    %1360 = vmatprep.subr.mxu0 0.0
    %1361 = vmatpush1.xpose.msra.mxu0 0.0
    %1362 = vmatprep.subr.mxu0 0.0
    %1363 = vmatpush1.xpose.msra.mxu0 0.0
    %1364 = vmatprep.subr.mxu0 0.0
    %1365 = vmatpush1.xpose.msra.mxu0 0.0
    %1366 = vmatprep.subr.mxu0 0.0
    %1367 = vmatpush1.xpose.msra.mxu0 0.0
    %1368 = vmatprep.subr.mxu0 0.0
    %1369 = vmatpush1.xpose.msra.mxu0 0.0
    %1370 = vmatprep.subr.mxu0 0.0
    %1371 = vmatpush1.xpose.msra.mxu0 0.0
    %1372 = vmatprep.subr.mxu0 0.0
    %1373 = vmatpush1.xpose.msra.mxu0 0.0
    %1374 = vmatprep.subr.mxu0 0.0
    %1375 = vmatpush1.xpose.msra.mxu0 0.0
    %1376 = vmatprep.subr.mxu0 0.0
    %1377 = vmatpush1.xpose.msra.mxu0 %v1344
    %1378 = vmatprep.subr.mxu0 0.0
    %1379 = vmatpush2.xpose.msra.mxu0 0.0
    %1380 = vmatprep.subr.mxu0 0.0
    %1381 = vmatpush2.xpose.msra.mxu0 0.0
    %1382 = vmatprep.subr.mxu0 0.0
    %1383 = vmatpush2.xpose.msra.mxu0 0.0
    %1384 = vmatprep.subr.mxu0 0.0
    %1385 = vmatpush2.xpose.msra.mxu0 0.0
    %1386 = vmatprep.subr.mxu0 0.0
    %1387 = vmatpush2.xpose.msra.mxu0 0.0
    %1388 = vmatprep.subr.mxu0 0.0
    %1389 = vmatpush2.xpose.msra.mxu0 0.0
    %1390 = vmatprep.subr.mxu0 0.0
    %1391 = vmatpush2.xpose.msra.mxu0 0.0
    %1392 = vmatprep.subr.mxu0 0.0
    %1393 = vmatpush2.xpose.msra.mxu0 0.0
    %1394 = vmatprep.subr.mxu0 0.0
    %1395 = vmatpush2.xpose.msra.mxu0 0.0
    %1396 = vmatprep.subr.mxu0 0.0
    %1397 = vmatpush2.xpose.msra.mxu0 0.0
    %1398 = vmatprep.subr.mxu0 0.0
    %1399 = vmatpush2.xpose.msra.mxu0 0.0
    %1400 = vmatprep.subr.mxu0 0.0
    %1401 = vmatpush2.xpose.msra.mxu0 0.0
    %1402 = vmatprep.subr.mxu0 0.0
    %1403 = vmatpush2.xpose.msra.mxu0 0.0
    %1404 = vmatprep.subr.mxu0 0.0
    %1405 = vmatpush2.xpose.msra.mxu0 0.0
    %1406 = vmatprep.subr.mxu0 0.0
    %1407 = vmatpush2.xpose.msra.mxu0 0.0
    %1408 = vmatprep.subr.mxu0 0.0
    %1409 = vmatpush2.xpose.msra.mxu0 0.0
    %1410 = vmatprep.mubr.f32.mxu0 0.0
    %1411 = vmatmul.mubr.f32.gmra.mxu0 %v1342
    %v1412 = vpop.f32.mrf.mxu0
    %v1413 = vadd.f32 %v265, %v1412
    %v1414 = vpop.f32.mrf.mxu0
    %1415 = vdwg.mxu0
    %v1416 = vsel %vm33, %v1335, -inf
    %1417 = vmax.xlane.f32.xlu0 %v1416
    %v1418 = vpop.xlane.xlu0 %1417
    %v1419 = vsel %vm33, %v1413, -inf
    %1420 = vmax.xlane.f32.xlu0 %v1419
    %v1421 = vpop.xlane.xlu0 %1420
    %v1422 = vsub.f32 %v1335, %v1418
    %v1423 = vsub.f32 %v1413, %v1421
    %v1424 = vmul.f32 %v1422, 1.442695
    %v1425 = vpow.pop %v1424
    %v1426 = vmul.f32 %v1423, 1.442695
    %v1427 = vpow.pop %v1426
    %v1428 = vsel %vm33, %v1425, 0.0
    %1429 = vadd.xlane.f32.xlu0 %v1428
    %v1430 = vpop.xlane.xlu0 %1429
    %v1431 = vsel %vm33, %v1427, 0.0
    %1432 = vadd.xlane.f32.xlu0 %v1431
    %v1433 = vpop.xlane.xlu0 %1432
    %v1434 = vrcp.pop %v1430
    %v1435 = vrcp.pop %v1433
    %v1436 = vmul.f32 %v1425, %v1434
    %v1437 = vmul.f32 %v1427, %v1435
    %1438 = vrot.lane.b32.xlu0 %v256, 40
    %v1439 = vpop.permute.xlu0 %1438
    %v1442 = vsel %vm33, %v1436, 0
    %1444 = vmatprep.subr.mxu0 0.0
    %1445 = vmatpush1.msra.mxu0 0.0
    %1446 = vmatprep.subr.mxu0 0.0
    %1447 = vmatpush1.msra.mxu0 0.0
    %1448 = vmatprep.subr.mxu0 0.0
    %1449 = vmatpush1.msra.mxu0 0.0
    %1450 = vmatprep.subr.mxu0 0.0
    %1451 = vmatpush1.msra.mxu0 0.0
    %1452 = vmatprep.subr.mxu0 0.0
    %1453 = vmatpush1.msra.mxu0 0.0
    %1454 = vmatprep.subr.mxu0 0.0
    %1455 = vmatpush1.msra.mxu0 0.0
    %1456 = vmatprep.subr.mxu0 0.0
    %1457 = vmatpush1.msra.mxu0 0.0
    %1458 = vmatprep.subr.mxu0 0.0
    %1459 = vmatpush1.msra.mxu0 0.0
    %1460 = vmatprep.subr.mxu0 0.0
    %1461 = vmatpush1.msra.mxu0 0.0
    %1462 = vmatprep.subr.mxu0 0.0
    %1463 = vmatpush1.msra.mxu0 0.0
    %1464 = vmatprep.subr.mxu0 0.0
    %1465 = vmatpush1.msra.mxu0 0.0
    %1466 = vmatprep.subr.mxu0 0.0
    %1467 = vmatpush1.msra.mxu0 0.0
    %1468 = vmatprep.subr.mxu0 0.0
    %1469 = vmatpush1.msra.mxu0 0.0
    %1470 = vmatprep.subr.mxu0 0.0
    %1471 = vmatpush1.msra.mxu0 0.0
    %1472 = vmatprep.subr.mxu0 0.0
    %1473 = vmatpush1.msra.mxu0 0.0
    %1474 = vmatprep.subr.mxu0 0.0
    %1475 = vmatpush1.msra.mxu0 %v1439
    %1476 = vmatprep.subr.mxu0 0.0
    %1477 = vmatpush2.msra.mxu0 0.0
    %1478 = vmatprep.subr.mxu0 0.0
    %1479 = vmatpush2.msra.mxu0 0.0
    %1480 = vmatprep.subr.mxu0 0.0
    %1481 = vmatpush2.msra.mxu0 0.0
    %1482 = vmatprep.subr.mxu0 0.0
    %1483 = vmatpush2.msra.mxu0 0.0
    %1484 = vmatprep.subr.mxu0 0.0
    %1485 = vmatpush2.msra.mxu0 0.0
    %1486 = vmatprep.subr.mxu0 0.0
    %1487 = vmatpush2.msra.mxu0 0.0
    %1488 = vmatprep.subr.mxu0 0.0
    %1489 = vmatpush2.msra.mxu0 0.0
    %1490 = vmatprep.subr.mxu0 0.0
    %1491 = vmatpush2.msra.mxu0 0.0
    %1492 = vmatprep.subr.mxu0 0.0
    %1493 = vmatpush2.msra.mxu0 0.0
    %1494 = vmatprep.subr.mxu0 0.0
    %1495 = vmatpush2.msra.mxu0 0.0
    %1496 = vmatprep.subr.mxu0 0.0
    %1497 = vmatpush2.msra.mxu0 0.0
    %1498 = vmatprep.subr.mxu0 0.0
    %1499 = vmatpush2.msra.mxu0 0.0
    %1500 = vmatprep.subr.mxu0 0.0
    %1501 = vmatpush2.msra.mxu0 0.0
    %1502 = vmatprep.subr.mxu0 0.0
    %1503 = vmatpush2.msra.mxu0 0.0
    %1504 = vmatprep.subr.mxu0 0.0
    %1505 = vmatpush2.msra.mxu0 0.0
    %1506 = vmatprep.subr.mxu0 0.0
    %1507 = vmatpush2.msra.mxu0 0.0
    %1508 = vmatprep.mubr.f32.mxu0 0.0
    %1509 = vmatmul.mubr.f32.gmra.mxu0 %v1442
    %v1510 = vpop.f32.mrf.mxu0
    %v1511 = vadd.f32 0.0, %v1510
    %v1512 = vpop.f32.mrf.mxu0
    %1513 = vdwg.mxu0
    %1514 = vrot.lane.b32.xlu0 %v257, 40
    %v1515 = vpop.permute.xlu0 %1514
    %v1518 = vsel %vm33, %v1437, 0
    %1520 = vmatprep.subr.mxu0 0.0
    %1521 = vmatpush1.msra.mxu0 0.0
    %1522 = vmatprep.subr.mxu0 0.0
    %1523 = vmatpush1.msra.mxu0 0.0
    %1524 = vmatprep.subr.mxu0 0.0
    %1525 = vmatpush1.msra.mxu0 0.0
    %1526 = vmatprep.subr.mxu0 0.0
    %1527 = vmatpush1.msra.mxu0 0.0
    %1528 = vmatprep.subr.mxu0 0.0
    %1529 = vmatpush1.msra.mxu0 0.0
    %1530 = vmatprep.subr.mxu0 0.0
    %1531 = vmatpush1.msra.mxu0 0.0
    %1532 = vmatprep.subr.mxu0 0.0
    %1533 = vmatpush1.msra.mxu0 0.0
    %1534 = vmatprep.subr.mxu0 0.0
    %1535 = vmatpush1.msra.mxu0 0.0
    %1536 = vmatprep.subr.mxu0 0.0
    %1537 = vmatpush1.msra.mxu0 0.0
    %1538 = vmatprep.subr.mxu0 0.0
    %1539 = vmatpush1.msra.mxu0 0.0
    %1540 = vmatprep.subr.mxu0 0.0
    %1541 = vmatpush1.msra.mxu0 0.0
    %1542 = vmatprep.subr.mxu0 0.0
    %1543 = vmatpush1.msra.mxu0 0.0
    %1544 = vmatprep.subr.mxu0 0.0
    %1545 = vmatpush1.msra.mxu0 0.0
    %1546 = vmatprep.subr.mxu0 0.0
    %1547 = vmatpush1.msra.mxu0 0.0
    %1548 = vmatprep.subr.mxu0 0.0
    %1549 = vmatpush1.msra.mxu0 0.0
    %1550 = vmatprep.subr.mxu0 0.0
    %1551 = vmatpush1.msra.mxu0 %v1515
    %1552 = vmatprep.subr.mxu0 0.0
    %1553 = vmatpush2.msra.mxu0 0.0
    %1554 = vmatprep.subr.mxu0 0.0
    %1555 = vmatpush2.msra.mxu0 0.0
    %1556 = vmatprep.subr.mxu0 0.0
    %1557 = vmatpush2.msra.mxu0 0.0
    %1558 = vmatprep.subr.mxu0 0.0
    %1559 = vmatpush2.msra.mxu0 0.0
    %1560 = vmatprep.subr.mxu0 0.0
    %1561 = vmatpush2.msra.mxu0 0.0
    %1562 = vmatprep.subr.mxu0 0.0
    %1563 = vmatpush2.msra.mxu0 0.0
    %1564 = vmatprep.subr.mxu0 0.0
    %1565 = vmatpush2.msra.mxu0 0.0
    %1566 = vmatprep.subr.mxu0 0.0
    %1567 = vmatpush2.msra.mxu0 0.0
    %1568 = vmatprep.subr.mxu0 0.0
    %1569 = vmatpush2.msra.mxu0 0.0
    %1570 = vmatprep.subr.mxu0 0.0
    %1571 = vmatpush2.msra.mxu0 0.0
    %1572 = vmatprep.subr.mxu0 0.0
    %1573 = vmatpush2.msra.mxu0 0.0
    %1574 = vmatprep.subr.mxu0 0.0
    %1575 = vmatpush2.msra.mxu0 0.0
    %1576 = vmatprep.subr.mxu0 0.0
    %1577 = vmatpush2.msra.mxu0 0.0
    %1578 = vmatprep.subr.mxu0 0.0
    %1579 = vmatpush2.msra.mxu0 0.0
    %1580 = vmatprep.subr.mxu0 0.0
    %1581 = vmatpush2.msra.mxu0 0.0
    %1582 = vmatprep.subr.mxu0 0.0
    %1583 = vmatpush2.msra.mxu0 0.0
    %1584 = vmatprep.mubr.f32.mxu0 0.0
    %1585 = vmatmul.mubr.f32.gmra.mxu0 %v1518
    %v1586 = vpop.f32.mrf.mxu0
    %v1587 = vadd.f32 0.0, %v1586
    %v1588 = vpop.f32.mrf.mxu0
    %1589 = vdwg.mxu0
    %1592 = vrot.lane.b32.xlu0 %v851, 8
    %v1593 = vpop.permute.xlu0 %1592
    %1594 = vrot.lane.b32.xlu0 %v927, 8
    %v1595 = vpop.permute.xlu0 %1594
    %1600 = vrot.lane.b32.xlu0 %v1181, 16
    %v1601 = vpop.permute.xlu0 %1600
    %1602 = vrot.lane.b32.xlu0 %v1257, 16
    %v1603 = vpop.permute.xlu0 %1602
    %1608 = vrot.lane.b32.xlu0 %v1511, 24
    %v1609 = vpop.permute.xlu0 %1608
    %1610 = vrot.lane.b32.xlu0 %v1587, 24
    %v1611 = vpop.permute.xlu0 %1610
    %v1614 = vsel %vm33, %v520, %v1593
    %v1615 = vsel %vm33, %v597, %v1595
    %vm1616 = vcmask 130048
    %v1617 = vsel %vm1616, %v1614, %v1601
    %v1618 = vsel %vm1616, %v1615, %v1603
    %vm1619 = vcmask 195584
    %v1620 = vsel %vm1619, %v1617, %v1609
    %v1621 = vsel %vm1619, %v1618, %v1611
    %v1622 = vlaneseq
    %v1623 = vshrl.u32 %v1622, 7
    %v1624 = vsub.s32 3, %v1623
    %v1625 = vrot.slane %v147, %v1624
    %1630 = vrot.lane.b32.xlu0 %v143, 32
    %v1631 = vpop.permute.xlu0 %1630
    %1632 = vrot.lane.b32.xlu0 %v144, 32
    %v1633 = vpop.permute.xlu0 %1632
    %1634 = vrot.lane.b32.xlu0 %v145, 32
    %v1635 = vpop.permute.xlu0 %1634
    %1636 = vrot.lane.b32.xlu0 %v146, 32
    %v1637 = vpop.permute.xlu0 %1636
    %v1643 = vsel %vm148, %v1620, 0
    %v1646 = vsel %vm148, %v1621, 0
    %1648 = vmatprep.subr.mxu0 0.0
    %1649 = vmatpush1.msra.mxu0 0.0
    %1650 = vmatprep.subr.mxu0 0.0
    %1651 = vmatpush1.msra.mxu0 0.0
    %1652 = vmatprep.subr.mxu0 0.0
    %1653 = vmatpush1.msra.mxu0 0.0
    %1654 = vmatprep.subr.mxu0 0.0
    %1655 = vmatpush1.msra.mxu0 0.0
    %1656 = vmatprep.subr.mxu0 0.0
    %1657 = vmatpush1.msra.mxu0 0.0
    %1658 = vmatprep.subr.mxu0 0.0
    %1659 = vmatpush1.msra.mxu0 0.0
    %1660 = vmatprep.subr.mxu0 0.0
    %1661 = vmatpush1.msra.mxu0 0.0
    %1662 = vmatprep.subr.mxu0 0.0
    %1663 = vmatpush1.msra.mxu0 0.0
    %1664 = vmatprep.subr.mxu0 0.0
    %1665 = vmatpush1.msra.mxu0 0.0
    %1666 = vmatprep.subr.mxu0 0.0
    %1667 = vmatpush1.msra.mxu0 0.0
    %1668 = vmatprep.subr.mxu0 0.0
    %1669 = vmatpush1.msra.mxu0 0.0
    %1670 = vmatprep.subr.mxu0 0.0
    %1671 = vmatpush1.msra.mxu0 0.0
    %1672 = vmatprep.subr.mxu0 0.0
    %1673 = vmatpush1.msra.mxu0 %v1637
    %1674 = vmatprep.subr.mxu0 0.0
    %1675 = vmatpush1.msra.mxu0 %v1635
    %1676 = vmatprep.subr.mxu0 0.0
    %1677 = vmatpush1.msra.mxu0 %v1633
    %1678 = vmatprep.subr.mxu0 0.0
    %1679 = vmatpush1.msra.mxu0 %v1631
    %1680 = vmatprep.subr.mxu0 0.0
    %1681 = vmatpush2.msra.mxu0 0.0
    %1682 = vmatprep.subr.mxu0 0.0
    %1683 = vmatpush2.msra.mxu0 0.0
    %1684 = vmatprep.subr.mxu0 0.0
    %1685 = vmatpush2.msra.mxu0 0.0
    %1686 = vmatprep.subr.mxu0 0.0
    %1687 = vmatpush2.msra.mxu0 0.0
    %1688 = vmatprep.subr.mxu0 0.0
    %1689 = vmatpush2.msra.mxu0 0.0
    %1690 = vmatprep.subr.mxu0 0.0
    %1691 = vmatpush2.msra.mxu0 0.0
    %1692 = vmatprep.subr.mxu0 0.0
    %1693 = vmatpush2.msra.mxu0 0.0
    %1694 = vmatprep.subr.mxu0 0.0
    %1695 = vmatpush2.msra.mxu0 0.0
    %1696 = vmatprep.subr.mxu0 0.0
    %1697 = vmatpush2.msra.mxu0 0.0
    %1698 = vmatprep.subr.mxu0 0.0
    %1699 = vmatpush2.msra.mxu0 0.0
    %1700 = vmatprep.subr.mxu0 0.0
    %1701 = vmatpush2.msra.mxu0 0.0
    %1702 = vmatprep.subr.mxu0 0.0
    %1703 = vmatpush2.msra.mxu0 0.0
    %1704 = vmatprep.subr.mxu0 0.0
    %1705 = vmatpush2.msra.mxu0 0.0
    %1706 = vmatprep.subr.mxu0 0.0
    %1707 = vmatpush2.msra.mxu0 0.0
    %1708 = vmatprep.subr.mxu0 0.0
    %1709 = vmatpush2.msra.mxu0 0.0
    %1710 = vmatprep.subr.mxu0 0.0
    %1711 = vmatpush2.msra.mxu0 0.0
    %1712 = vmatprep.mubr.f32.mxu0 0.0
    %1713 = vmatmul.mubr.f32.gmra.mxu0 %v1643
    %v1714 = vpop.f32.mrf.mxu0
    %v1715 = vadd.f32 %v1625, %v1714
    %v1716 = vpop.f32.mrf.mxu0
    %1717 = vmatprep.mubr.f32.mxu0 0.0
    %1718 = vmatmul.mubr.f32.gmra.mxu0 %v1646
    %v1719 = vpop.f32.mrf.mxu0
    %v1720 = vadd.f32 %v1625, %v1719
    %v1721 = vpop.f32.mrf.mxu0
    %1722 = vdwg.mxu0
    %v1723 = vadd.f32 %v117, %v1715
    %v1724 = vadd.f32 %v118, %v1720
    %v1725 = vsel %vm148, %v1723, 0.0
    %1726 = vadd.xlane.f32.xlu0 %v1725
    %v1727 = vpop.xlane.xlu0 %1726
    %v1728 = vsel %vm148, %v1724, 0.0
    %1729 = vadd.xlane.f32.xlu0 %v1728
    %v1730 = vpop.xlane.xlu0 %1729
    %v1731 = vrcp.pop 32.0
    %v1732 = vmul.f32 %v1727, %v1731
    %v1733 = vmul.f32 %v1730, %v1731
    %v1734 = vmul.f32 %v1723, %v1723
    %v1735 = vmul.f32 %v1724, %v1724
    %v1736 = vsel %vm148, %v1734, 0.0
    %1737 = vadd.xlane.f32.xlu0 %v1736
    %v1738 = vpop.xlane.xlu0 %1737
    %v1739 = vsel %vm148, %v1735, 0.0
    %1740 = vadd.xlane.f32.xlu0 %v1739
    %v1741 = vpop.xlane.xlu0 %1740
    %v1742 = vmul.f32 %v1738, %v1731
    %v1743 = vmul.f32 %v1741, %v1731
    %v1744 = vmul.f32 %v1732, %v1732
    %v1745 = vmul.f32 %v1733, %v1733
    %v1746 = vsub.f32 %v1742, %v1744
    %v1747 = vsub.f32 %v1743, %v1745
    %v1748 = vmax.f32 %v1746, 0.0
    %v1749 = vmax.f32 %v1747, 0.0
    %v1750 = vsub.f32 %v1723, %v1732
    %v1751 = vsub.f32 %v1724, %v1733
    %v1752 = vadd.f32 %v1748, 1e-05
    %v1753 = vadd.f32 %v1749, 1e-05
    %v1754 = vrsqrt.pop %v1752
    %v1755 = vrsqrt.pop %v1753
    %v1756 = vmul.f32 %v1750, %v1754
    %v1757 = vmul.f32 %v1751, %v1755
    %v1758 = vlaneseq
    %v1759 = vshrl.u32 %v1758, 7
    %v1760 = vsub.s32 4, %v1759
    %v1761 = vrot.slane %v147, %v1760
    %v1762 = vmul.f32 %v1756, %v1761
    %v1763 = vmul.f32 %v1757, %v1761
    %v1764 = vlaneseq
    %v1765 = vshrl.u32 %v1764, 7
    %v1766 = vsub.s32 5, %v1765
    %v1767 = vrot.slane %v147, %v1766
    %v1768 = vadd.f32 %v1762, %v1767
    %v1769 = vadd.f32 %v1763, %v1767
    %v1770 = vld [vmem:[%s5] sm:$0xff]
    %v1771 = vld [vmem:[%s5 + $0x8] sm:$0xff]
    %v1772 = vld [vmem:[%s5 + $0x10] sm:$0xff]
    %v1773 = vld [vmem:[%s5 + $0x18] sm:$0xff]
    %v1774 = vld [vmem:[%s5 + $0x20] sm:$0x1]
    %v1775 = vlaneseq
    %v1776 = vshrl.u32 %v1775, 7
    %v1777 = vsub.s32 0, %v1776
    %v1778 = vrot.slane %v1774, %v1777
    %v1780 = vsel %vm148, %v1768, 0
    %v1783 = vsel %vm148, %v1769, 0
    %1785 = vmatprep.subr.mxu0 0.0
    %1786 = vmatpush1.msra.mxu0 0.0
    %1787 = vmatprep.subr.mxu0 0.0
    %1788 = vmatpush1.msra.mxu0 0.0
    %1789 = vmatprep.subr.mxu0 0.0
    %1790 = vmatpush1.msra.mxu0 0.0
    %1791 = vmatprep.subr.mxu0 0.0
    %1792 = vmatpush1.msra.mxu0 0.0
    %1793 = vmatprep.subr.mxu0 0.0
    %1794 = vmatpush1.msra.mxu0 0.0
    %1795 = vmatprep.subr.mxu0 0.0
    %1796 = vmatpush1.msra.mxu0 0.0
    %1797 = vmatprep.subr.mxu0 0.0
    %1798 = vmatpush1.msra.mxu0 0.0
    %1799 = vmatprep.subr.mxu0 0.0
    %1800 = vmatpush1.msra.mxu0 0.0
    %1801 = vmatprep.subr.mxu0 0.0
    %1802 = vmatpush1.msra.mxu0 0.0
    %1803 = vmatprep.subr.mxu0 0.0
    %1804 = vmatpush1.msra.mxu0 0.0
    %1805 = vmatprep.subr.mxu0 0.0
    %1806 = vmatpush1.msra.mxu0 0.0
    %1807 = vmatprep.subr.mxu0 0.0
    %1808 = vmatpush1.msra.mxu0 0.0
    %1809 = vmatprep.subr.mxu0 0.0
    %1810 = vmatpush1.msra.mxu0 %v1773
    %1811 = vmatprep.subr.mxu0 0.0
    %1812 = vmatpush1.msra.mxu0 %v1772
    %1813 = vmatprep.subr.mxu0 0.0
    %1814 = vmatpush1.msra.mxu0 %v1771
    %1815 = vmatprep.subr.mxu0 0.0
    %1816 = vmatpush1.msra.mxu0 %v1770
    %1817 = vmatprep.subr.mxu0 0.0
    %1818 = vmatpush2.msra.mxu0 0.0
    %1819 = vmatprep.subr.mxu0 0.0
    %1820 = vmatpush2.msra.mxu0 0.0
    %1821 = vmatprep.subr.mxu0 0.0
    %1822 = vmatpush2.msra.mxu0 0.0
    %1823 = vmatprep.subr.mxu0 0.0
    %1824 = vmatpush2.msra.mxu0 0.0
    %1825 = vmatprep.subr.mxu0 0.0
    %1826 = vmatpush2.msra.mxu0 0.0
    %1827 = vmatprep.subr.mxu0 0.0
    %1828 = vmatpush2.msra.mxu0 0.0
    %1829 = vmatprep.subr.mxu0 0.0
    %1830 = vmatpush2.msra.mxu0 0.0
    %1831 = vmatprep.subr.mxu0 0.0
    %1832 = vmatpush2.msra.mxu0 0.0
    %1833 = vmatprep.subr.mxu0 0.0
    %1834 = vmatpush2.msra.mxu0 0.0
    %1835 = vmatprep.subr.mxu0 0.0
    %1836 = vmatpush2.msra.mxu0 0.0
    %1837 = vmatprep.subr.mxu0 0.0
    %1838 = vmatpush2.msra.mxu0 0.0
    %1839 = vmatprep.subr.mxu0 0.0
    %1840 = vmatpush2.msra.mxu0 0.0
    %1841 = vmatprep.subr.mxu0 0.0
    %1842 = vmatpush2.msra.mxu0 0.0
    %1843 = vmatprep.subr.mxu0 0.0
    %1844 = vmatpush2.msra.mxu0 0.0
    %1845 = vmatprep.subr.mxu0 0.0
    %1846 = vmatpush2.msra.mxu0 0.0
    %1847 = vmatprep.subr.mxu0 0.0
    %1848 = vmatpush2.msra.mxu0 0.0
    %1849 = vmatprep.mubr.f32.mxu0 0.0
    %1850 = vmatmul.mubr.f32.gmra.mxu0 %v1780
    %v1851 = vpop.f32.mrf.mxu0
    %v1852 = vadd.f32 %v1778, %v1851
    %v1853 = vpop.f32.mrf.mxu0
    %1854 = vmatprep.mubr.f32.mxu0 0.0
    %1855 = vmatmul.mubr.f32.gmra.mxu0 %v1783
    %v1856 = vpop.f32.mrf.mxu0
    %v1857 = vadd.f32 %v1778, %v1856
    %v1858 = vpop.f32.mrf.mxu0
    %1859 = vdwg.mxu0
    %v1860 = vmul.f32 %v1852, 0.5
    %v1861 = vmul.f32 %v1857, 0.5
    %v1862 = vmul.f32 %v1852, 0.70710677
    %v1863 = vmul.f32 %v1857, 0.70710677
    %v1864 = verf.f32.pop %v1862
    %v1865 = verf.f32.pop %v1863
    %v1866 = vadd.f32 %v1864, 1.0
    %v1867 = vadd.f32 %v1865, 1.0
    %v1868 = vmul.f32 %v1860, %v1866
    %v1869 = vmul.f32 %v1861, %v1867
    %1874 = vrot.lane.b32.xlu0 %v1770, 64
    %v1875 = vpop.permute.xlu0 %1874
    %1876 = vrot.lane.b32.xlu0 %v1771, 64
    %v1877 = vpop.permute.xlu0 %1876
    %1878 = vrot.lane.b32.xlu0 %v1772, 64
    %v1879 = vpop.permute.xlu0 %1878
    %1880 = vrot.lane.b32.xlu0 %v1773, 64
    %v1881 = vpop.permute.xlu0 %1880
    %1883 = vrot.lane.b32.xlu0 %v1778, 64
    %v1884 = vpop.permute.xlu0 %1883
    %vm1886 = vcmask 523264
    %v1888 = vsel %vm1886, %v1868, 0
    %v1891 = vsel %vm1886, %v1869, 0
    %v1893 = vsel %vm1886, %v1875, 0
    %v1895 = vsel %vm1886, %v1877, 0
    %v1897 = vsel %vm1886, %v1879, 0
    %v1899 = vsel %vm1886, %v1881, 0
    %1901 = vmatprep.subr.mxu0 0.0
    %1902 = vmatpush1.xpose.msra.mxu0 0.0
    %1903 = vmatprep.subr.mxu0 0.0
    %1904 = vmatpush1.xpose.msra.mxu0 0.0
    %1905 = vmatprep.subr.mxu0 0.0
    %1906 = vmatpush1.xpose.msra.mxu0 0.0
    %1907 = vmatprep.subr.mxu0 0.0
    %1908 = vmatpush1.xpose.msra.mxu0 0.0
    %1909 = vmatprep.subr.mxu0 0.0
    %1910 = vmatpush1.xpose.msra.mxu0 0.0
    %1911 = vmatprep.subr.mxu0 0.0
    %1912 = vmatpush1.xpose.msra.mxu0 0.0
    %1913 = vmatprep.subr.mxu0 0.0
    %1914 = vmatpush1.xpose.msra.mxu0 0.0
    %1915 = vmatprep.subr.mxu0 0.0
    %1916 = vmatpush1.xpose.msra.mxu0 0.0
    %1917 = vmatprep.subr.mxu0 0.0
    %1918 = vmatpush1.xpose.msra.mxu0 0.0
    %1919 = vmatprep.subr.mxu0 0.0
    %1920 = vmatpush1.xpose.msra.mxu0 0.0
    %1921 = vmatprep.subr.mxu0 0.0
    %1922 = vmatpush1.xpose.msra.mxu0 0.0
    %1923 = vmatprep.subr.mxu0 0.0
    %1924 = vmatpush1.xpose.msra.mxu0 0.0
    %1925 = vmatprep.subr.mxu0 0.0
    %1926 = vmatpush1.xpose.msra.mxu0 %v1899
    %1927 = vmatprep.subr.mxu0 0.0
    %1928 = vmatpush1.xpose.msra.mxu0 %v1897
    %1929 = vmatprep.subr.mxu0 0.0
    %1930 = vmatpush1.xpose.msra.mxu0 %v1895
    %1931 = vmatprep.subr.mxu0 0.0
    %1932 = vmatpush1.xpose.msra.mxu0 %v1893
    %1933 = vmatprep.subr.mxu0 0.0
    %1934 = vmatpush2.xpose.msra.mxu0 0.0
    %1935 = vmatprep.subr.mxu0 0.0
    %1936 = vmatpush2.xpose.msra.mxu0 0.0
    %1937 = vmatprep.subr.mxu0 0.0
    %1938 = vmatpush2.xpose.msra.mxu0 0.0
    %1939 = vmatprep.subr.mxu0 0.0
    %1940 = vmatpush2.xpose.msra.mxu0 0.0
    %1941 = vmatprep.subr.mxu0 0.0
    %1942 = vmatpush2.xpose.msra.mxu0 0.0
    %1943 = vmatprep.subr.mxu0 0.0
    %1944 = vmatpush2.xpose.msra.mxu0 0.0
    %1945 = vmatprep.subr.mxu0 0.0
    %1946 = vmatpush2.xpose.msra.mxu0 0.0
    %1947 = vmatprep.subr.mxu0 0.0
    %1948 = vmatpush2.xpose.msra.mxu0 0.0
    %1949 = vmatprep.subr.mxu0 0.0
    %1950 = vmatpush2.xpose.msra.mxu0 0.0
    %1951 = vmatprep.subr.mxu0 0.0
    %1952 = vmatpush2.xpose.msra.mxu0 0.0
    %1953 = vmatprep.subr.mxu0 0.0
    %1954 = vmatpush2.xpose.msra.mxu0 0.0
    %1955 = vmatprep.subr.mxu0 0.0
    %1956 = vmatpush2.xpose.msra.mxu0 0.0
    %1957 = vmatprep.subr.mxu0 0.0
    %1958 = vmatpush2.xpose.msra.mxu0 0.0
    %1959 = vmatprep.subr.mxu0 0.0
    %1960 = vmatpush2.xpose.msra.mxu0 0.0
    %1961 = vmatprep.subr.mxu0 0.0
    %1962 = vmatpush2.xpose.msra.mxu0 0.0
    %1963 = vmatprep.subr.mxu0 0.0
    %1964 = vmatpush2.xpose.msra.mxu0 0.0
    %1965 = vmatprep.mubr.f32.mxu0 0.0
    %1966 = vmatmul.mubr.f32.gmra.mxu0 %v1888
    %v1967 = vpop.f32.mrf.mxu0
    %v1968 = vadd.f32 %v1884, %v1967
    %v1969 = vpop.f32.mrf.mxu0
    %1970 = vmatprep.mubr.f32.mxu0 0.0
    %1971 = vmatmul.mubr.f32.gmra.mxu0 %v1891
    %v1972 = vpop.f32.mrf.mxu0
    %v1973 = vadd.f32 %v1884, %v1972
    %v1974 = vpop.f32.mrf.mxu0
    %1975 = vdwg.mxu0
    %v1976 = vadd.f32 %v1768, %v1968
    %v1977 = vadd.f32 %v1769, %v1973
    %v1978 = vsel %vm148, %v1976, 0.0
    %1979 = vadd.xlane.f32.xlu0 %v1978
    %v1980 = vpop.xlane.xlu0 %1979
    %v1981 = vsel %vm148, %v1977, 0.0
    %1982 = vadd.xlane.f32.xlu0 %v1981
    %v1983 = vpop.xlane.xlu0 %1982
    %v1984 = vmul.f32 %v1980, %v1731
    %v1985 = vmul.f32 %v1983, %v1731
    %v1986 = vmul.f32 %v1976, %v1976
    %v1987 = vmul.f32 %v1977, %v1977
    %v1988 = vsel %vm148, %v1986, 0.0
    %1989 = vadd.xlane.f32.xlu0 %v1988
    %v1990 = vpop.xlane.xlu0 %1989
    %v1991 = vsel %vm148, %v1987, 0.0
    %1992 = vadd.xlane.f32.xlu0 %v1991
    %v1993 = vpop.xlane.xlu0 %1992
    %v1994 = vmul.f32 %v1990, %v1731
    %v1995 = vmul.f32 %v1993, %v1731
    %v1996 = vmul.f32 %v1984, %v1984
    %v1997 = vmul.f32 %v1985, %v1985
    %v1998 = vsub.f32 %v1994, %v1996
    %v1999 = vsub.f32 %v1995, %v1997
    %v2000 = vmax.f32 %v1998, 0.0
    %v2001 = vmax.f32 %v1999, 0.0
    %v2002 = vsub.f32 %v1976, %v1984
    %v2003 = vsub.f32 %v1977, %v1985
    %v2004 = vadd.f32 %v2000, 1e-05
    %v2005 = vadd.f32 %v2001, 1e-05
    %v2006 = vrsqrt.pop %v2004
    %v2007 = vrsqrt.pop %v2005
    %v2008 = vmul.f32 %v2002, %v2006
    %v2009 = vmul.f32 %v2003, %v2007
    %v2010 = vlaneseq
    %v2011 = vshrl.u32 %v2010, 7
    %v2012 = vsub.s32 6, %v2011
    %v2013 = vrot.slane %v147, %v2012
    %v2014 = vmul.f32 %v2008, %v2013
    %v2015 = vmul.f32 %v2009, %v2013
    %v2016 = vlaneseq
    %v2017 = vshrl.u32 %v2016, 7
    %v2018 = vsub.s32 7, %v2017
    %v2019 = vrot.slane %v147, %v2018
    %v2020 = vadd.f32 %v2014, %v2019
    %v2021 = vadd.f32 %v2015, %v2019
    %s2022 = scalar_lea.vmem %s4, 32
    %v2023 = vld [vmem:[%s2022] sm:$0xff]
    %v2024 = vld [vmem:[%s2022 + $0x8] sm:$0xff]
    %v2025 = vld [vmem:[%s2022 + $0x10] sm:$0xff]
    %v2026 = vld [vmem:[%s2022 + $0x18] sm:$0xff]
    %s2027 = scalar_lea.vmem %s6, 8
    %v2028 = vld [vmem:[%s2027] sm:$0xff]
    %v2030 = vsel %vm148, %v2020, 0
    %v2033 = vsel %vm148, %v2021, 0
    %2035 = vmatprep.subr.mxu0 0.0
    %2036 = vmatpush1.msra.mxu0 0.0
    %2037 = vmatprep.subr.mxu0 0.0
    %2038 = vmatpush1.msra.mxu0 0.0
    %2039 = vmatprep.subr.mxu0 0.0
    %2040 = vmatpush1.msra.mxu0 0.0
    %2041 = vmatprep.subr.mxu0 0.0
    %2042 = vmatpush1.msra.mxu0 0.0
    %2043 = vmatprep.subr.mxu0 0.0
    %2044 = vmatpush1.msra.mxu0 0.0
    %2045 = vmatprep.subr.mxu0 0.0
    %2046 = vmatpush1.msra.mxu0 0.0
    %2047 = vmatprep.subr.mxu0 0.0
    %2048 = vmatpush1.msra.mxu0 0.0
    %2049 = vmatprep.subr.mxu0 0.0
    %2050 = vmatpush1.msra.mxu0 0.0
    %2051 = vmatprep.subr.mxu0 0.0
    %2052 = vmatpush1.msra.mxu0 0.0
    %2053 = vmatprep.subr.mxu0 0.0
    %2054 = vmatpush1.msra.mxu0 0.0
    %2055 = vmatprep.subr.mxu0 0.0
    %2056 = vmatpush1.msra.mxu0 0.0
    %2057 = vmatprep.subr.mxu0 0.0
    %2058 = vmatpush1.msra.mxu0 0.0
    %2059 = vmatprep.subr.mxu0 0.0
    %2060 = vmatpush1.msra.mxu0 %v2026
    %2061 = vmatprep.subr.mxu0 0.0
    %2062 = vmatpush1.msra.mxu0 %v2025
    %2063 = vmatprep.subr.mxu0 0.0
    %2064 = vmatpush1.msra.mxu0 %v2024
    %2065 = vmatprep.subr.mxu0 0.0
    %2066 = vmatpush1.msra.mxu0 %v2023
    %2067 = vmatprep.subr.mxu0 0.0
    %2068 = vmatpush2.msra.mxu0 0.0
    %2069 = vmatprep.subr.mxu0 0.0
    %2070 = vmatpush2.msra.mxu0 0.0
    %2071 = vmatprep.subr.mxu0 0.0
    %2072 = vmatpush2.msra.mxu0 0.0
    %2073 = vmatprep.subr.mxu0 0.0
    %2074 = vmatpush2.msra.mxu0 0.0
    %2075 = vmatprep.subr.mxu0 0.0
    %2076 = vmatpush2.msra.mxu0 0.0
    %2077 = vmatprep.subr.mxu0 0.0
    %2078 = vmatpush2.msra.mxu0 0.0
    %2079 = vmatprep.subr.mxu0 0.0
    %2080 = vmatpush2.msra.mxu0 0.0
    %2081 = vmatprep.subr.mxu0 0.0
    %2082 = vmatpush2.msra.mxu0 0.0
    %2083 = vmatprep.subr.mxu0 0.0
    %2084 = vmatpush2.msra.mxu0 0.0
    %2085 = vmatprep.subr.mxu0 0.0
    %2086 = vmatpush2.msra.mxu0 0.0
    %2087 = vmatprep.subr.mxu0 0.0
    %2088 = vmatpush2.msra.mxu0 0.0
    %2089 = vmatprep.subr.mxu0 0.0
    %2090 = vmatpush2.msra.mxu0 0.0
    %2091 = vmatprep.subr.mxu0 0.0
    %2092 = vmatpush2.msra.mxu0 0.0
    %2093 = vmatprep.subr.mxu0 0.0
    %2094 = vmatpush2.msra.mxu0 0.0
    %2095 = vmatprep.subr.mxu0 0.0
    %2096 = vmatpush2.msra.mxu0 0.0
    %2097 = vmatprep.subr.mxu0 0.0
    %2098 = vmatpush2.msra.mxu0 0.0
    %2099 = vmatprep.mubr.f32.mxu0 0.0
    %2100 = vmatmul.mubr.f32.gmra.mxu0 %v2030
    %v2101 = vpop.f32.mrf.mxu0
    %v2102 = vadd.f32 0.0, %v2101
    %v2103 = vpop.f32.mrf.mxu0
    %2104 = vmatprep.mubr.f32.mxu0 0.0
    %2105 = vmatmul.mubr.f32.gmra.mxu0 %v2033
    %v2106 = vpop.f32.mrf.mxu0
    %v2107 = vadd.f32 0.0, %v2106
    %v2108 = vpop.f32.mrf.mxu0
    %2109 = vdwg.mxu0
    %v2110 = vlaneseq
    %v2111 = vshrl.u32 %v2110, 7
    %v2112 = vsub.s32 0, %v2111
    %v2113 = vrot.slane %v2028, %v2112
    %v2114 = vadd.f32 %v2102, %v2113
    %v2115 = vadd.f32 %v2107, %v2113
    %v2116 = vmul.f32 %v2114, 0.35355338
    %v2117 = vmul.f32 %v2115, 0.35355338
    %v2118 = vlaneseq
    %v2119 = vshrl.u32 %v2118, 7
    %v2120 = vsub.s32 1, %v2119
    %v2121 = vrot.slane %v2028, %v2120
    %2123 = vrot.lane.b32.xlu0 %v2121, 32
    %v2124 = vpop.permute.xlu0 %2123
    %v2126 = vadd.f32 %v2102, %v2124
    %v2127 = vadd.f32 %v2107, %v2124
    %v2128 = vlaneseq
    %v2129 = vshrl.u32 %v2128, 7
    %v2130 = vsub.s32 2, %v2129
    %v2131 = vrot.slane %v2028, %v2130
    %2133 = vrot.lane.b32.xlu0 %v2131, 64
    %v2134 = vpop.permute.xlu0 %2133
    %v2136 = vadd.f32 %v2102, %v2134
    %v2137 = vadd.f32 %v2107, %v2134
    %2139 = vrot.lane.b32.xlu0 %v2126, 96
    %v2140 = vpop.permute.xlu0 %2139
    %v2142 = vsel %vm33, %v2116, 0
    %v2144 = vsel %vm33, %v2140, 0
    %2146 = vmatprep.subr.mxu0 0.0
    %2147 = vmatpush1.xpose.msra.mxu0 0.0
    %2148 = vmatprep.subr.mxu0 0.0
    %2149 = vmatpush1.xpose.msra.mxu0 0.0
    %2150 = vmatprep.subr.mxu0 0.0
    %2151 = vmatpush1.xpose.msra.mxu0 0.0
    %2152 = vmatprep.subr.mxu0 0.0
    %2153 = vmatpush1.xpose.msra.mxu0 0.0
    %2154 = vmatprep.subr.mxu0 0.0
    %2155 = vmatpush1.xpose.msra.mxu0 0.0
    %2156 = vmatprep.subr.mxu0 0.0
    %2157 = vmatpush1.xpose.msra.mxu0 0.0
    %2158 = vmatprep.subr.mxu0 0.0
    %2159 = vmatpush1.xpose.msra.mxu0 0.0
    %2160 = vmatprep.subr.mxu0 0.0
    %2161 = vmatpush1.xpose.msra.mxu0 0.0
    %2162 = vmatprep.subr.mxu0 0.0
    %2163 = vmatpush1.xpose.msra.mxu0 0.0
    %2164 = vmatprep.subr.mxu0 0.0
    %2165 = vmatpush1.xpose.msra.mxu0 0.0
    %2166 = vmatprep.subr.mxu0 0.0
    %2167 = vmatpush1.xpose.msra.mxu0 0.0
    %2168 = vmatprep.subr.mxu0 0.0
    %2169 = vmatpush1.xpose.msra.mxu0 0.0
    %2170 = vmatprep.subr.mxu0 0.0
    %2171 = vmatpush1.xpose.msra.mxu0 0.0
    %2172 = vmatprep.subr.mxu0 0.0
    %2173 = vmatpush1.xpose.msra.mxu0 0.0
    %2174 = vmatprep.subr.mxu0 0.0
    %2175 = vmatpush1.xpose.msra.mxu0 0.0
    %2176 = vmatprep.subr.mxu0 0.0
    %2177 = vmatpush1.xpose.msra.mxu0 %v2144
    %2178 = vmatprep.subr.mxu0 0.0
    %2179 = vmatpush2.xpose.msra.mxu0 0.0
    %2180 = vmatprep.subr.mxu0 0.0
    %2181 = vmatpush2.xpose.msra.mxu0 0.0
    %2182 = vmatprep.subr.mxu0 0.0
    %2183 = vmatpush2.xpose.msra.mxu0 0.0
    %2184 = vmatprep.subr.mxu0 0.0
    %2185 = vmatpush2.xpose.msra.mxu0 0.0
    %2186 = vmatprep.subr.mxu0 0.0
    %2187 = vmatpush2.xpose.msra.mxu0 0.0
    %2188 = vmatprep.subr.mxu0 0.0
    %2189 = vmatpush2.xpose.msra.mxu0 0.0
    %2190 = vmatprep.subr.mxu0 0.0
    %2191 = vmatpush2.xpose.msra.mxu0 0.0
    %2192 = vmatprep.subr.mxu0 0.0
    %2193 = vmatpush2.xpose.msra.mxu0 0.0
    %2194 = vmatprep.subr.mxu0 0.0
    %2195 = vmatpush2.xpose.msra.mxu0 0.0
    %2196 = vmatprep.subr.mxu0 0.0
    %2197 = vmatpush2.xpose.msra.mxu0 0.0
    %2198 = vmatprep.subr.mxu0 0.0
    %2199 = vmatpush2.xpose.msra.mxu0 0.0
    %2200 = vmatprep.subr.mxu0 0.0
    %2201 = vmatpush2.xpose.msra.mxu0 0.0
    %2202 = vmatprep.subr.mxu0 0.0
    %2203 = vmatpush2.xpose.msra.mxu0 0.0
    %2204 = vmatprep.subr.mxu0 0.0
    %2205 = vmatpush2.xpose.msra.mxu0 0.0
    %2206 = vmatprep.subr.mxu0 0.0
    %2207 = vmatpush2.xpose.msra.mxu0 0.0
    %2208 = vmatprep.subr.mxu0 0.0
    %2209 = vmatpush2.xpose.msra.mxu0 0.0
    %2210 = vmatprep.mubr.f32.mxu0 0.0
    %2211 = vmatmul.mubr.f32.gmra.mxu0 %v2142
    %v2212 = vpop.f32.mrf.mxu0
    %v2213 = vadd.f32 %v261, %v2212
    %v2214 = vpop.f32.mrf.mxu0
    %2215 = vdwg.mxu0
    %2217 = vrot.lane.b32.xlu0 %v2127, 96
    %v2218 = vpop.permute.xlu0 %2217
    %v2220 = vsel %vm33, %v2117, 0
    %v2222 = vsel %vm33, %v2218, 0
    %2224 = vmatprep.subr.mxu0 0.0
    %2225 = vmatpush1.xpose.msra.mxu0 0.0
    %2226 = vmatprep.subr.mxu0 0.0
    %2227 = vmatpush1.xpose.msra.mxu0 0.0
    %2228 = vmatprep.subr.mxu0 0.0
    %2229 = vmatpush1.xpose.msra.mxu0 0.0
    %2230 = vmatprep.subr.mxu0 0.0
    %2231 = vmatpush1.xpose.msra.mxu0 0.0
    %2232 = vmatprep.subr.mxu0 0.0
    %2233 = vmatpush1.xpose.msra.mxu0 0.0
    %2234 = vmatprep.subr.mxu0 0.0
    %2235 = vmatpush1.xpose.msra.mxu0 0.0
    %2236 = vmatprep.subr.mxu0 0.0
    %2237 = vmatpush1.xpose.msra.mxu0 0.0
    %2238 = vmatprep.subr.mxu0 0.0
    %2239 = vmatpush1.xpose.msra.mxu0 0.0
    %2240 = vmatprep.subr.mxu0 0.0
    %2241 = vmatpush1.xpose.msra.mxu0 0.0
    %2242 = vmatprep.subr.mxu0 0.0
    %2243 = vmatpush1.xpose.msra.mxu0 0.0
    %2244 = vmatprep.subr.mxu0 0.0
    %2245 = vmatpush1.xpose.msra.mxu0 0.0
    %2246 = vmatprep.subr.mxu0 0.0
    %2247 = vmatpush1.xpose.msra.mxu0 0.0
    %2248 = vmatprep.subr.mxu0 0.0
    %2249 = vmatpush1.xpose.msra.mxu0 0.0
    %2250 = vmatprep.subr.mxu0 0.0
    %2251 = vmatpush1.xpose.msra.mxu0 0.0
    %2252 = vmatprep.subr.mxu0 0.0
    %2253 = vmatpush1.xpose.msra.mxu0 0.0
    %2254 = vmatprep.subr.mxu0 0.0
    %2255 = vmatpush1.xpose.msra.mxu0 %v2222
    %2256 = vmatprep.subr.mxu0 0.0
    %2257 = vmatpush2.xpose.msra.mxu0 0.0
    %2258 = vmatprep.subr.mxu0 0.0
    %2259 = vmatpush2.xpose.msra.mxu0 0.0
    %2260 = vmatprep.subr.mxu0 0.0
    %2261 = vmatpush2.xpose.msra.mxu0 0.0
    %2262 = vmatprep.subr.mxu0 0.0
    %2263 = vmatpush2.xpose.msra.mxu0 0.0
    %2264 = vmatprep.subr.mxu0 0.0
    %2265 = vmatpush2.xpose.msra.mxu0 0.0
    %2266 = vmatprep.subr.mxu0 0.0
    %2267 = vmatpush2.xpose.msra.mxu0 0.0
    %2268 = vmatprep.subr.mxu0 0.0
    %2269 = vmatpush2.xpose.msra.mxu0 0.0
    %2270 = vmatprep.subr.mxu0 0.0
    %2271 = vmatpush2.xpose.msra.mxu0 0.0
    %2272 = vmatprep.subr.mxu0 0.0
    %2273 = vmatpush2.xpose.msra.mxu0 0.0
    %2274 = vmatprep.subr.mxu0 0.0
    %2275 = vmatpush2.xpose.msra.mxu0 0.0
    %2276 = vmatprep.subr.mxu0 0.0
    %2277 = vmatpush2.xpose.msra.mxu0 0.0
    %2278 = vmatprep.subr.mxu0 0.0
    %2279 = vmatpush2.xpose.msra.mxu0 0.0
    %2280 = vmatprep.subr.mxu0 0.0
    %2281 = vmatpush2.xpose.msra.mxu0 0.0
    %2282 = vmatprep.subr.mxu0 0.0
    %2283 = vmatpush2.xpose.msra.mxu0 0.0
    %2284 = vmatprep.subr.mxu0 0.0
    %2285 = vmatpush2.xpose.msra.mxu0 0.0
    %2286 = vmatprep.subr.mxu0 0.0
    %2287 = vmatpush2.xpose.msra.mxu0 0.0
    %2288 = vmatprep.mubr.f32.mxu0 0.0
    %2289 = vmatmul.mubr.f32.gmra.mxu0 %v2220
    %v2290 = vpop.f32.mrf.mxu0
    %v2291 = vadd.f32 %v265, %v2290
    %v2292 = vpop.f32.mrf.mxu0
    %2293 = vdwg.mxu0
    %v2294 = vsel %vm33, %v2213, -inf
    %2295 = vmax.xlane.f32.xlu0 %v2294
    %v2296 = vpop.xlane.xlu0 %2295
    %v2297 = vsel %vm33, %v2291, -inf
    %2298 = vmax.xlane.f32.xlu0 %v2297
    %v2299 = vpop.xlane.xlu0 %2298
    %v2300 = vsub.f32 %v2213, %v2296
    %v2301 = vsub.f32 %v2291, %v2299
    %v2302 = vmul.f32 %v2300, 1.442695
    %v2303 = vpow.pop %v2302
    %v2304 = vmul.f32 %v2301, 1.442695
    %v2305 = vpow.pop %v2304
    %v2306 = vsel %vm33, %v2303, 0.0
    %2307 = vadd.xlane.f32.xlu0 %v2306
    %v2308 = vpop.xlane.xlu0 %2307
    %v2309 = vsel %vm33, %v2305, 0.0
    %2310 = vadd.xlane.f32.xlu0 %v2309
    %v2311 = vpop.xlane.xlu0 %2310
    %v2312 = vrcp.pop %v2308
    %v2313 = vrcp.pop %v2311
    %v2314 = vmul.f32 %v2303, %v2312
    %v2315 = vmul.f32 %v2305, %v2313
    %2317 = vrot.lane.b32.xlu0 %v2136, 64
    %v2318 = vpop.permute.xlu0 %2317
    %v2321 = vsel %vm33, %v2314, 0
    %2323 = vmatprep.subr.mxu0 0.0
    %2324 = vmatpush1.msra.mxu0 0.0
    %2325 = vmatprep.subr.mxu0 0.0
    %2326 = vmatpush1.msra.mxu0 0.0
    %2327 = vmatprep.subr.mxu0 0.0
    %2328 = vmatpush1.msra.mxu0 0.0
    %2329 = vmatprep.subr.mxu0 0.0
    %2330 = vmatpush1.msra.mxu0 0.0
    %2331 = vmatprep.subr.mxu0 0.0
    %2332 = vmatpush1.msra.mxu0 0.0
    %2333 = vmatprep.subr.mxu0 0.0
    %2334 = vmatpush1.msra.mxu0 0.0
    %2335 = vmatprep.subr.mxu0 0.0
    %2336 = vmatpush1.msra.mxu0 0.0
    %2337 = vmatprep.subr.mxu0 0.0
    %2338 = vmatpush1.msra.mxu0 0.0
    %2339 = vmatprep.subr.mxu0 0.0
    %2340 = vmatpush1.msra.mxu0 0.0
    %2341 = vmatprep.subr.mxu0 0.0
    %2342 = vmatpush1.msra.mxu0 0.0
    %2343 = vmatprep.subr.mxu0 0.0
    %2344 = vmatpush1.msra.mxu0 0.0
    %2345 = vmatprep.subr.mxu0 0.0
    %2346 = vmatpush1.msra.mxu0 0.0
    %2347 = vmatprep.subr.mxu0 0.0
    %2348 = vmatpush1.msra.mxu0 0.0
    %2349 = vmatprep.subr.mxu0 0.0
    %2350 = vmatpush1.msra.mxu0 0.0
    %2351 = vmatprep.subr.mxu0 0.0
    %2352 = vmatpush1.msra.mxu0 0.0
    %2353 = vmatprep.subr.mxu0 0.0
    %2354 = vmatpush1.msra.mxu0 %v2318
    %2355 = vmatprep.subr.mxu0 0.0
    %2356 = vmatpush2.msra.mxu0 0.0
    %2357 = vmatprep.subr.mxu0 0.0
    %2358 = vmatpush2.msra.mxu0 0.0
    %2359 = vmatprep.subr.mxu0 0.0
    %2360 = vmatpush2.msra.mxu0 0.0
    %2361 = vmatprep.subr.mxu0 0.0
    %2362 = vmatpush2.msra.mxu0 0.0
    %2363 = vmatprep.subr.mxu0 0.0
    %2364 = vmatpush2.msra.mxu0 0.0
    %2365 = vmatprep.subr.mxu0 0.0
    %2366 = vmatpush2.msra.mxu0 0.0
    %2367 = vmatprep.subr.mxu0 0.0
    %2368 = vmatpush2.msra.mxu0 0.0
    %2369 = vmatprep.subr.mxu0 0.0
    %2370 = vmatpush2.msra.mxu0 0.0
    %2371 = vmatprep.subr.mxu0 0.0
    %2372 = vmatpush2.msra.mxu0 0.0
    %2373 = vmatprep.subr.mxu0 0.0
    %2374 = vmatpush2.msra.mxu0 0.0
    %2375 = vmatprep.subr.mxu0 0.0
    %2376 = vmatpush2.msra.mxu0 0.0
    %2377 = vmatprep.subr.mxu0 0.0
    %2378 = vmatpush2.msra.mxu0 0.0
    %2379 = vmatprep.subr.mxu0 0.0
    %2380 = vmatpush2.msra.mxu0 0.0
    %2381 = vmatprep.subr.mxu0 0.0
    %2382 = vmatpush2.msra.mxu0 0.0
    %2383 = vmatprep.subr.mxu0 0.0
    %2384 = vmatpush2.msra.mxu0 0.0
    %2385 = vmatprep.subr.mxu0 0.0
    %2386 = vmatpush2.msra.mxu0 0.0
    %2387 = vmatprep.mubr.f32.mxu0 0.0
    %2388 = vmatmul.mubr.f32.gmra.mxu0 %v2321
    %v2389 = vpop.f32.mrf.mxu0
    %v2390 = vadd.f32 0.0, %v2389
    %v2391 = vpop.f32.mrf.mxu0
    %2392 = vdwg.mxu0
    %2394 = vrot.lane.b32.xlu0 %v2137, 64
    %v2395 = vpop.permute.xlu0 %2394
    %v2398 = vsel %vm33, %v2315, 0
    %2400 = vmatprep.subr.mxu0 0.0
    %2401 = vmatpush1.msra.mxu0 0.0
    %2402 = vmatprep.subr.mxu0 0.0
    %2403 = vmatpush1.msra.mxu0 0.0
    %2404 = vmatprep.subr.mxu0 0.0
    %2405 = vmatpush1.msra.mxu0 0.0
    %2406 = vmatprep.subr.mxu0 0.0
    %2407 = vmatpush1.msra.mxu0 0.0
    %2408 = vmatprep.subr.mxu0 0.0
    %2409 = vmatpush1.msra.mxu0 0.0
    %2410 = vmatprep.subr.mxu0 0.0
    %2411 = vmatpush1.msra.mxu0 0.0
    %2412 = vmatprep.subr.mxu0 0.0
    %2413 = vmatpush1.msra.mxu0 0.0
    %2414 = vmatprep.subr.mxu0 0.0
    %2415 = vmatpush1.msra.mxu0 0.0
    %2416 = vmatprep.subr.mxu0 0.0
    %2417 = vmatpush1.msra.mxu0 0.0
    %2418 = vmatprep.subr.mxu0 0.0
    %2419 = vmatpush1.msra.mxu0 0.0
    %2420 = vmatprep.subr.mxu0 0.0
    %2421 = vmatpush1.msra.mxu0 0.0
    %2422 = vmatprep.subr.mxu0 0.0
    %2423 = vmatpush1.msra.mxu0 0.0
    %2424 = vmatprep.subr.mxu0 0.0
    %2425 = vmatpush1.msra.mxu0 0.0
    %2426 = vmatprep.subr.mxu0 0.0
    %2427 = vmatpush1.msra.mxu0 0.0
    %2428 = vmatprep.subr.mxu0 0.0
    %2429 = vmatpush1.msra.mxu0 0.0
    %2430 = vmatprep.subr.mxu0 0.0
    %2431 = vmatpush1.msra.mxu0 %v2395
    %2432 = vmatprep.subr.mxu0 0.0
    %2433 = vmatpush2.msra.mxu0 0.0
    %2434 = vmatprep.subr.mxu0 0.0
    %2435 = vmatpush2.msra.mxu0 0.0
    %2436 = vmatprep.subr.mxu0 0.0
    %2437 = vmatpush2.msra.mxu0 0.0
    %2438 = vmatprep.subr.mxu0 0.0
    %2439 = vmatpush2.msra.mxu0 0.0
    %2440 = vmatprep.subr.mxu0 0.0
    %2441 = vmatpush2.msra.mxu0 0.0
    %2442 = vmatprep.subr.mxu0 0.0
    %2443 = vmatpush2.msra.mxu0 0.0
    %2444 = vmatprep.subr.mxu0 0.0
    %2445 = vmatpush2.msra.mxu0 0.0
    %2446 = vmatprep.subr.mxu0 0.0
    %2447 = vmatpush2.msra.mxu0 0.0
    %2448 = vmatprep.subr.mxu0 0.0
    %2449 = vmatpush2.msra.mxu0 0.0
    %2450 = vmatprep.subr.mxu0 0.0
    %2451 = vmatpush2.msra.mxu0 0.0
    %2452 = vmatprep.subr.mxu0 0.0
    %2453 = vmatpush2.msra.mxu0 0.0
    %2454 = vmatprep.subr.mxu0 0.0
    %2455 = vmatpush2.msra.mxu0 0.0
    %2456 = vmatprep.subr.mxu0 0.0
    %2457 = vmatpush2.msra.mxu0 0.0
    %2458 = vmatprep.subr.mxu0 0.0
    %2459 = vmatpush2.msra.mxu0 0.0
    %2460 = vmatprep.subr.mxu0 0.0
    %2461 = vmatpush2.msra.mxu0 0.0
    %2462 = vmatprep.subr.mxu0 0.0
    %2463 = vmatpush2.msra.mxu0 0.0
    %2464 = vmatprep.mubr.f32.mxu0 0.0
    %2465 = vmatmul.mubr.f32.gmra.mxu0 %v2398
    %v2466 = vpop.f32.mrf.mxu0
    %v2467 = vadd.f32 0.0, %v2466
    %v2468 = vpop.f32.mrf.mxu0
    %2469 = vdwg.mxu0
    %2470 = vrot.lane.b32.xlu0 %v2116, 120
    %v2471 = vpop.permute.xlu0 %2470
    %2472 = vrot.lane.b32.xlu0 %v2126, 88
    %v2473 = vpop.permute.xlu0 %2472
    %v2474 = vsel %vm33, %v2471, 0
    %v2476 = vsel %vm33, %v2473, 0
    %2478 = vmatprep.subr.mxu0 0.0
    %2479 = vmatpush1.xpose.msra.mxu0 0.0
    %2480 = vmatprep.subr.mxu0 0.0
    %2481 = vmatpush1.xpose.msra.mxu0 0.0
    %2482 = vmatprep.subr.mxu0 0.0
    %2483 = vmatpush1.xpose.msra.mxu0 0.0
    %2484 = vmatprep.subr.mxu0 0.0
    %2485 = vmatpush1.xpose.msra.mxu0 0.0
    %2486 = vmatprep.subr.mxu0 0.0
    %2487 = vmatpush1.xpose.msra.mxu0 0.0
    %2488 = vmatprep.subr.mxu0 0.0
    %2489 = vmatpush1.xpose.msra.mxu0 0.0
    %2490 = vmatprep.subr.mxu0 0.0
    %2491 = vmatpush1.xpose.msra.mxu0 0.0
    %2492 = vmatprep.subr.mxu0 0.0
    %2493 = vmatpush1.xpose.msra.mxu0 0.0
    %2494 = vmatprep.subr.mxu0 0.0
    %2495 = vmatpush1.xpose.msra.mxu0 0.0
    %2496 = vmatprep.subr.mxu0 0.0
    %2497 = vmatpush1.xpose.msra.mxu0 0.0
    %2498 = vmatprep.subr.mxu0 0.0
    %2499 = vmatpush1.xpose.msra.mxu0 0.0
    %2500 = vmatprep.subr.mxu0 0.0
    %2501 = vmatpush1.xpose.msra.mxu0 0.0
    %2502 = vmatprep.subr.mxu0 0.0
    %2503 = vmatpush1.xpose.msra.mxu0 0.0
    %2504 = vmatprep.subr.mxu0 0.0
    %2505 = vmatpush1.xpose.msra.mxu0 0.0
    %2506 = vmatprep.subr.mxu0 0.0
    %2507 = vmatpush1.xpose.msra.mxu0 0.0
    %2508 = vmatprep.subr.mxu0 0.0
    %2509 = vmatpush1.xpose.msra.mxu0 %v2476
    %2510 = vmatprep.subr.mxu0 0.0
    %2511 = vmatpush2.xpose.msra.mxu0 0.0
    %2512 = vmatprep.subr.mxu0 0.0
    %2513 = vmatpush2.xpose.msra.mxu0 0.0
    %2514 = vmatprep.subr.mxu0 0.0
    %2515 = vmatpush2.xpose.msra.mxu0 0.0
    %2516 = vmatprep.subr.mxu0 0.0
    %2517 = vmatpush2.xpose.msra.mxu0 0.0
    %2518 = vmatprep.subr.mxu0 0.0
    %2519 = vmatpush2.xpose.msra.mxu0 0.0
    %2520 = vmatprep.subr.mxu0 0.0
    %2521 = vmatpush2.xpose.msra.mxu0 0.0
    %2522 = vmatprep.subr.mxu0 0.0
    %2523 = vmatpush2.xpose.msra.mxu0 0.0
    %2524 = vmatprep.subr.mxu0 0.0
    %2525 = vmatpush2.xpose.msra.mxu0 0.0
    %2526 = vmatprep.subr.mxu0 0.0
    %2527 = vmatpush2.xpose.msra.mxu0 0.0
    %2528 = vmatprep.subr.mxu0 0.0
    %2529 = vmatpush2.xpose.msra.mxu0 0.0
    %2530 = vmatprep.subr.mxu0 0.0
    %2531 = vmatpush2.xpose.msra.mxu0 0.0
    %2532 = vmatprep.subr.mxu0 0.0
    %2533 = vmatpush2.xpose.msra.mxu0 0.0
    %2534 = vmatprep.subr.mxu0 0.0
    %2535 = vmatpush2.xpose.msra.mxu0 0.0
    %2536 = vmatprep.subr.mxu0 0.0
    %2537 = vmatpush2.xpose.msra.mxu0 0.0
    %2538 = vmatprep.subr.mxu0 0.0
    %2539 = vmatpush2.xpose.msra.mxu0 0.0
    %2540 = vmatprep.subr.mxu0 0.0
    %2541 = vmatpush2.xpose.msra.mxu0 0.0
    %2542 = vmatprep.mubr.f32.mxu0 0.0
    %2543 = vmatmul.mubr.f32.gmra.mxu0 %v2474
    %v2544 = vpop.f32.mrf.mxu0
    %v2545 = vadd.f32 %v261, %v2544
    %v2546 = vpop.f32.mrf.mxu0
    %2547 = vdwg.mxu0
    %2548 = vrot.lane.b32.xlu0 %v2117, 120
    %v2549 = vpop.permute.xlu0 %2548
    %2550 = vrot.lane.b32.xlu0 %v2127, 88
    %v2551 = vpop.permute.xlu0 %2550
    %v2552 = vsel %vm33, %v2549, 0
    %v2554 = vsel %vm33, %v2551, 0
    %2556 = vmatprep.subr.mxu0 0.0
    %2557 = vmatpush1.xpose.msra.mxu0 0.0
    %2558 = vmatprep.subr.mxu0 0.0
    %2559 = vmatpush1.xpose.msra.mxu0 0.0
    %2560 = vmatprep.subr.mxu0 0.0
    %2561 = vmatpush1.xpose.msra.mxu0 0.0
    %2562 = vmatprep.subr.mxu0 0.0
    %2563 = vmatpush1.xpose.msra.mxu0 0.0
    %2564 = vmatprep.subr.mxu0 0.0
    %2565 = vmatpush1.xpose.msra.mxu0 0.0
    %2566 = vmatprep.subr.mxu0 0.0
    %2567 = vmatpush1.xpose.msra.mxu0 0.0
    %2568 = vmatprep.subr.mxu0 0.0
    %2569 = vmatpush1.xpose.msra.mxu0 0.0
    %2570 = vmatprep.subr.mxu0 0.0
    %2571 = vmatpush1.xpose.msra.mxu0 0.0
    %2572 = vmatprep.subr.mxu0 0.0
    %2573 = vmatpush1.xpose.msra.mxu0 0.0
    %2574 = vmatprep.subr.mxu0 0.0
    %2575 = vmatpush1.xpose.msra.mxu0 0.0
    %2576 = vmatprep.subr.mxu0 0.0
    %2577 = vmatpush1.xpose.msra.mxu0 0.0
    %2578 = vmatprep.subr.mxu0 0.0
    %2579 = vmatpush1.xpose.msra.mxu0 0.0
    %2580 = vmatprep.subr.mxu0 0.0
    %2581 = vmatpush1.xpose.msra.mxu0 0.0
    %2582 = vmatprep.subr.mxu0 0.0
    %2583 = vmatpush1.xpose.msra.mxu0 0.0
    %2584 = vmatprep.subr.mxu0 0.0
    %2585 = vmatpush1.xpose.msra.mxu0 0.0
    %2586 = vmatprep.subr.mxu0 0.0
    %2587 = vmatpush1.xpose.msra.mxu0 %v2554
    %2588 = vmatprep.subr.mxu0 0.0
    %2589 = vmatpush2.xpose.msra.mxu0 0.0
    %2590 = vmatprep.subr.mxu0 0.0
    %2591 = vmatpush2.xpose.msra.mxu0 0.0
    %2592 = vmatprep.subr.mxu0 0.0
    %2593 = vmatpush2.xpose.msra.mxu0 0.0
    %2594 = vmatprep.subr.mxu0 0.0
    %2595 = vmatpush2.xpose.msra.mxu0 0.0
    %2596 = vmatprep.subr.mxu0 0.0
    %2597 = vmatpush2.xpose.msra.mxu0 0.0
    %2598 = vmatprep.subr.mxu0 0.0
    %2599 = vmatpush2.xpose.msra.mxu0 0.0
    %2600 = vmatprep.subr.mxu0 0.0
    %2601 = vmatpush2.xpose.msra.mxu0 0.0
    %2602 = vmatprep.subr.mxu0 0.0
    %2603 = vmatpush2.xpose.msra.mxu0 0.0
    %2604 = vmatprep.subr.mxu0 0.0
    %2605 = vmatpush2.xpose.msra.mxu0 0.0
    %2606 = vmatprep.subr.mxu0 0.0
    %2607 = vmatpush2.xpose.msra.mxu0 0.0
    %2608 = vmatprep.subr.mxu0 0.0
    %2609 = vmatpush2.xpose.msra.mxu0 0.0
    %2610 = vmatprep.subr.mxu0 0.0
    %2611 = vmatpush2.xpose.msra.mxu0 0.0
    %2612 = vmatprep.subr.mxu0 0.0
    %2613 = vmatpush2.xpose.msra.mxu0 0.0
    %2614 = vmatprep.subr.mxu0 0.0
    %2615 = vmatpush2.xpose.msra.mxu0 0.0
    %2616 = vmatprep.subr.mxu0 0.0
    %2617 = vmatpush2.xpose.msra.mxu0 0.0
    %2618 = vmatprep.subr.mxu0 0.0
    %2619 = vmatpush2.xpose.msra.mxu0 0.0
    %2620 = vmatprep.mubr.f32.mxu0 0.0
    %2621 = vmatmul.mubr.f32.gmra.mxu0 %v2552
    %v2622 = vpop.f32.mrf.mxu0
    %v2623 = vadd.f32 %v265, %v2622
    %v2624 = vpop.f32.mrf.mxu0
    %2625 = vdwg.mxu0
    %v2626 = vsel %vm33, %v2545, -inf
    %2627 = vmax.xlane.f32.xlu0 %v2626
    %v2628 = vpop.xlane.xlu0 %2627
    %v2629 = vsel %vm33, %v2623, -inf
    %2630 = vmax.xlane.f32.xlu0 %v2629
    %v2631 = vpop.xlane.xlu0 %2630
    %v2632 = vsub.f32 %v2545, %v2628
    %v2633 = vsub.f32 %v2623, %v2631
    %v2634 = vmul.f32 %v2632, 1.442695
    %v2635 = vpow.pop %v2634
    %v2636 = vmul.f32 %v2633, 1.442695
    %v2637 = vpow.pop %v2636
    %v2638 = vsel %vm33, %v2635, 0.0
    %2639 = vadd.xlane.f32.xlu0 %v2638
    %v2640 = vpop.xlane.xlu0 %2639
    %v2641 = vsel %vm33, %v2637, 0.0
    %2642 = vadd.xlane.f32.xlu0 %v2641
    %v2643 = vpop.xlane.xlu0 %2642
    %v2644 = vrcp.pop %v2640
    %v2645 = vrcp.pop %v2643
    %v2646 = vmul.f32 %v2635, %v2644
    %v2647 = vmul.f32 %v2637, %v2645
    %2648 = vrot.lane.b32.xlu0 %v2136, 56
    %v2649 = vpop.permute.xlu0 %2648
    %v2652 = vsel %vm33, %v2646, 0
    %2654 = vmatprep.subr.mxu0 0.0
    %2655 = vmatpush1.msra.mxu0 0.0
    %2656 = vmatprep.subr.mxu0 0.0
    %2657 = vmatpush1.msra.mxu0 0.0
    %2658 = vmatprep.subr.mxu0 0.0
    %2659 = vmatpush1.msra.mxu0 0.0
    %2660 = vmatprep.subr.mxu0 0.0
    %2661 = vmatpush1.msra.mxu0 0.0
    %2662 = vmatprep.subr.mxu0 0.0
    %2663 = vmatpush1.msra.mxu0 0.0
    %2664 = vmatprep.subr.mxu0 0.0
    %2665 = vmatpush1.msra.mxu0 0.0
    %2666 = vmatprep.subr.mxu0 0.0
    %2667 = vmatpush1.msra.mxu0 0.0
    %2668 = vmatprep.subr.mxu0 0.0
    %2669 = vmatpush1.msra.mxu0 0.0
    %2670 = vmatprep.subr.mxu0 0.0
    %2671 = vmatpush1.msra.mxu0 0.0
    %2672 = vmatprep.subr.mxu0 0.0
    %2673 = vmatpush1.msra.mxu0 0.0
    %2674 = vmatprep.subr.mxu0 0.0
    %2675 = vmatpush1.msra.mxu0 0.0
    %2676 = vmatprep.subr.mxu0 0.0
    %2677 = vmatpush1.msra.mxu0 0.0
    %2678 = vmatprep.subr.mxu0 0.0
    %2679 = vmatpush1.msra.mxu0 0.0
    %2680 = vmatprep.subr.mxu0 0.0
    %2681 = vmatpush1.msra.mxu0 0.0
    %2682 = vmatprep.subr.mxu0 0.0
    %2683 = vmatpush1.msra.mxu0 0.0
    %2684 = vmatprep.subr.mxu0 0.0
    %2685 = vmatpush1.msra.mxu0 %v2649
    %2686 = vmatprep.subr.mxu0 0.0
    %2687 = vmatpush2.msra.mxu0 0.0
    %2688 = vmatprep.subr.mxu0 0.0
    %2689 = vmatpush2.msra.mxu0 0.0
    %2690 = vmatprep.subr.mxu0 0.0
    %2691 = vmatpush2.msra.mxu0 0.0
    %2692 = vmatprep.subr.mxu0 0.0
    %2693 = vmatpush2.msra.mxu0 0.0
    %2694 = vmatprep.subr.mxu0 0.0
    %2695 = vmatpush2.msra.mxu0 0.0
    %2696 = vmatprep.subr.mxu0 0.0
    %2697 = vmatpush2.msra.mxu0 0.0
    %2698 = vmatprep.subr.mxu0 0.0
    %2699 = vmatpush2.msra.mxu0 0.0
    %2700 = vmatprep.subr.mxu0 0.0
    %2701 = vmatpush2.msra.mxu0 0.0
    %2702 = vmatprep.subr.mxu0 0.0
    %2703 = vmatpush2.msra.mxu0 0.0
    %2704 = vmatprep.subr.mxu0 0.0
    %2705 = vmatpush2.msra.mxu0 0.0
    %2706 = vmatprep.subr.mxu0 0.0
    %2707 = vmatpush2.msra.mxu0 0.0
    %2708 = vmatprep.subr.mxu0 0.0
    %2709 = vmatpush2.msra.mxu0 0.0
    %2710 = vmatprep.subr.mxu0 0.0
    %2711 = vmatpush2.msra.mxu0 0.0
    %2712 = vmatprep.subr.mxu0 0.0
    %2713 = vmatpush2.msra.mxu0 0.0
    %2714 = vmatprep.subr.mxu0 0.0
    %2715 = vmatpush2.msra.mxu0 0.0
    %2716 = vmatprep.subr.mxu0 0.0
    %2717 = vmatpush2.msra.mxu0 0.0
    %2718 = vmatprep.mubr.f32.mxu0 0.0
    %2719 = vmatmul.mubr.f32.gmra.mxu0 %v2652
    %v2720 = vpop.f32.mrf.mxu0
    %v2721 = vadd.f32 0.0, %v2720
    %v2722 = vpop.f32.mrf.mxu0
    %2723 = vdwg.mxu0
    %2724 = vrot.lane.b32.xlu0 %v2137, 56
    %v2725 = vpop.permute.xlu0 %2724
    %v2728 = vsel %vm33, %v2647, 0
    %2730 = vmatprep.subr.mxu0 0.0
    %2731 = vmatpush1.msra.mxu0 0.0
    %2732 = vmatprep.subr.mxu0 0.0
    %2733 = vmatpush1.msra.mxu0 0.0
    %2734 = vmatprep.subr.mxu0 0.0
    %2735 = vmatpush1.msra.mxu0 0.0
    %2736 = vmatprep.subr.mxu0 0.0
    %2737 = vmatpush1.msra.mxu0 0.0
    %2738 = vmatprep.subr.mxu0 0.0
    %2739 = vmatpush1.msra.mxu0 0.0
    %2740 = vmatprep.subr.mxu0 0.0
    %2741 = vmatpush1.msra.mxu0 0.0
    %2742 = vmatprep.subr.mxu0 0.0
    %2743 = vmatpush1.msra.mxu0 0.0
    %2744 = vmatprep.subr.mxu0 0.0
    %2745 = vmatpush1.msra.mxu0 0.0
    %2746 = vmatprep.subr.mxu0 0.0
    %2747 = vmatpush1.msra.mxu0 0.0
    %2748 = vmatprep.subr.mxu0 0.0
    %2749 = vmatpush1.msra.mxu0 0.0
    %2750 = vmatprep.subr.mxu0 0.0
    %2751 = vmatpush1.msra.mxu0 0.0
    %2752 = vmatprep.subr.mxu0 0.0
    %2753 = vmatpush1.msra.mxu0 0.0
    %2754 = vmatprep.subr.mxu0 0.0
    %2755 = vmatpush1.msra.mxu0 0.0
    %2756 = vmatprep.subr.mxu0 0.0
    %2757 = vmatpush1.msra.mxu0 0.0
    %2758 = vmatprep.subr.mxu0 0.0
    %2759 = vmatpush1.msra.mxu0 0.0
    %2760 = vmatprep.subr.mxu0 0.0
    %2761 = vmatpush1.msra.mxu0 %v2725
    %2762 = vmatprep.subr.mxu0 0.0
    %2763 = vmatpush2.msra.mxu0 0.0
    %2764 = vmatprep.subr.mxu0 0.0
    %2765 = vmatpush2.msra.mxu0 0.0
    %2766 = vmatprep.subr.mxu0 0.0
    %2767 = vmatpush2.msra.mxu0 0.0
    %2768 = vmatprep.subr.mxu0 0.0
    %2769 = vmatpush2.msra.mxu0 0.0
    %2770 = vmatprep.subr.mxu0 0.0
    %2771 = vmatpush2.msra.mxu0 0.0
    %2772 = vmatprep.subr.mxu0 0.0
    %2773 = vmatpush2.msra.mxu0 0.0
    %2774 = vmatprep.subr.mxu0 0.0
    %2775 = vmatpush2.msra.mxu0 0.0
    %2776 = vmatprep.subr.mxu0 0.0
    %2777 = vmatpush2.msra.mxu0 0.0
    %2778 = vmatprep.subr.mxu0 0.0
    %2779 = vmatpush2.msra.mxu0 0.0
    %2780 = vmatprep.subr.mxu0 0.0
    %2781 = vmatpush2.msra.mxu0 0.0
    %2782 = vmatprep.subr.mxu0 0.0
    %2783 = vmatpush2.msra.mxu0 0.0
    %2784 = vmatprep.subr.mxu0 0.0
    %2785 = vmatpush2.msra.mxu0 0.0
    %2786 = vmatprep.subr.mxu0 0.0
    %2787 = vmatpush2.msra.mxu0 0.0
    %2788 = vmatprep.subr.mxu0 0.0
    %2789 = vmatpush2.msra.mxu0 0.0
    %2790 = vmatprep.subr.mxu0 0.0
    %2791 = vmatpush2.msra.mxu0 0.0
    %2792 = vmatprep.subr.mxu0 0.0
    %2793 = vmatpush2.msra.mxu0 0.0
    %2794 = vmatprep.mubr.f32.mxu0 0.0
    %2795 = vmatmul.mubr.f32.gmra.mxu0 %v2728
    %v2796 = vpop.f32.mrf.mxu0
    %v2797 = vadd.f32 0.0, %v2796
    %v2798 = vpop.f32.mrf.mxu0
    %2799 = vdwg.mxu0
    %2800 = vrot.lane.b32.xlu0 %v2116, 112
    %v2801 = vpop.permute.xlu0 %2800
    %2802 = vrot.lane.b32.xlu0 %v2126, 80
    %v2803 = vpop.permute.xlu0 %2802
    %v2804 = vsel %vm33, %v2801, 0
    %v2806 = vsel %vm33, %v2803, 0
    %2808 = vmatprep.subr.mxu0 0.0
    %2809 = vmatpush1.xpose.msra.mxu0 0.0
    %2810 = vmatprep.subr.mxu0 0.0
    %2811 = vmatpush1.xpose.msra.mxu0 0.0
    %2812 = vmatprep.subr.mxu0 0.0
    %2813 = vmatpush1.xpose.msra.mxu0 0.0
    %2814 = vmatprep.subr.mxu0 0.0
    %2815 = vmatpush1.xpose.msra.mxu0 0.0
    %2816 = vmatprep.subr.mxu0 0.0
    %2817 = vmatpush1.xpose.msra.mxu0 0.0
    %2818 = vmatprep.subr.mxu0 0.0
    %2819 = vmatpush1.xpose.msra.mxu0 0.0
    %2820 = vmatprep.subr.mxu0 0.0
    %2821 = vmatpush1.xpose.msra.mxu0 0.0
    %2822 = vmatprep.subr.mxu0 0.0
    %2823 = vmatpush1.xpose.msra.mxu0 0.0
    %2824 = vmatprep.subr.mxu0 0.0
    %2825 = vmatpush1.xpose.msra.mxu0 0.0
    %2826 = vmatprep.subr.mxu0 0.0
    %2827 = vmatpush1.xpose.msra.mxu0 0.0
    %2828 = vmatprep.subr.mxu0 0.0
    %2829 = vmatpush1.xpose.msra.mxu0 0.0
    %2830 = vmatprep.subr.mxu0 0.0
    %2831 = vmatpush1.xpose.msra.mxu0 0.0
    %2832 = vmatprep.subr.mxu0 0.0
    %2833 = vmatpush1.xpose.msra.mxu0 0.0
    %2834 = vmatprep.subr.mxu0 0.0
    %2835 = vmatpush1.xpose.msra.mxu0 0.0
    %2836 = vmatprep.subr.mxu0 0.0
    %2837 = vmatpush1.xpose.msra.mxu0 0.0
    %2838 = vmatprep.subr.mxu0 0.0
    %2839 = vmatpush1.xpose.msra.mxu0 %v2806
    %2840 = vmatprep.subr.mxu0 0.0
    %2841 = vmatpush2.xpose.msra.mxu0 0.0
    %2842 = vmatprep.subr.mxu0 0.0
    %2843 = vmatpush2.xpose.msra.mxu0 0.0
    %2844 = vmatprep.subr.mxu0 0.0
    %2845 = vmatpush2.xpose.msra.mxu0 0.0
    %2846 = vmatprep.subr.mxu0 0.0
    %2847 = vmatpush2.xpose.msra.mxu0 0.0
    %2848 = vmatprep.subr.mxu0 0.0
    %2849 = vmatpush2.xpose.msra.mxu0 0.0
    %2850 = vmatprep.subr.mxu0 0.0
    %2851 = vmatpush2.xpose.msra.mxu0 0.0
    %2852 = vmatprep.subr.mxu0 0.0
    %2853 = vmatpush2.xpose.msra.mxu0 0.0
    %2854 = vmatprep.subr.mxu0 0.0
    %2855 = vmatpush2.xpose.msra.mxu0 0.0
    %2856 = vmatprep.subr.mxu0 0.0
    %2857 = vmatpush2.xpose.msra.mxu0 0.0
    %2858 = vmatprep.subr.mxu0 0.0
    %2859 = vmatpush2.xpose.msra.mxu0 0.0
    %2860 = vmatprep.subr.mxu0 0.0
    %2861 = vmatpush2.xpose.msra.mxu0 0.0
    %2862 = vmatprep.subr.mxu0 0.0
    %2863 = vmatpush2.xpose.msra.mxu0 0.0
    %2864 = vmatprep.subr.mxu0 0.0
    %2865 = vmatpush2.xpose.msra.mxu0 0.0
    %2866 = vmatprep.subr.mxu0 0.0
    %2867 = vmatpush2.xpose.msra.mxu0 0.0
    %2868 = vmatprep.subr.mxu0 0.0
    %2869 = vmatpush2.xpose.msra.mxu0 0.0
    %2870 = vmatprep.subr.mxu0 0.0
    %2871 = vmatpush2.xpose.msra.mxu0 0.0
    %2872 = vmatprep.mubr.f32.mxu0 0.0
    %2873 = vmatmul.mubr.f32.gmra.mxu0 %v2804
    %v2874 = vpop.f32.mrf.mxu0
    %v2875 = vadd.f32 %v261, %v2874
    %v2876 = vpop.f32.mrf.mxu0
    %2877 = vdwg.mxu0
    %2878 = vrot.lane.b32.xlu0 %v2117, 112
    %v2879 = vpop.permute.xlu0 %2878
    %2880 = vrot.lane.b32.xlu0 %v2127, 80
    %v2881 = vpop.permute.xlu0 %2880
    %v2882 = vsel %vm33, %v2879, 0
    %v2884 = vsel %vm33, %v2881, 0
    %2886 = vmatprep.subr.mxu0 0.0
    %2887 = vmatpush1.xpose.msra.mxu0 0.0
    %2888 = vmatprep.subr.mxu0 0.0
    %2889 = vmatpush1.xpose.msra.mxu0 0.0
    %2890 = vmatprep.subr.mxu0 0.0
    %2891 = vmatpush1.xpose.msra.mxu0 0.0
    %2892 = vmatprep.subr.mxu0 0.0
    %2893 = vmatpush1.xpose.msra.mxu0 0.0
    %2894 = vmatprep.subr.mxu0 0.0
    %2895 = vmatpush1.xpose.msra.mxu0 0.0
    %2896 = vmatprep.subr.mxu0 0.0
    %2897 = vmatpush1.xpose.msra.mxu0 0.0
    %2898 = vmatprep.subr.mxu0 0.0
    %2899 = vmatpush1.xpose.msra.mxu0 0.0
    %2900 = vmatprep.subr.mxu0 0.0
    %2901 = vmatpush1.xpose.msra.mxu0 0.0
    %2902 = vmatprep.subr.mxu0 0.0
    %2903 = vmatpush1.xpose.msra.mxu0 0.0
    %2904 = vmatprep.subr.mxu0 0.0
    %2905 = vmatpush1.xpose.msra.mxu0 0.0
    %2906 = vmatprep.subr.mxu0 0.0
    %2907 = vmatpush1.xpose.msra.mxu0 0.0
    %2908 = vmatprep.subr.mxu0 0.0
    %2909 = vmatpush1.xpose.msra.mxu0 0.0
    %2910 = vmatprep.subr.mxu0 0.0
    %2911 = vmatpush1.xpose.msra.mxu0 0.0
    %2912 = vmatprep.subr.mxu0 0.0
    %2913 = vmatpush1.xpose.msra.mxu0 0.0
    %2914 = vmatprep.subr.mxu0 0.0
    %2915 = vmatpush1.xpose.msra.mxu0 0.0
    %2916 = vmatprep.subr.mxu0 0.0
    %2917 = vmatpush1.xpose.msra.mxu0 %v2884
    %2918 = vmatprep.subr.mxu0 0.0
    %2919 = vmatpush2.xpose.msra.mxu0 0.0
    %2920 = vmatprep.subr.mxu0 0.0
    %2921 = vmatpush2.xpose.msra.mxu0 0.0
    %2922 = vmatprep.subr.mxu0 0.0
    %2923 = vmatpush2.xpose.msra.mxu0 0.0
    %2924 = vmatprep.subr.mxu0 0.0
    %2925 = vmatpush2.xpose.msra.mxu0 0.0
    %2926 = vmatprep.subr.mxu0 0.0
    %2927 = vmatpush2.xpose.msra.mxu0 0.0
    %2928 = vmatprep.subr.mxu0 0.0
    %2929 = vmatpush2.xpose.msra.mxu0 0.0
    %2930 = vmatprep.subr.mxu0 0.0
    %2931 = vmatpush2.xpose.msra.mxu0 0.0
    %2932 = vmatprep.subr.mxu0 0.0
    %2933 = vmatpush2.xpose.msra.mxu0 0.0
    %2934 = vmatprep.subr.mxu0 0.0
    %2935 = vmatpush2.xpose.msra.mxu0 0.0
    %2936 = vmatprep.subr.mxu0 0.0
    %2937 = vmatpush2.xpose.msra.mxu0 0.0
    %2938 = vmatprep.subr.mxu0 0.0
    %2939 = vmatpush2.xpose.msra.mxu0 0.0
    %2940 = vmatprep.subr.mxu0 0.0
    %2941 = vmatpush2.xpose.msra.mxu0 0.0
    %2942 = vmatprep.subr.mxu0 0.0
    %2943 = vmatpush2.xpose.msra.mxu0 0.0
    %2944 = vmatprep.subr.mxu0 0.0
    %2945 = vmatpush2.xpose.msra.mxu0 0.0
    %2946 = vmatprep.subr.mxu0 0.0
    %2947 = vmatpush2.xpose.msra.mxu0 0.0
    %2948 = vmatprep.subr.mxu0 0.0
    %2949 = vmatpush2.xpose.msra.mxu0 0.0
    %2950 = vmatprep.mubr.f32.mxu0 0.0
    %2951 = vmatmul.mubr.f32.gmra.mxu0 %v2882
    %v2952 = vpop.f32.mrf.mxu0
    %v2953 = vadd.f32 %v265, %v2952
    %v2954 = vpop.f32.mrf.mxu0
    %2955 = vdwg.mxu0
    %v2956 = vsel %vm33, %v2875, -inf
    %2957 = vmax.xlane.f32.xlu0 %v2956
    %v2958 = vpop.xlane.xlu0 %2957
    %v2959 = vsel %vm33, %v2953, -inf
    %2960 = vmax.xlane.f32.xlu0 %v2959
    %v2961 = vpop.xlane.xlu0 %2960
    %v2962 = vsub.f32 %v2875, %v2958
    %v2963 = vsub.f32 %v2953, %v2961
    %v2964 = vmul.f32 %v2962, 1.442695
    %v2965 = vpow.pop %v2964
    %v2966 = vmul.f32 %v2963, 1.442695
    %v2967 = vpow.pop %v2966
    %v2968 = vsel %vm33, %v2965, 0.0
    %2969 = vadd.xlane.f32.xlu0 %v2968
    %v2970 = vpop.xlane.xlu0 %2969
    %v2971 = vsel %vm33, %v2967, 0.0
    %2972 = vadd.xlane.f32.xlu0 %v2971
    %v2973 = vpop.xlane.xlu0 %2972
    %v2974 = vrcp.pop %v2970
    %v2975 = vrcp.pop %v2973
    %v2976 = vmul.f32 %v2965, %v2974
    %v2977 = vmul.f32 %v2967, %v2975
    %2978 = vrot.lane.b32.xlu0 %v2136, 48
    %v2979 = vpop.permute.xlu0 %2978
    %v2982 = vsel %vm33, %v2976, 0
    %2984 = vmatprep.subr.mxu0 0.0
    %2985 = vmatpush1.msra.mxu0 0.0
    %2986 = vmatprep.subr.mxu0 0.0
    %2987 = vmatpush1.msra.mxu0 0.0
    %2988 = vmatprep.subr.mxu0 0.0
    %2989 = vmatpush1.msra.mxu0 0.0
    %2990 = vmatprep.subr.mxu0 0.0
    %2991 = vmatpush1.msra.mxu0 0.0
    %2992 = vmatprep.subr.mxu0 0.0
    %2993 = vmatpush1.msra.mxu0 0.0
    %2994 = vmatprep.subr.mxu0 0.0
    %2995 = vmatpush1.msra.mxu0 0.0
    %2996 = vmatprep.subr.mxu0 0.0
    %2997 = vmatpush1.msra.mxu0 0.0
    %2998 = vmatprep.subr.mxu0 0.0
    %2999 = vmatpush1.msra.mxu0 0.0
    %3000 = vmatprep.subr.mxu0 0.0
    %3001 = vmatpush1.msra.mxu0 0.0
    %3002 = vmatprep.subr.mxu0 0.0
    %3003 = vmatpush1.msra.mxu0 0.0
    %3004 = vmatprep.subr.mxu0 0.0
    %3005 = vmatpush1.msra.mxu0 0.0
    %3006 = vmatprep.subr.mxu0 0.0
    %3007 = vmatpush1.msra.mxu0 0.0
    %3008 = vmatprep.subr.mxu0 0.0
    %3009 = vmatpush1.msra.mxu0 0.0
    %3010 = vmatprep.subr.mxu0 0.0
    %3011 = vmatpush1.msra.mxu0 0.0
    %3012 = vmatprep.subr.mxu0 0.0
    %3013 = vmatpush1.msra.mxu0 0.0
    %3014 = vmatprep.subr.mxu0 0.0
    %3015 = vmatpush1.msra.mxu0 %v2979
    %3016 = vmatprep.subr.mxu0 0.0
    %3017 = vmatpush2.msra.mxu0 0.0
    %3018 = vmatprep.subr.mxu0 0.0
    %3019 = vmatpush2.msra.mxu0 0.0
    %3020 = vmatprep.subr.mxu0 0.0
    %3021 = vmatpush2.msra.mxu0 0.0
    %3022 = vmatprep.subr.mxu0 0.0
    %3023 = vmatpush2.msra.mxu0 0.0
    %3024 = vmatprep.subr.mxu0 0.0
    %3025 = vmatpush2.msra.mxu0 0.0
    %3026 = vmatprep.subr.mxu0 0.0
    %3027 = vmatpush2.msra.mxu0 0.0
    %3028 = vmatprep.subr.mxu0 0.0
    %3029 = vmatpush2.msra.mxu0 0.0
    %3030 = vmatprep.subr.mxu0 0.0
    %3031 = vmatpush2.msra.mxu0 0.0
    %3032 = vmatprep.subr.mxu0 0.0
    %3033 = vmatpush2.msra.mxu0 0.0
    %3034 = vmatprep.subr.mxu0 0.0
    %3035 = vmatpush2.msra.mxu0 0.0
    %3036 = vmatprep.subr.mxu0 0.0
    %3037 = vmatpush2.msra.mxu0 0.0
    %3038 = vmatprep.subr.mxu0 0.0
    %3039 = vmatpush2.msra.mxu0 0.0
    %3040 = vmatprep.subr.mxu0 0.0
    %3041 = vmatpush2.msra.mxu0 0.0
    %3042 = vmatprep.subr.mxu0 0.0
    %3043 = vmatpush2.msra.mxu0 0.0
    %3044 = vmatprep.subr.mxu0 0.0
    %3045 = vmatpush2.msra.mxu0 0.0
    %3046 = vmatprep.subr.mxu0 0.0
    %3047 = vmatpush2.msra.mxu0 0.0
    %3048 = vmatprep.mubr.f32.mxu0 0.0
    %3049 = vmatmul.mubr.f32.gmra.mxu0 %v2982
    %v3050 = vpop.f32.mrf.mxu0
    %v3051 = vadd.f32 0.0, %v3050
    %v3052 = vpop.f32.mrf.mxu0
    %3053 = vdwg.mxu0
    %3054 = vrot.lane.b32.xlu0 %v2137, 48
    %v3055 = vpop.permute.xlu0 %3054
    %v3058 = vsel %vm33, %v2977, 0
    %3060 = vmatprep.subr.mxu0 0.0
    %3061 = vmatpush1.msra.mxu0 0.0
    %3062 = vmatprep.subr.mxu0 0.0
    %3063 = vmatpush1.msra.mxu0 0.0
    %3064 = vmatprep.subr.mxu0 0.0
    %3065 = vmatpush1.msra.mxu0 0.0
    %3066 = vmatprep.subr.mxu0 0.0
    %3067 = vmatpush1.msra.mxu0 0.0
    %3068 = vmatprep.subr.mxu0 0.0
    %3069 = vmatpush1.msra.mxu0 0.0
    %3070 = vmatprep.subr.mxu0 0.0
    %3071 = vmatpush1.msra.mxu0 0.0
    %3072 = vmatprep.subr.mxu0 0.0
    %3073 = vmatpush1.msra.mxu0 0.0
    %3074 = vmatprep.subr.mxu0 0.0
    %3075 = vmatpush1.msra.mxu0 0.0
    %3076 = vmatprep.subr.mxu0 0.0
    %3077 = vmatpush1.msra.mxu0 0.0
    %3078 = vmatprep.subr.mxu0 0.0
    %3079 = vmatpush1.msra.mxu0 0.0
    %3080 = vmatprep.subr.mxu0 0.0
    %3081 = vmatpush1.msra.mxu0 0.0
    %3082 = vmatprep.subr.mxu0 0.0
    %3083 = vmatpush1.msra.mxu0 0.0
    %3084 = vmatprep.subr.mxu0 0.0
    %3085 = vmatpush1.msra.mxu0 0.0
    %3086 = vmatprep.subr.mxu0 0.0
    %3087 = vmatpush1.msra.mxu0 0.0
    %3088 = vmatprep.subr.mxu0 0.0
    %3089 = vmatpush1.msra.mxu0 0.0
    %3090 = vmatprep.subr.mxu0 0.0
    %3091 = vmatpush1.msra.mxu0 %v3055
    %3092 = vmatprep.subr.mxu0 0.0
    %3093 = vmatpush2.msra.mxu0 0.0
    %3094 = vmatprep.subr.mxu0 0.0
    %3095 = vmatpush2.msra.mxu0 0.0
    %3096 = vmatprep.subr.mxu0 0.0
    %3097 = vmatpush2.msra.mxu0 0.0
    %3098 = vmatprep.subr.mxu0 0.0
    %3099 = vmatpush2.msra.mxu0 0.0
    %3100 = vmatprep.subr.mxu0 0.0
    %3101 = vmatpush2.msra.mxu0 0.0
    %3102 = vmatprep.subr.mxu0 0.0
    %3103 = vmatpush2.msra.mxu0 0.0
    %3104 = vmatprep.subr.mxu0 0.0
    %3105 = vmatpush2.msra.mxu0 0.0
    %3106 = vmatprep.subr.mxu0 0.0
    %3107 = vmatpush2.msra.mxu0 0.0
    %3108 = vmatprep.subr.mxu0 0.0
    %3109 = vmatpush2.msra.mxu0 0.0
    %3110 = vmatprep.subr.mxu0 0.0
    %3111 = vmatpush2.msra.mxu0 0.0
    %3112 = vmatprep.subr.mxu0 0.0
    %3113 = vmatpush2.msra.mxu0 0.0
    %3114 = vmatprep.subr.mxu0 0.0
    %3115 = vmatpush2.msra.mxu0 0.0
    %3116 = vmatprep.subr.mxu0 0.0
    %3117 = vmatpush2.msra.mxu0 0.0
    %3118 = vmatprep.subr.mxu0 0.0
    %3119 = vmatpush2.msra.mxu0 0.0
    %3120 = vmatprep.subr.mxu0 0.0
    %3121 = vmatpush2.msra.mxu0 0.0
    %3122 = vmatprep.subr.mxu0 0.0
    %3123 = vmatpush2.msra.mxu0 0.0
    %3124 = vmatprep.mubr.f32.mxu0 0.0
    %3125 = vmatmul.mubr.f32.gmra.mxu0 %v3058
    %v3126 = vpop.f32.mrf.mxu0
    %v3127 = vadd.f32 0.0, %v3126
    %v3128 = vpop.f32.mrf.mxu0
    %3129 = vdwg.mxu0
    %3130 = vrot.lane.b32.xlu0 %v2116, 104
    %v3131 = vpop.permute.xlu0 %3130
    %3132 = vrot.lane.b32.xlu0 %v2126, 72
    %v3133 = vpop.permute.xlu0 %3132
    %v3134 = vsel %vm33, %v3131, 0
    %v3136 = vsel %vm33, %v3133, 0
    %3138 = vmatprep.subr.mxu0 0.0
    %3139 = vmatpush1.xpose.msra.mxu0 0.0
    %3140 = vmatprep.subr.mxu0 0.0
    %3141 = vmatpush1.xpose.msra.mxu0 0.0
    %3142 = vmatprep.subr.mxu0 0.0
    %3143 = vmatpush1.xpose.msra.mxu0 0.0
    %3144 = vmatprep.subr.mxu0 0.0
    %3145 = vmatpush1.xpose.msra.mxu0 0.0
    %3146 = vmatprep.subr.mxu0 0.0
    %3147 = vmatpush1.xpose.msra.mxu0 0.0
    %3148 = vmatprep.subr.mxu0 0.0
    %3149 = vmatpush1.xpose.msra.mxu0 0.0
    %3150 = vmatprep.subr.mxu0 0.0
    %3151 = vmatpush1.xpose.msra.mxu0 0.0
    %3152 = vmatprep.subr.mxu0 0.0
    %3153 = vmatpush1.xpose.msra.mxu0 0.0
    %3154 = vmatprep.subr.mxu0 0.0
    %3155 = vmatpush1.xpose.msra.mxu0 0.0
    %3156 = vmatprep.subr.mxu0 0.0
    %3157 = vmatpush1.xpose.msra.mxu0 0.0
    %3158 = vmatprep.subr.mxu0 0.0
    %3159 = vmatpush1.xpose.msra.mxu0 0.0
    %3160 = vmatprep.subr.mxu0 0.0
    %3161 = vmatpush1.xpose.msra.mxu0 0.0
    %3162 = vmatprep.subr.mxu0 0.0
    %3163 = vmatpush1.xpose.msra.mxu0 0.0
    %3164 = vmatprep.subr.mxu0 0.0
    %3165 = vmatpush1.xpose.msra.mxu0 0.0
    %3166 = vmatprep.subr.mxu0 0.0
    %3167 = vmatpush1.xpose.msra.mxu0 0.0
    %3168 = vmatprep.subr.mxu0 0.0
    %3169 = vmatpush1.xpose.msra.mxu0 %v3136
    %3170 = vmatprep.subr.mxu0 0.0
    %3171 = vmatpush2.xpose.msra.mxu0 0.0
    %3172 = vmatprep.subr.mxu0 0.0
    %3173 = vmatpush2.xpose.msra.mxu0 0.0
    %3174 = vmatprep.subr.mxu0 0.0
    %3175 = vmatpush2.xpose.msra.mxu0 0.0
    %3176 = vmatprep.subr.mxu0 0.0
    %3177 = vmatpush2.xpose.msra.mxu0 0.0
    %3178 = vmatprep.subr.mxu0 0.0
    %3179 = vmatpush2.xpose.msra.mxu0 0.0
    %3180 = vmatprep.subr.mxu0 0.0
    %3181 = vmatpush2.xpose.msra.mxu0 0.0
    %3182 = vmatprep.subr.mxu0 0.0
    %3183 = vmatpush2.xpose.msra.mxu0 0.0
    %3184 = vmatprep.subr.mxu0 0.0
    %3185 = vmatpush2.xpose.msra.mxu0 0.0
    %3186 = vmatprep.subr.mxu0 0.0
    %3187 = vmatpush2.xpose.msra.mxu0 0.0
    %3188 = vmatprep.subr.mxu0 0.0
    %3189 = vmatpush2.xpose.msra.mxu0 0.0
    %3190 = vmatprep.subr.mxu0 0.0
    %3191 = vmatpush2.xpose.msra.mxu0 0.0
    %3192 = vmatprep.subr.mxu0 0.0
    %3193 = vmatpush2.xpose.msra.mxu0 0.0
    %3194 = vmatprep.subr.mxu0 0.0
    %3195 = vmatpush2.xpose.msra.mxu0 0.0
    %3196 = vmatprep.subr.mxu0 0.0
    %3197 = vmatpush2.xpose.msra.mxu0 0.0
    %3198 = vmatprep.subr.mxu0 0.0
    %3199 = vmatpush2.xpose.msra.mxu0 0.0
    %3200 = vmatprep.subr.mxu0 0.0
    %3201 = vmatpush2.xpose.msra.mxu0 0.0
    %3202 = vmatprep.mubr.f32.mxu0 0.0
    %3203 = vmatmul.mubr.f32.gmra.mxu0 %v3134
    %v3204 = vpop.f32.mrf.mxu0
    %v3205 = vadd.f32 %v261, %v3204
    %v3206 = vpop.f32.mrf.mxu0
    %3207 = vdwg.mxu0
    %3208 = vrot.lane.b32.xlu0 %v2117, 104
    %v3209 = vpop.permute.xlu0 %3208
    %3210 = vrot.lane.b32.xlu0 %v2127, 72
    %v3211 = vpop.permute.xlu0 %3210
    %v3212 = vsel %vm33, %v3209, 0
    %v3214 = vsel %vm33, %v3211, 0
    %3216 = vmatprep.subr.mxu0 0.0
    %3217 = vmatpush1.xpose.msra.mxu0 0.0
    %3218 = vmatprep.subr.mxu0 0.0
    %3219 = vmatpush1.xpose.msra.mxu0 0.0
    %3220 = vmatprep.subr.mxu0 0.0
    %3221 = vmatpush1.xpose.msra.mxu0 0.0
    %3222 = vmatprep.subr.mxu0 0.0
    %3223 = vmatpush1.xpose.msra.mxu0 0.0
    %3224 = vmatprep.subr.mxu0 0.0
    %3225 = vmatpush1.xpose.msra.mxu0 0.0
    %3226 = vmatprep.subr.mxu0 0.0
    %3227 = vmatpush1.xpose.msra.mxu0 0.0
    %3228 = vmatprep.subr.mxu0 0.0
    %3229 = vmatpush1.xpose.msra.mxu0 0.0
    %3230 = vmatprep.subr.mxu0 0.0
    %3231 = vmatpush1.xpose.msra.mxu0 0.0
    %3232 = vmatprep.subr.mxu0 0.0
    %3233 = vmatpush1.xpose.msra.mxu0 0.0
    %3234 = vmatprep.subr.mxu0 0.0
    %3235 = vmatpush1.xpose.msra.mxu0 0.0
    %3236 = vmatprep.subr.mxu0 0.0
    %3237 = vmatpush1.xpose.msra.mxu0 0.0
    %3238 = vmatprep.subr.mxu0 0.0
    %3239 = vmatpush1.xpose.msra.mxu0 0.0
    %3240 = vmatprep.subr.mxu0 0.0
    %3241 = vmatpush1.xpose.msra.mxu0 0.0
    %3242 = vmatprep.subr.mxu0 0.0
    %3243 = vmatpush1.xpose.msra.mxu0 0.0
    %3244 = vmatprep.subr.mxu0 0.0
    %3245 = vmatpush1.xpose.msra.mxu0 0.0
    %3246 = vmatprep.subr.mxu0 0.0
    %3247 = vmatpush1.xpose.msra.mxu0 %v3214
    %3248 = vmatprep.subr.mxu0 0.0
    %3249 = vmatpush2.xpose.msra.mxu0 0.0
    %3250 = vmatprep.subr.mxu0 0.0
    %3251 = vmatpush2.xpose.msra.mxu0 0.0
    %3252 = vmatprep.subr.mxu0 0.0
    %3253 = vmatpush2.xpose.msra.mxu0 0.0
    %3254 = vmatprep.subr.mxu0 0.0
    %3255 = vmatpush2.xpose.msra.mxu0 0.0
    %3256 = vmatprep.subr.mxu0 0.0
    %3257 = vmatpush2.xpose.msra.mxu0 0.0
    %3258 = vmatprep.subr.mxu0 0.0
    %3259 = vmatpush2.xpose.msra.mxu0 0.0
    %3260 = vmatprep.subr.mxu0 0.0
    %3261 = vmatpush2.xpose.msra.mxu0 0.0
    %3262 = vmatprep.subr.mxu0 0.0
    %3263 = vmatpush2.xpose.msra.mxu0 0.0
    %3264 = vmatprep.subr.mxu0 0.0
    %3265 = vmatpush2.xpose.msra.mxu0 0.0
    %3266 = vmatprep.subr.mxu0 0.0
    %3267 = vmatpush2.xpose.msra.mxu0 0.0
    %3268 = vmatprep.subr.mxu0 0.0
    %3269 = vmatpush2.xpose.msra.mxu0 0.0
    %3270 = vmatprep.subr.mxu0 0.0
    %3271 = vmatpush2.xpose.msra.mxu0 0.0
    %3272 = vmatprep.subr.mxu0 0.0
    %3273 = vmatpush2.xpose.msra.mxu0 0.0
    %3274 = vmatprep.subr.mxu0 0.0
    %3275 = vmatpush2.xpose.msra.mxu0 0.0
    %3276 = vmatprep.subr.mxu0 0.0
    %3277 = vmatpush2.xpose.msra.mxu0 0.0
    %3278 = vmatprep.subr.mxu0 0.0
    %3279 = vmatpush2.xpose.msra.mxu0 0.0
    %3280 = vmatprep.mubr.f32.mxu0 0.0
    %3281 = vmatmul.mubr.f32.gmra.mxu0 %v3212
    %v3282 = vpop.f32.mrf.mxu0
    %v3283 = vadd.f32 %v265, %v3282
    %v3284 = vpop.f32.mrf.mxu0
    %3285 = vdwg.mxu0
    %v3286 = vsel %vm33, %v3205, -inf
    %3287 = vmax.xlane.f32.xlu0 %v3286
    %v3288 = vpop.xlane.xlu0 %3287
    %v3289 = vsel %vm33, %v3283, -inf
    %3290 = vmax.xlane.f32.xlu0 %v3289
    %v3291 = vpop.xlane.xlu0 %3290
    %v3292 = vsub.f32 %v3205, %v3288
    %v3293 = vsub.f32 %v3283, %v3291
    %v3294 = vmul.f32 %v3292, 1.442695
    %v3295 = vpow.pop %v3294
    %v3296 = vmul.f32 %v3293, 1.442695
    %v3297 = vpow.pop %v3296
    %v3298 = vsel %vm33, %v3295, 0.0
    %3299 = vadd.xlane.f32.xlu0 %v3298
    %v3300 = vpop.xlane.xlu0 %3299
    %v3301 = vsel %vm33, %v3297, 0.0
    %3302 = vadd.xlane.f32.xlu0 %v3301
    %v3303 = vpop.xlane.xlu0 %3302
    %v3304 = vrcp.pop %v3300
    %v3305 = vrcp.pop %v3303
    %v3306 = vmul.f32 %v3295, %v3304
    %v3307 = vmul.f32 %v3297, %v3305
    %3308 = vrot.lane.b32.xlu0 %v2136, 40
    %v3309 = vpop.permute.xlu0 %3308
    %v3312 = vsel %vm33, %v3306, 0
    %3314 = vmatprep.subr.mxu0 0.0
    %3315 = vmatpush1.msra.mxu0 0.0
    %3316 = vmatprep.subr.mxu0 0.0
    %3317 = vmatpush1.msra.mxu0 0.0
    %3318 = vmatprep.subr.mxu0 0.0
    %3319 = vmatpush1.msra.mxu0 0.0
    %3320 = vmatprep.subr.mxu0 0.0
    %3321 = vmatpush1.msra.mxu0 0.0
    %3322 = vmatprep.subr.mxu0 0.0
    %3323 = vmatpush1.msra.mxu0 0.0
    %3324 = vmatprep.subr.mxu0 0.0
    %3325 = vmatpush1.msra.mxu0 0.0
    %3326 = vmatprep.subr.mxu0 0.0
    %3327 = vmatpush1.msra.mxu0 0.0
    %3328 = vmatprep.subr.mxu0 0.0
    %3329 = vmatpush1.msra.mxu0 0.0
    %3330 = vmatprep.subr.mxu0 0.0
    %3331 = vmatpush1.msra.mxu0 0.0
    %3332 = vmatprep.subr.mxu0 0.0
    %3333 = vmatpush1.msra.mxu0 0.0
    %3334 = vmatprep.subr.mxu0 0.0
    %3335 = vmatpush1.msra.mxu0 0.0
    %3336 = vmatprep.subr.mxu0 0.0
    %3337 = vmatpush1.msra.mxu0 0.0
    %3338 = vmatprep.subr.mxu0 0.0
    %3339 = vmatpush1.msra.mxu0 0.0
    %3340 = vmatprep.subr.mxu0 0.0
    %3341 = vmatpush1.msra.mxu0 0.0
    %3342 = vmatprep.subr.mxu0 0.0
    %3343 = vmatpush1.msra.mxu0 0.0
    %3344 = vmatprep.subr.mxu0 0.0
    %3345 = vmatpush1.msra.mxu0 %v3309
    %3346 = vmatprep.subr.mxu0 0.0
    %3347 = vmatpush2.msra.mxu0 0.0
    %3348 = vmatprep.subr.mxu0 0.0
    %3349 = vmatpush2.msra.mxu0 0.0
    %3350 = vmatprep.subr.mxu0 0.0
    %3351 = vmatpush2.msra.mxu0 0.0
    %3352 = vmatprep.subr.mxu0 0.0
    %3353 = vmatpush2.msra.mxu0 0.0
    %3354 = vmatprep.subr.mxu0 0.0
    %3355 = vmatpush2.msra.mxu0 0.0
    %3356 = vmatprep.subr.mxu0 0.0
    %3357 = vmatpush2.msra.mxu0 0.0
    %3358 = vmatprep.subr.mxu0 0.0
    %3359 = vmatpush2.msra.mxu0 0.0
    %3360 = vmatprep.subr.mxu0 0.0
    %3361 = vmatpush2.msra.mxu0 0.0
    %3362 = vmatprep.subr.mxu0 0.0
    %3363 = vmatpush2.msra.mxu0 0.0
    %3364 = vmatprep.subr.mxu0 0.0
    %3365 = vmatpush2.msra.mxu0 0.0
    %3366 = vmatprep.subr.mxu0 0.0
    %3367 = vmatpush2.msra.mxu0 0.0
    %3368 = vmatprep.subr.mxu0 0.0
    %3369 = vmatpush2.msra.mxu0 0.0
    %3370 = vmatprep.subr.mxu0 0.0
    %3371 = vmatpush2.msra.mxu0 0.0
    %3372 = vmatprep.subr.mxu0 0.0
    %3373 = vmatpush2.msra.mxu0 0.0
    %3374 = vmatprep.subr.mxu0 0.0
    %3375 = vmatpush2.msra.mxu0 0.0
    %3376 = vmatprep.subr.mxu0 0.0
    %3377 = vmatpush2.msra.mxu0 0.0
    %3378 = vmatprep.mubr.f32.mxu0 0.0
    %3379 = vmatmul.mubr.f32.gmra.mxu0 %v3312
    %v3380 = vpop.f32.mrf.mxu0
    %v3381 = vadd.f32 0.0, %v3380
    %v3382 = vpop.f32.mrf.mxu0
    %3383 = vdwg.mxu0
    %3384 = vrot.lane.b32.xlu0 %v2137, 40
    %v3385 = vpop.permute.xlu0 %3384
    %v3388 = vsel %vm33, %v3307, 0
    %3390 = vmatprep.subr.mxu0 0.0
    %3391 = vmatpush1.msra.mxu0 0.0
    %3392 = vmatprep.subr.mxu0 0.0
    %3393 = vmatpush1.msra.mxu0 0.0
    %3394 = vmatprep.subr.mxu0 0.0
    %3395 = vmatpush1.msra.mxu0 0.0
    %3396 = vmatprep.subr.mxu0 0.0
    %3397 = vmatpush1.msra.mxu0 0.0
    %3398 = vmatprep.subr.mxu0 0.0
    %3399 = vmatpush1.msra.mxu0 0.0
    %3400 = vmatprep.subr.mxu0 0.0
    %3401 = vmatpush1.msra.mxu0 0.0
    %3402 = vmatprep.subr.mxu0 0.0
    %3403 = vmatpush1.msra.mxu0 0.0
    %3404 = vmatprep.subr.mxu0 0.0
    %3405 = vmatpush1.msra.mxu0 0.0
    %3406 = vmatprep.subr.mxu0 0.0
    %3407 = vmatpush1.msra.mxu0 0.0
    %3408 = vmatprep.subr.mxu0 0.0
    %3409 = vmatpush1.msra.mxu0 0.0
    %3410 = vmatprep.subr.mxu0 0.0
    %3411 = vmatpush1.msra.mxu0 0.0
    %3412 = vmatprep.subr.mxu0 0.0
    %3413 = vmatpush1.msra.mxu0 0.0
    %3414 = vmatprep.subr.mxu0 0.0
    %3415 = vmatpush1.msra.mxu0 0.0
    %3416 = vmatprep.subr.mxu0 0.0
    %3417 = vmatpush1.msra.mxu0 0.0
    %3418 = vmatprep.subr.mxu0 0.0
    %3419 = vmatpush1.msra.mxu0 0.0
    %3420 = vmatprep.subr.mxu0 0.0
    %3421 = vmatpush1.msra.mxu0 %v3385
    %3422 = vmatprep.subr.mxu0 0.0
    %3423 = vmatpush2.msra.mxu0 0.0
    %3424 = vmatprep.subr.mxu0 0.0
    %3425 = vmatpush2.msra.mxu0 0.0
    %3426 = vmatprep.subr.mxu0 0.0
    %3427 = vmatpush2.msra.mxu0 0.0
    %3428 = vmatprep.subr.mxu0 0.0
    %3429 = vmatpush2.msra.mxu0 0.0
    %3430 = vmatprep.subr.mxu0 0.0
    %3431 = vmatpush2.msra.mxu0 0.0
    %3432 = vmatprep.subr.mxu0 0.0
    %3433 = vmatpush2.msra.mxu0 0.0
    %3434 = vmatprep.subr.mxu0 0.0
    %3435 = vmatpush2.msra.mxu0 0.0
    %3436 = vmatprep.subr.mxu0 0.0
    %3437 = vmatpush2.msra.mxu0 0.0
    %3438 = vmatprep.subr.mxu0 0.0
    %3439 = vmatpush2.msra.mxu0 0.0
    %3440 = vmatprep.subr.mxu0 0.0
    %3441 = vmatpush2.msra.mxu0 0.0
    %3442 = vmatprep.subr.mxu0 0.0
    %3443 = vmatpush2.msra.mxu0 0.0
    %3444 = vmatprep.subr.mxu0 0.0
    %3445 = vmatpush2.msra.mxu0 0.0
    %3446 = vmatprep.subr.mxu0 0.0
    %3447 = vmatpush2.msra.mxu0 0.0
    %3448 = vmatprep.subr.mxu0 0.0
    %3449 = vmatpush2.msra.mxu0 0.0
    %3450 = vmatprep.subr.mxu0 0.0
    %3451 = vmatpush2.msra.mxu0 0.0
    %3452 = vmatprep.subr.mxu0 0.0
    %3453 = vmatpush2.msra.mxu0 0.0
    %3454 = vmatprep.mubr.f32.mxu0 0.0
    %3455 = vmatmul.mubr.f32.gmra.mxu0 %v3388
    %v3456 = vpop.f32.mrf.mxu0
    %v3457 = vadd.f32 0.0, %v3456
    %v3458 = vpop.f32.mrf.mxu0
    %3459 = vdwg.mxu0
    %3462 = vrot.lane.b32.xlu0 %v2721, 8
    %v3463 = vpop.permute.xlu0 %3462
    %3464 = vrot.lane.b32.xlu0 %v2797, 8
    %v3465 = vpop.permute.xlu0 %3464
    %3470 = vrot.lane.b32.xlu0 %v3051, 16
    %v3471 = vpop.permute.xlu0 %3470
    %3472 = vrot.lane.b32.xlu0 %v3127, 16
    %v3473 = vpop.permute.xlu0 %3472
    %3478 = vrot.lane.b32.xlu0 %v3381, 24
    %v3479 = vpop.permute.xlu0 %3478
    %3480 = vrot.lane.b32.xlu0 %v3457, 24
    %v3481 = vpop.permute.xlu0 %3480
    %v3484 = vsel %vm33, %v2390, %v3463
    %v3485 = vsel %vm33, %v2467, %v3465
    %v3486 = vsel %vm1616, %v3484, %v3471
    %v3487 = vsel %vm1616, %v3485, %v3473
    %v3488 = vsel %vm1619, %v3486, %v3479
    %v3489 = vsel %vm1619, %v3487, %v3481
    %v3490 = vlaneseq
    %v3491 = vshrl.u32 %v3490, 7
    %v3492 = vsub.s32 3, %v3491
    %v3493 = vrot.slane %v2028, %v3492
    %3498 = vrot.lane.b32.xlu0 %v2023, 32
    %v3499 = vpop.permute.xlu0 %3498
    %3500 = vrot.lane.b32.xlu0 %v2024, 32
    %v3501 = vpop.permute.xlu0 %3500
    %3502 = vrot.lane.b32.xlu0 %v2025, 32
    %v3503 = vpop.permute.xlu0 %3502
    %3504 = vrot.lane.b32.xlu0 %v2026, 32
    %v3505 = vpop.permute.xlu0 %3504
    %v3511 = vsel %vm148, %v3488, 0
    %v3514 = vsel %vm148, %v3489, 0
    %3516 = vmatprep.subr.mxu0 0.0
    %3517 = vmatpush1.msra.mxu0 0.0
    %3518 = vmatprep.subr.mxu0 0.0
    %3519 = vmatpush1.msra.mxu0 0.0
    %3520 = vmatprep.subr.mxu0 0.0
    %3521 = vmatpush1.msra.mxu0 0.0
    %3522 = vmatprep.subr.mxu0 0.0
    %3523 = vmatpush1.msra.mxu0 0.0
    %3524 = vmatprep.subr.mxu0 0.0
    %3525 = vmatpush1.msra.mxu0 0.0
    %3526 = vmatprep.subr.mxu0 0.0
    %3527 = vmatpush1.msra.mxu0 0.0
    %3528 = vmatprep.subr.mxu0 0.0
    %3529 = vmatpush1.msra.mxu0 0.0
    %3530 = vmatprep.subr.mxu0 0.0
    %3531 = vmatpush1.msra.mxu0 0.0
    %3532 = vmatprep.subr.mxu0 0.0
    %3533 = vmatpush1.msra.mxu0 0.0
    %3534 = vmatprep.subr.mxu0 0.0
    %3535 = vmatpush1.msra.mxu0 0.0
    %3536 = vmatprep.subr.mxu0 0.0
    %3537 = vmatpush1.msra.mxu0 0.0
    %3538 = vmatprep.subr.mxu0 0.0
    %3539 = vmatpush1.msra.mxu0 0.0
    %3540 = vmatprep.subr.mxu0 0.0
    %3541 = vmatpush1.msra.mxu0 %v3505
    %3542 = vmatprep.subr.mxu0 0.0
    %3543 = vmatpush1.msra.mxu0 %v3503
    %3544 = vmatprep.subr.mxu0 0.0
    %3545 = vmatpush1.msra.mxu0 %v3501
    %3546 = vmatprep.subr.mxu0 0.0
    %3547 = vmatpush1.msra.mxu0 %v3499
    %3548 = vmatprep.subr.mxu0 0.0
    %3549 = vmatpush2.msra.mxu0 0.0
    %3550 = vmatprep.subr.mxu0 0.0
    %3551 = vmatpush2.msra.mxu0 0.0
    %3552 = vmatprep.subr.mxu0 0.0
    %3553 = vmatpush2.msra.mxu0 0.0
    %3554 = vmatprep.subr.mxu0 0.0
    %3555 = vmatpush2.msra.mxu0 0.0
    %3556 = vmatprep.subr.mxu0 0.0
    %3557 = vmatpush2.msra.mxu0 0.0
    %3558 = vmatprep.subr.mxu0 0.0
    %3559 = vmatpush2.msra.mxu0 0.0
    %3560 = vmatprep.subr.mxu0 0.0
    %3561 = vmatpush2.msra.mxu0 0.0
    %3562 = vmatprep.subr.mxu0 0.0
    %3563 = vmatpush2.msra.mxu0 0.0
    %3564 = vmatprep.subr.mxu0 0.0
    %3565 = vmatpush2.msra.mxu0 0.0
    %3566 = vmatprep.subr.mxu0 0.0
    %3567 = vmatpush2.msra.mxu0 0.0
    %3568 = vmatprep.subr.mxu0 0.0
    %3569 = vmatpush2.msra.mxu0 0.0
    %3570 = vmatprep.subr.mxu0 0.0
    %3571 = vmatpush2.msra.mxu0 0.0
    %3572 = vmatprep.subr.mxu0 0.0
    %3573 = vmatpush2.msra.mxu0 0.0
    %3574 = vmatprep.subr.mxu0 0.0
    %3575 = vmatpush2.msra.mxu0 0.0
    %3576 = vmatprep.subr.mxu0 0.0
    %3577 = vmatpush2.msra.mxu0 0.0
    %3578 = vmatprep.subr.mxu0 0.0
    %3579 = vmatpush2.msra.mxu0 0.0
    %3580 = vmatprep.mubr.f32.mxu0 0.0
    %3581 = vmatmul.mubr.f32.gmra.mxu0 %v3511
    %v3582 = vpop.f32.mrf.mxu0
    %v3583 = vadd.f32 %v3493, %v3582
    %v3584 = vpop.f32.mrf.mxu0
    %3585 = vmatprep.mubr.f32.mxu0 0.0
    %3586 = vmatmul.mubr.f32.gmra.mxu0 %v3514
    %v3587 = vpop.f32.mrf.mxu0
    %v3588 = vadd.f32 %v3493, %v3587
    %v3589 = vpop.f32.mrf.mxu0
    %3590 = vdwg.mxu0
    %v3591 = vadd.f32 %v2020, %v3583
    %v3592 = vadd.f32 %v2021, %v3588
    %v3593 = vsel %vm148, %v3591, 0.0
    %3594 = vadd.xlane.f32.xlu0 %v3593
    %v3595 = vpop.xlane.xlu0 %3594
    %v3596 = vsel %vm148, %v3592, 0.0
    %3597 = vadd.xlane.f32.xlu0 %v3596
    %v3598 = vpop.xlane.xlu0 %3597
    %v3599 = vmul.f32 %v3595, %v1731
    %v3600 = vmul.f32 %v3598, %v1731
    %v3601 = vmul.f32 %v3591, %v3591
    %v3602 = vmul.f32 %v3592, %v3592
    %v3603 = vsel %vm148, %v3601, 0.0
    %3604 = vadd.xlane.f32.xlu0 %v3603
    %v3605 = vpop.xlane.xlu0 %3604
    %v3606 = vsel %vm148, %v3602, 0.0
    %3607 = vadd.xlane.f32.xlu0 %v3606
    %v3608 = vpop.xlane.xlu0 %3607
    %v3609 = vmul.f32 %v3605, %v1731
    %v3610 = vmul.f32 %v3608, %v1731
    %v3611 = vmul.f32 %v3599, %v3599
    %v3612 = vmul.f32 %v3600, %v3600
    %v3613 = vsub.f32 %v3609, %v3611
    %v3614 = vsub.f32 %v3610, %v3612
    %v3615 = vmax.f32 %v3613, 0.0
    %v3616 = vmax.f32 %v3614, 0.0
    %v3617 = vsub.f32 %v3591, %v3599
    %v3618 = vsub.f32 %v3592, %v3600
    %v3619 = vadd.f32 %v3615, 1e-05
    %v3620 = vadd.f32 %v3616, 1e-05
    %v3621 = vrsqrt.pop %v3619
    %v3622 = vrsqrt.pop %v3620
    %v3623 = vmul.f32 %v3617, %v3621
    %v3624 = vmul.f32 %v3618, %v3622
    %v3625 = vlaneseq
    %v3626 = vshrl.u32 %v3625, 7
    %v3627 = vsub.s32 4, %v3626
    %v3628 = vrot.slane %v2028, %v3627
    %v3629 = vmul.f32 %v3623, %v3628
    %v3630 = vmul.f32 %v3624, %v3628
    %v3631 = vlaneseq
    %v3632 = vshrl.u32 %v3631, 7
    %v3633 = vsub.s32 5, %v3632
    %v3634 = vrot.slane %v2028, %v3633
    %v3635 = vadd.f32 %v3629, %v3634
    %v3636 = vadd.f32 %v3630, %v3634
    %s3637 = scalar_lea.vmem %s5, 40
    %v3638 = vld [vmem:[%s3637] sm:$0xff]
    %v3639 = vld [vmem:[%s3637 + $0x8] sm:$0xff]
    %v3640 = vld [vmem:[%s3637 + $0x10] sm:$0xff]
    %v3641 = vld [vmem:[%s3637 + $0x18] sm:$0xff]
    %v3642 = vld [vmem:[%s3637 + $0x20] sm:$0x1]
    %v3643 = vlaneseq
    %v3644 = vshrl.u32 %v3643, 7
    %v3645 = vsub.s32 0, %v3644
    %v3646 = vrot.slane %v3642, %v3645
    %v3648 = vsel %vm148, %v3635, 0
    %v3651 = vsel %vm148, %v3636, 0
    %3653 = vmatprep.subr.mxu0 0.0
    %3654 = vmatpush1.msra.mxu0 0.0
    %3655 = vmatprep.subr.mxu0 0.0
    %3656 = vmatpush1.msra.mxu0 0.0
    %3657 = vmatprep.subr.mxu0 0.0
    %3658 = vmatpush1.msra.mxu0 0.0
    %3659 = vmatprep.subr.mxu0 0.0
    %3660 = vmatpush1.msra.mxu0 0.0
    %3661 = vmatprep.subr.mxu0 0.0
    %3662 = vmatpush1.msra.mxu0 0.0
    %3663 = vmatprep.subr.mxu0 0.0
    %3664 = vmatpush1.msra.mxu0 0.0
    %3665 = vmatprep.subr.mxu0 0.0
    %3666 = vmatpush1.msra.mxu0 0.0
    %3667 = vmatprep.subr.mxu0 0.0
    %3668 = vmatpush1.msra.mxu0 0.0
    %3669 = vmatprep.subr.mxu0 0.0
    %3670 = vmatpush1.msra.mxu0 0.0
    %3671 = vmatprep.subr.mxu0 0.0
    %3672 = vmatpush1.msra.mxu0 0.0
    %3673 = vmatprep.subr.mxu0 0.0
    %3674 = vmatpush1.msra.mxu0 0.0
    %3675 = vmatprep.subr.mxu0 0.0
    %3676 = vmatpush1.msra.mxu0 0.0
    %3677 = vmatprep.subr.mxu0 0.0
    %3678 = vmatpush1.msra.mxu0 %v3641
    %3679 = vmatprep.subr.mxu0 0.0
    %3680 = vmatpush1.msra.mxu0 %v3640
    %3681 = vmatprep.subr.mxu0 0.0
    %3682 = vmatpush1.msra.mxu0 %v3639
    %3683 = vmatprep.subr.mxu0 0.0
    %3684 = vmatpush1.msra.mxu0 %v3638
    %3685 = vmatprep.subr.mxu0 0.0
    %3686 = vmatpush2.msra.mxu0 0.0
    %3687 = vmatprep.subr.mxu0 0.0
    %3688 = vmatpush2.msra.mxu0 0.0
    %3689 = vmatprep.subr.mxu0 0.0
    %3690 = vmatpush2.msra.mxu0 0.0
    %3691 = vmatprep.subr.mxu0 0.0
    %3692 = vmatpush2.msra.mxu0 0.0
    %3693 = vmatprep.subr.mxu0 0.0
    %3694 = vmatpush2.msra.mxu0 0.0
    %3695 = vmatprep.subr.mxu0 0.0
    %3696 = vmatpush2.msra.mxu0 0.0
    %3697 = vmatprep.subr.mxu0 0.0
    %3698 = vmatpush2.msra.mxu0 0.0
    %3699 = vmatprep.subr.mxu0 0.0
    %3700 = vmatpush2.msra.mxu0 0.0
    %3701 = vmatprep.subr.mxu0 0.0
    %3702 = vmatpush2.msra.mxu0 0.0
    %3703 = vmatprep.subr.mxu0 0.0
    %3704 = vmatpush2.msra.mxu0 0.0
    %3705 = vmatprep.subr.mxu0 0.0
    %3706 = vmatpush2.msra.mxu0 0.0
    %3707 = vmatprep.subr.mxu0 0.0
    %3708 = vmatpush2.msra.mxu0 0.0
    %3709 = vmatprep.subr.mxu0 0.0
    %3710 = vmatpush2.msra.mxu0 0.0
    %3711 = vmatprep.subr.mxu0 0.0
    %3712 = vmatpush2.msra.mxu0 0.0
    %3713 = vmatprep.subr.mxu0 0.0
    %3714 = vmatpush2.msra.mxu0 0.0
    %3715 = vmatprep.subr.mxu0 0.0
    %3716 = vmatpush2.msra.mxu0 0.0
    %3717 = vmatprep.mubr.f32.mxu0 0.0
    %3718 = vmatmul.mubr.f32.gmra.mxu0 %v3648
    %v3719 = vpop.f32.mrf.mxu0
    %v3720 = vadd.f32 %v3646, %v3719
    %v3721 = vpop.f32.mrf.mxu0
    %3722 = vmatprep.mubr.f32.mxu0 0.0
    %3723 = vmatmul.mubr.f32.gmra.mxu0 %v3651
    %v3724 = vpop.f32.mrf.mxu0
    %v3725 = vadd.f32 %v3646, %v3724
    %v3726 = vpop.f32.mrf.mxu0
    %3727 = vdwg.mxu0
    %v3728 = vmul.f32 %v3720, 0.5
    %v3729 = vmul.f32 %v3725, 0.5
    %v3730 = vmul.f32 %v3720, 0.70710677
    %v3731 = vmul.f32 %v3725, 0.70710677
    %v3732 = verf.f32.pop %v3730
    %v3733 = verf.f32.pop %v3731
    %v3734 = vadd.f32 %v3732, 1.0
    %v3735 = vadd.f32 %v3733, 1.0
    %v3736 = vmul.f32 %v3728, %v3734
    %v3737 = vmul.f32 %v3729, %v3735
    %3742 = vrot.lane.b32.xlu0 %v3638, 64
    %v3743 = vpop.permute.xlu0 %3742
    %3744 = vrot.lane.b32.xlu0 %v3639, 64
    %v3745 = vpop.permute.xlu0 %3744
    %3746 = vrot.lane.b32.xlu0 %v3640, 64
    %v3747 = vpop.permute.xlu0 %3746
    %3748 = vrot.lane.b32.xlu0 %v3641, 64
    %v3749 = vpop.permute.xlu0 %3748
    %3751 = vrot.lane.b32.xlu0 %v3646, 64
    %v3752 = vpop.permute.xlu0 %3751
    %v3755 = vsel %vm1886, %v3736, 0
    %v3758 = vsel %vm1886, %v3737, 0
    %v3760 = vsel %vm1886, %v3743, 0
    %v3762 = vsel %vm1886, %v3745, 0
    %v3764 = vsel %vm1886, %v3747, 0
    %v3766 = vsel %vm1886, %v3749, 0
    %3768 = vmatprep.subr.mxu0 0.0
    %3769 = vmatpush1.xpose.msra.mxu0 0.0
    %3770 = vmatprep.subr.mxu0 0.0
    %3771 = vmatpush1.xpose.msra.mxu0 0.0
    %3772 = vmatprep.subr.mxu0 0.0
    %3773 = vmatpush1.xpose.msra.mxu0 0.0
    %3774 = vmatprep.subr.mxu0 0.0
    %3775 = vmatpush1.xpose.msra.mxu0 0.0
    %3776 = vmatprep.subr.mxu0 0.0
    %3777 = vmatpush1.xpose.msra.mxu0 0.0
    %3778 = vmatprep.subr.mxu0 0.0
    %3779 = vmatpush1.xpose.msra.mxu0 0.0
    %3780 = vmatprep.subr.mxu0 0.0
    %3781 = vmatpush1.xpose.msra.mxu0 0.0
    %3782 = vmatprep.subr.mxu0 0.0
    %3783 = vmatpush1.xpose.msra.mxu0 0.0
    %3784 = vmatprep.subr.mxu0 0.0
    %3785 = vmatpush1.xpose.msra.mxu0 0.0
    %3786 = vmatprep.subr.mxu0 0.0
    %3787 = vmatpush1.xpose.msra.mxu0 0.0
    %3788 = vmatprep.subr.mxu0 0.0
    %3789 = vmatpush1.xpose.msra.mxu0 0.0
    %3790 = vmatprep.subr.mxu0 0.0
    %3791 = vmatpush1.xpose.msra.mxu0 0.0
    %3792 = vmatprep.subr.mxu0 0.0
    %3793 = vmatpush1.xpose.msra.mxu0 %v3766
    %3794 = vmatprep.subr.mxu0 0.0
    %3795 = vmatpush1.xpose.msra.mxu0 %v3764
    %3796 = vmatprep.subr.mxu0 0.0
    %3797 = vmatpush1.xpose.msra.mxu0 %v3762
    %3798 = vmatprep.subr.mxu0 0.0
    %3799 = vmatpush1.xpose.msra.mxu0 %v3760
    %3800 = vmatprep.subr.mxu0 0.0
    %3801 = vmatpush2.xpose.msra.mxu0 0.0
    %3802 = vmatprep.subr.mxu0 0.0
    %3803 = vmatpush2.xpose.msra.mxu0 0.0
    %3804 = vmatprep.subr.mxu0 0.0
    %3805 = vmatpush2.xpose.msra.mxu0 0.0
    %3806 = vmatprep.subr.mxu0 0.0
    %3807 = vmatpush2.xpose.msra.mxu0 0.0
    %3808 = vmatprep.subr.mxu0 0.0
    %3809 = vmatpush2.xpose.msra.mxu0 0.0
    %3810 = vmatprep.subr.mxu0 0.0
    %3811 = vmatpush2.xpose.msra.mxu0 0.0
    %3812 = vmatprep.subr.mxu0 0.0
    %3813 = vmatpush2.xpose.msra.mxu0 0.0
    %3814 = vmatprep.subr.mxu0 0.0
    %3815 = vmatpush2.xpose.msra.mxu0 0.0
    %3816 = vmatprep.subr.mxu0 0.0
    %3817 = vmatpush2.xpose.msra.mxu0 0.0
    %3818 = vmatprep.subr.mxu0 0.0
    %3819 = vmatpush2.xpose.msra.mxu0 0.0
    %3820 = vmatprep.subr.mxu0 0.0
    %3821 = vmatpush2.xpose.msra.mxu0 0.0
    %3822 = vmatprep.subr.mxu0 0.0
    %3823 = vmatpush2.xpose.msra.mxu0 0.0
    %3824 = vmatprep.subr.mxu0 0.0
    %3825 = vmatpush2.xpose.msra.mxu0 0.0
    %3826 = vmatprep.subr.mxu0 0.0
    %3827 = vmatpush2.xpose.msra.mxu0 0.0
    %3828 = vmatprep.subr.mxu0 0.0
    %3829 = vmatpush2.xpose.msra.mxu0 0.0
    %3830 = vmatprep.subr.mxu0 0.0
    %3831 = vmatpush2.xpose.msra.mxu0 0.0
    %3832 = vmatprep.mubr.f32.mxu0 0.0
    %3833 = vmatmul.mubr.f32.gmra.mxu0 %v3755
    %v3834 = vpop.f32.mrf.mxu0
    %v3835 = vadd.f32 %v3752, %v3834
    %v3836 = vpop.f32.mrf.mxu0
    %3837 = vmatprep.mubr.f32.mxu0 0.0
    %3838 = vmatmul.mubr.f32.gmra.mxu0 %v3758
    %v3839 = vpop.f32.mrf.mxu0
    %v3840 = vadd.f32 %v3752, %v3839
    %v3841 = vpop.f32.mrf.mxu0
    %3842 = vdwg.mxu0
    %v3843 = vadd.f32 %v3635, %v3835
    %v3844 = vadd.f32 %v3636, %v3840
    %v3845 = vsel %vm148, %v3843, 0.0
    %3846 = vadd.xlane.f32.xlu0 %v3845
    %v3847 = vpop.xlane.xlu0 %3846
    %v3848 = vsel %vm148, %v3844, 0.0
    %3849 = vadd.xlane.f32.xlu0 %v3848
    %v3850 = vpop.xlane.xlu0 %3849
    %v3851 = vmul.f32 %v3847, %v1731
    %v3852 = vmul.f32 %v3850, %v1731
    %v3853 = vmul.f32 %v3843, %v3843
    %v3854 = vmul.f32 %v3844, %v3844
    %v3855 = vsel %vm148, %v3853, 0.0
    %3856 = vadd.xlane.f32.xlu0 %v3855
    %v3857 = vpop.xlane.xlu0 %3856
    %v3858 = vsel %vm148, %v3854, 0.0
    %3859 = vadd.xlane.f32.xlu0 %v3858
    %v3860 = vpop.xlane.xlu0 %3859
    %v3861 = vmul.f32 %v3857, %v1731
    %v3862 = vmul.f32 %v3860, %v1731
    %v3863 = vmul.f32 %v3851, %v3851
    %v3864 = vmul.f32 %v3852, %v3852
    %v3865 = vsub.f32 %v3861, %v3863
    %v3866 = vsub.f32 %v3862, %v3864
    %v3867 = vmax.f32 %v3865, 0.0
    %v3868 = vmax.f32 %v3866, 0.0
    %v3869 = vsub.f32 %v3843, %v3851
    %v3870 = vsub.f32 %v3844, %v3852
    %v3871 = vadd.f32 %v3867, 1e-05
    %v3872 = vadd.f32 %v3868, 1e-05
    %v3873 = vrsqrt.pop %v3871
    %v3874 = vrsqrt.pop %v3872
    %v3875 = vmul.f32 %v3869, %v3873
    %v3876 = vmul.f32 %v3870, %v3874
    %v3877 = vlaneseq
    %v3878 = vshrl.u32 %v3877, 7
    %v3879 = vsub.s32 6, %v3878
    %v3880 = vrot.slane %v2028, %v3879
    %v3881 = vmul.f32 %v3875, %v3880
    %v3882 = vmul.f32 %v3876, %v3880
    %v3883 = vlaneseq
    %v3884 = vshrl.u32 %v3883, 7
    %v3885 = vsub.s32 7, %v3884
    %v3886 = vrot.slane %v2028, %v3885
    %v3887 = vadd.f32 %v3881, %v3886
    %v3888 = vadd.f32 %v3882, %v3886
    %v3889 = vld [vmem:[%s7] sm:$0xff]
    %v3890 = vld [vmem:[%s7 + $0x8] sm:$0xff]
    %v3891 = vld [vmem:[%s7 + $0x10] sm:$0xff]
    %v3892 = vld [vmem:[%s7 + $0x18] sm:$0xff]
    %v3893 = vld [vmem:[%s7 + $0x20] sm:$0x1]
    %v3894 = vlaneseq
    %v3895 = vshrl.u32 %v3894, 7
    %v3896 = vsub.s32 0, %v3895
    %v3897 = vrot.slane %v3893, %v3896
    %v3899 = vsel %vm148, %v3887, 0
    %v3902 = vsel %vm148, %v3888, 0
    %3904 = vmatprep.subr.mxu0 0.0
    %3905 = vmatpush1.msra.mxu0 0.0
    %3906 = vmatprep.subr.mxu0 0.0
    %3907 = vmatpush1.msra.mxu0 0.0
    %3908 = vmatprep.subr.mxu0 0.0
    %3909 = vmatpush1.msra.mxu0 0.0
    %3910 = vmatprep.subr.mxu0 0.0
    %3911 = vmatpush1.msra.mxu0 0.0
    %3912 = vmatprep.subr.mxu0 0.0
    %3913 = vmatpush1.msra.mxu0 0.0
    %3914 = vmatprep.subr.mxu0 0.0
    %3915 = vmatpush1.msra.mxu0 0.0
    %3916 = vmatprep.subr.mxu0 0.0
    %3917 = vmatpush1.msra.mxu0 0.0
    %3918 = vmatprep.subr.mxu0 0.0
    %3919 = vmatpush1.msra.mxu0 0.0
    %3920 = vmatprep.subr.mxu0 0.0
    %3921 = vmatpush1.msra.mxu0 0.0
    %3922 = vmatprep.subr.mxu0 0.0
    %3923 = vmatpush1.msra.mxu0 0.0
    %3924 = vmatprep.subr.mxu0 0.0
    %3925 = vmatpush1.msra.mxu0 0.0
    %3926 = vmatprep.subr.mxu0 0.0
    %3927 = vmatpush1.msra.mxu0 0.0
    %3928 = vmatprep.subr.mxu0 0.0
    %3929 = vmatpush1.msra.mxu0 %v3892
    %3930 = vmatprep.subr.mxu0 0.0
    %3931 = vmatpush1.msra.mxu0 %v3891
    %3932 = vmatprep.subr.mxu0 0.0
    %3933 = vmatpush1.msra.mxu0 %v3890
    %3934 = vmatprep.subr.mxu0 0.0
    %3935 = vmatpush1.msra.mxu0 %v3889
    %3936 = vmatprep.subr.mxu0 0.0
    %3937 = vmatpush2.msra.mxu0 0.0
    %3938 = vmatprep.subr.mxu0 0.0
    %3939 = vmatpush2.msra.mxu0 0.0
    %3940 = vmatprep.subr.mxu0 0.0
    %3941 = vmatpush2.msra.mxu0 0.0
    %3942 = vmatprep.subr.mxu0 0.0
    %3943 = vmatpush2.msra.mxu0 0.0
    %3944 = vmatprep.subr.mxu0 0.0
    %3945 = vmatpush2.msra.mxu0 0.0
    %3946 = vmatprep.subr.mxu0 0.0
    %3947 = vmatpush2.msra.mxu0 0.0
    %3948 = vmatprep.subr.mxu0 0.0
    %3949 = vmatpush2.msra.mxu0 0.0
    %3950 = vmatprep.subr.mxu0 0.0
    %3951 = vmatpush2.msra.mxu0 0.0
    %3952 = vmatprep.subr.mxu0 0.0
    %3953 = vmatpush2.msra.mxu0 0.0
    %3954 = vmatprep.subr.mxu0 0.0
    %3955 = vmatpush2.msra.mxu0 0.0
    %3956 = vmatprep.subr.mxu0 0.0
    %3957 = vmatpush2.msra.mxu0 0.0
    %3958 = vmatprep.subr.mxu0 0.0
    %3959 = vmatpush2.msra.mxu0 0.0
    %3960 = vmatprep.subr.mxu0 0.0
    %3961 = vmatpush2.msra.mxu0 0.0
    %3962 = vmatprep.subr.mxu0 0.0
    %3963 = vmatpush2.msra.mxu0 0.0
    %3964 = vmatprep.subr.mxu0 0.0
    %3965 = vmatpush2.msra.mxu0 0.0
    %3966 = vmatprep.subr.mxu0 0.0
    %3967 = vmatpush2.msra.mxu0 0.0
    %3968 = vmatprep.mubr.f32.mxu0 0.0
    %3969 = vmatmul.mubr.f32.gmra.mxu0 %v3899
    %v3970 = vpop.f32.mrf.mxu0
    %v3971 = vadd.f32 %v3897, %v3970
    %v3972 = vpop.f32.mrf.mxu0
    %3973 = vmatprep.mubr.f32.mxu0 0.0
    %3974 = vmatmul.mubr.f32.gmra.mxu0 %v3902
    %v3975 = vpop.f32.mrf.mxu0
    %v3976 = vadd.f32 %v3897, %v3975
    %v3977 = vpop.f32.mrf.mxu0
    %3978 = vdwg.mxu0
    %3979 = vst [vmem:[#allocation2] sm:$0xff] %v3971
    %3980 = vst [vmem:[#allocation2 + $0x8] sm:$0xff] %v3976
    // Predicated region
    $region34: #{tpu_custom_call.1} parent=1 // pred_check
      _
    $region35: #{tpu_custom_call.1} parent=1 // pred_check_branch
      %3982 = sbr.rel (0) target = $region37
    $region36: #{tpu_custom_call.1} parent=1 // pred_region
      %s3984 = ssub.s32 256, 256
      %3985 = vsyncadd [#allocation3], %s3984
      %s3986 = sshll.u32 [#allocation2], 4
      %s3987 = int_to_ptr.vmem [resolvable:$true] %s3986
      %3992 = dma.vmem_to_hbm [thread:$0]  %s3987, 256, %s8, [#allocation3], 128, 128, 8
    $region37: #{tpu_custom_call.1} parent=1 // pred_fallthru
      _
    // Predicated region
    $region38: #{tpu_custom_call.1} parent=1 // pred_check
      _
    $region39: #{tpu_custom_call.1} parent=1 // pred_check_branch
      %3994 = sbr.rel (0) target = $region41
    $region40: #{tpu_custom_call.1} parent=1 // pred_region
      %3995 = dma.done [#allocation3], 256
    $region41: #{tpu_custom_call.1} parent=1 // pred_fallthru
      _
    %3996 = vsyncpa [#allocation3], 1

</llo_original>
